<compile_context>
chip_gen: v6e
topology: v6e:2x2x1
jax: 0.10.0
libtpu: 0.0.40
codegen_flags: <defaults>
</compile_context>

<pallas_src>
import math
import numpy as np

import jax
import jax.numpy as jnp
from jax.experimental import pallas as pl
from jax.experimental.pallas import tpu as pltpu

# --------------------------------------------------------------------------
# Irreps bookkeeping (mirrors the PyTorch module's irreps)
# --------------------------------------------------------------------------
SH_DIM = 16      # 1x0e + 1x1e + 1x2e + 1x3e  -> 1+3+5+7
MID_DIM = 368    # 64x0e + 24x1e + 24x1o + 16x2e + 16x2o -> 64+72+72+80+80
MID_PAD = 384    # padded to a multiple of 128 for lane-dense tiles
OUT_DIM = 8      # 8x0e

SH_IRREPS = [(1, 0, +1), (1, 1, +1), (1, 2, +1), (1, 3, +1)]            # (mul, l, parity)
MID_IRREPS = [(64, 0, +1), (24, 1, +1), (24, 1, -1), (16, 2, +1), (16, 2, -1)]
OUT_IRREPS = [(8, 0, +1)]


def _irrep_slices(irreps):
    off = 0
    for mul, l, p in irreps:
        dim = mul * (2 * l + 1)
        yield off, off + dim, l, p
        off += dim


def _total_dim(irreps):
    return sum(mul * (2 * l + 1) for mul, l, _ in irreps)


assert _total_dim(SH_IRREPS) == SH_DIM
assert _total_dim(MID_IRREPS) == MID_DIM
assert _total_dim(OUT_IRREPS) == OUT_DIM


# --------------------------------------------------------------------------
# Spherical harmonics up to l=3, normalize=False, normalization='component'
# (plain-JAX glue; negligible O(E*16) elementwise setup).
# --------------------------------------------------------------------------
def spherical_harmonics_l3(vec):
    # TODO(synk): e3nn's exact m-ordering / sign convention inside the l=2,3
    # blocks is not byte-exact reproduced; polynomials + 'component'
    # normalization (||Y_l||^2 = 2l+1 on the unit sphere) are.
    x, y, z = vec[:, 0], vec[:, 1], vec[:, 2]
    x2, y2, z2 = x * x, y * y, z * z
    x2z2 = x2 + z2

    sh0_0 = jnp.ones_like(x)
    sh1_0, sh1_1, sh1_2 = x, y, z

    s3 = math.sqrt(3.0)
    sh2_0 = s3 * x * z
    sh2_1 = s3 * x * y
    sh2_2 = y2 - 0.5 * x2z2
    sh2_3 = s3 * y * z
    sh2_4 = 0.5 * s3 * (z2 - x2)

    sh3_0 = math.sqrt(5.0 / 6.0) * (sh2_0 * z + sh2_4 * x)
    sh3_1 = math.sqrt(5.0) * sh2_0 * y
    sh3_2 = math.sqrt(3.0 / 8.0) * (4.0 * y2 - x2z2) * x
    sh3_3 = 0.5 * y * (2.0 * y2 - 3.0 * x2z2)
    sh3_4 = math.sqrt(3.0 / 8.0) * z * (4.0 * y2 - x2z2)
    sh3_5 = math.sqrt(5.0) * sh2_3 * y
    sh3_6 = math.sqrt(5.0 / 6.0) * (sh2_4 * z - sh2_0 * x)

    c1, c2, c3 = math.sqrt(3.0), math.sqrt(5.0), math.sqrt(7.0)
    cols = [
        sh0_0,
        c1 * sh1_0, c1 * sh1_1, c1 * sh1_2,
        c2 * sh2_0, c2 * sh2_1, c2 * sh2_2, c2 * sh2_3, c2 * sh2_4,
        c3 * sh3_0, c3 * sh3_1, c3 * sh3_2, c3 * sh3_3, c3 * sh3_4, c3 * sh3_5, c3 * sh3_6,
    ]
    return jnp.stack(cols, axis=-1).astype(jnp.float32)   # (E, 16)


# --------------------------------------------------------------------------
# Synthetic FullyConnectedTensorProduct weights.
#   out[k] = sum_{i,j} W[i, j, k] * x1[i] * x2[j]
# Correct *block* sparsity (parity rule p1*p2 == p_out, triangle inequality),
# deterministic pseudo-random values inside allowed blocks.
# --------------------------------------------------------------------------
def build_tp_weight(key, irreps1, irreps2, irreps_out):
    d1, d2, do = _total_dim(irreps1), _total_dim(irreps2), _total_dim(irreps_out)
    mask = np.zeros((d1, d2, do), np.float32)
    for a0, a1, l1, p1 in _irrep_slices(irreps1):
        for b0, b1, l2, p2 in _irrep_slices(irreps2):
            for c0, c1_, lo, po in _irrep_slices(irreps_out):
                if p1 * p2 == po and abs(l1 - l2) <= lo <= l1 + l2:
                    mask[a0:a1, b0:b1, c0:c1_] = 1.0
    # TODO(synk): exact Wigner-3j (Clebsch-Gordan) coefficients and e3nn path
    # normalization are not reproduced; deterministic block-masked dense
    # bilinear weights are used instead.
    w = jax.random.normal(key, (d1, d2, do), jnp.float32)
    w = w * jnp.asarray(mask) / math.sqrt(d1 * d2)
    return w


# --------------------------------------------------------------------------
# Pallas kernel: one tile = GRAPHS_PER_TILE whole graphs (block-diagonal M/P).
# --------------------------------------------------------------------------
INV_SQRT2 = 0.7071067811865476          # 1 / sqrt(num_neighbors=2)
FINAL_SCALE = INV_SQRT2 * 0.5           # edge->node scatter / sqrt(2), pool / sqrt(num_nodes=4)


def invariant_poly_kernel(sh_ref, m_ref, p_ref, w1_ref, w2_ref, out_ref):
    sh = sh_ref[...]                     # (Et, 16)  f32 edge spherical harmonics
    M = m_ref[...]                       # (Et, Et)  bf16 one-hot gather(src) @ scatter(dst)
    P = p_ref[...]                       # (Gt, Et)  bf16 one-hot batch-pool @ scatter(dst)
    W1 = w1_ref[...]                     # (256, 384) bf16 flattened TP1 weights
    W2 = w2_ref[...]                     # (384, 128) bf16 output-concatenated TP2 weights

    sh_b = sh.astype(jnp.bfloat16)

    # x1 = node0[edge_src] = (M @ edge_sh) / sqrt(2)
    x1 = jnp.dot(M, sh_b, preferred_element_type=jnp.float32) * INV_SQRT2       # (Et, 16) f32

    # TP1 as one fused K=256 MXU matmul:
    #   Z[e, j*16+i] = sh[e, j] * x1[e, i];   edge1 = Z @ W1
    zcols = [sh[:, j:j + 1] * x1 for j in range(SH_DIM)]                        # 16 x (Et, 16)
    Z = jnp.concatenate(zcols, axis=1)                                          # (Et, 256) f32
    edge1 = jnp.dot(Z.astype(jnp.bfloat16), W1,
                    preferred_element_type=jnp.float32)                         # (Et, 384) f32

    # x2 = node1[edge_src] = (M @ edge1) / sqrt(2)
    x2 = jnp.dot(M, edge1.astype(jnp.bfloat16),
                 preferred_element_type=jnp.float32) * INV_SQRT2                # (Et, 384) f32

    # TP2: one lane-dense matmul (N = 128 = 16 sh comps x 8 out channels),
    # then a small weighted reduce over the 16 sh components.
    Y = jnp.dot(x2.astype(jnp.bfloat16), W2,
                preferred_element_type=jnp.float32)                             # (Et, 128) f32
    edge2 = sh[:, 0:1] * Y[:, 0:OUT_DIM]
    for j in range(1, SH_DIM):
        edge2 = edge2 + sh[:, j:j + 1] * Y[:, j * OUT_DIM:(j + 1) * OUT_DIM]    # (Et, 8)

    # node2 = scatter(edge2, edge_dst) / sqrt(2); out = pool over batch / sqrt(4)
    out_ref[...] = jnp.dot(P, edge2.astype(jnp.bfloat16),
                           preferred_element_type=jnp.float32) * FINAL_SCALE


def invariant_polynomial_forward(edge_sh, mmat, pmat, w1_flat, w2_cat,
                                 *, graphs_per_tile, edges_per_tile):
    """Grid over independent graph tiles; weights broadcast to every tile."""
    n_graphs = pmat.shape[0]
    e_total = edge_sh.shape[0]
    n_tiles = e_total // edges_per_tile
    assert n_graphs == n_tiles * graphs_per_tile

    return pl.pallas_call(
        invariant_poly_kernel,
        out_shape=jax.ShapeDtypeStruct((n_graphs, OUT_DIM), jnp.float32),
        grid_spec=pltpu.PrefetchScalarGridSpec(
            num_scalar_prefetch=0,
            grid=(n_tiles,),
            in_specs=[
                pl.BlockSpec((edges_per_tile, SH_DIM), lambda t: (t, 0)),
                pl.BlockSpec((edges_per_tile, edges_per_tile), lambda t: (t, t)),
                pl.BlockSpec((graphs_per_tile, edges_per_tile), lambda t: (t, t)),
                pl.BlockSpec((SH_DIM * SH_DIM, MID_PAD), lambda t: (0, 0)),
                pl.BlockSpec((MID_PAD, SH_DIM * OUT_DIM), lambda t: (0, 0)),
            ],
            out_specs=pl.BlockSpec((graphs_per_tile, OUT_DIM), lambda t: (t, 0)),
        ),
        compiler_params=pltpu.CompilerParams(
            dimension_semantics=("parallel",)),   # tiles are independent -> megacore split
    )(edge_sh, mmat, pmat, w1_flat, w2_cat)


# --------------------------------------------------------------------------
# Pure-JAX reference with identical math / castings (block-diagonal M, P make
# the un-tiled reference equal to the tiled kernel result).
# --------------------------------------------------------------------------
def reference_forward(edge_sh, M_bf16, P_bf16, w1_flat, w2_cat):
    sh = edge_sh
    sh_b = sh.astype(jnp.bfloat16)
    x1 = jnp.dot(M_bf16, sh_b, preferred_element_type=jnp.float32) * INV_SQRT2
    Z = jnp.concatenate([sh[:, j:j + 1] * x1 for j in range(SH_DIM)], axis=1)
    edge1 = jnp.dot(Z.astype(jnp.bfloat16), w1_flat, preferred_element_type=jnp.float32)
    x2 = jnp.dot(M_bf16, edge1.astype(jnp.bfloat16),
                 preferred_element_type=jnp.float32) * INV_SQRT2
    Y = jnp.dot(x2.astype(jnp.bfloat16), w2_cat, preferred_element_type=jnp.float32)
    edge2 = sh[:, 0:1] * Y[:, 0:OUT_DIM]
    for j in range(1, SH_DIM):
        edge2 = edge2 + sh[:, j:j + 1] * Y[:, j * OUT_DIM:(j + 1) * OUT_DIM]
    return jnp.dot(P_bf16, edge2.astype(jnp.bfloat16),
                   preferred_element_type=jnp.float32) * FINAL_SCALE


# --------------------------------------------------------------------------
# Host glue: build graphs, radius graph, fused one-hot matrices, padded layout.
# --------------------------------------------------------------------------
NODES_PER_GRAPH = 4
GRAPHS_PER_TILE = 16
SLOTS_PER_GRAPH = 8          # fixed edge-slot budget per graph (real edges: 6)
E_TILE = GRAPHS_PER_TILE * SLOTS_PER_GRAPH   # = 128 padded edge rows per tile


if __name__ == "__main__":
    key = jax.random.PRNGKey(0)
    k_jit, k_w1, k_w2 = jax.random.split(key, 3)

    # 32 tetris-like pieces (alternating "L" / "T"), 4 nodes each.
    piece_L = np.array([[0, 0, 0], [1, 0, 0], [2, 0, 0], [2, 1, 0]], np.float32)
    piece_T = np.array([[0, 0, 0], [1, 0, 0], [2, 0, 0], [1, 1, 0]], np.float32)
    n_graphs = 32
    base_pos = np.concatenate(
        [piece_L if g % 2 == 0 else piece_T for g in range(n_graphs)], axis=0)
    batch_np = np.repeat(np.arange(n_graphs, dtype=np.int32), NODES_PER_GRAPH)

    # Deterministic jitter, CLIPPED to +/-0.02 so the radius graph provably
    # keeps the bond topology (bonds <= ~1.04 < 1.1, diagonals >= ~1.36 > 1.1).
    jitter = jnp.clip(0.02 * jax.random.normal(k_jit, base_pos.shape, jnp.float32),
                      -0.02, 0.02)
    pos = jnp.asarray(base_pos) + jitter
    pos_np = np.asarray(pos)

    n_tiles = n_graphs // GRAPHS_PER_TILE
    e_total = n_tiles * E_TILE

    # TODO(synk): radius_graph is data-dependent edge enumeration; it is built
    # host-side with static shapes (padded per-graph slots) rather than inside
    # the kernel.
    edge_src, edge_dst, edge_slot = [], [], []
    for g in range(n_graphs):
        t = g // GRAPHS_PER_TILE
        g_in_tile = g % GRAPHS_PER_TILE
        nodes = range(g * NODES_PER_GRAPH, (g + 1) * NODES_PER_GRAPH)
        edges_g = []
        for i in nodes:
            for j in nodes:
                if i != j and np.linalg.norm(pos_np[i] - pos_np[j]) <= 1.1:
                    edges_g.append((j, i))              # (src, dst)
        assert len(edges_g) <= SLOTS_PER_GRAPH
        base_slot = t * E_TILE + g_in_tile * SLOTS_PER_GRAPH
        for e_local, (s, d) in enumerate(edges_g):
            edge_src.append(s)
            edge_dst.append(d)
            edge_slot.append(base_slot + e_local)
    edge_src = np.asarray(edge_src, np.int32)
    edge_dst = np.asarray(edge_dst, np.int32)
    edge_slot = np.asarray(edge_slot, np.int32)

    # Edge spherical harmonics for real edges; padded rows stay zero.
    edge_vec = pos[edge_src] - pos[edge_dst]
    sh_real = np.asarray(spherical_harmonics_l3(edge_vec))          # (n_real, 16)
    edge_sh_np = np.zeros((e_total, SH_DIM), np.float32)
    edge_sh_np[edge_slot] = sh_real

    # Fused one-hot operators (block-diagonal per tile; padded rows/cols zero):
    #   M = gather(edge_src) @ scatter(edge_dst):  M[e, e'] = [src(e) == dst(e')]
    #   P = batch-pool @ scatter(edge_dst):        P[g, e]  = [batch(dst(e)) == g]
    M_real = (edge_src[:, None] == edge_dst[None, :]).astype(np.float32)
    M_np = np.zeros((e_total, e_total), np.float32)
    M_np[np.ix_(edge_slot, edge_slot)] = M_real
    P_np = np.zeros((n_graphs, e_total), np.float32)
    P_np[batch_np[edge_dst], edge_slot] = 1.0

    # Tensor-product weights, deterministic, flattened lane-dense:
    #   W1[(j, i), k] = w1[i, j, k]   -> (256, 368) padded to (256, 384)
    #   W2[i, j*8+k]  = w2[i, j, k]   -> (368, 128) padded to (384, 128)
    w1 = build_tp_weight(k_w1, SH_IRREPS, SH_IRREPS, MID_IRREPS)    # (16, 16, 368)
    w2 = build_tp_weight(k_w2, MID_IRREPS, SH_IRREPS, OUT_IRREPS)   # (368, 16, 8)
    w1_flat = jnp.transpose(w1, (1, 0, 2)).reshape(SH_DIM * SH_DIM, MID_DIM)
    w1_flat = jnp.pad(w1_flat, ((0, 0), (0, MID_PAD - MID_DIM))).astype(jnp.bfloat16)
    w2_cat = w2.reshape(MID_DIM, SH_DIM * OUT_DIM)
    w2_cat = jnp.pad(w2_cat, ((0, MID_PAD - MID_DIM), (0, 0))).astype(jnp.bfloat16)

    edge_sh_j = jnp.asarray(edge_sh_np)
    M_j = jnp.asarray(M_np, dtype=jnp.bfloat16)
    P_j = jnp.asarray(P_np, dtype=jnp.bfloat16)

    out = invariant_polynomial_forward(
        edge_sh_j, M_j, P_j, w1_flat, w2_cat,
        graphs_per_tile=GRAPHS_PER_TILE,
        edges_per_tile=E_TILE,
    )
    out = jax.block_until_ready(out)

    assert out.shape == (n_graphs, OUT_DIM)
    assert bool(jnp.all(jnp.isfinite(out)))

    # Correctness check against an identically-cast pure-JAX reference.
    ref = np.asarray(reference_forward(edge_sh_j, M_j, P_j, w1_flat, w2_cat))
    err = float(np.max(np.abs(np.asarray(out) - ref)) / (np.max(np.abs(ref)) + 1e-6))
    assert err < 2e-2, f"kernel/reference mismatch: normalized max err = {err}"

    print("KERNEL_OK")
</pallas_src>

<mosaic_0001>
module attributes {stable_mosaic.version = 11 : i64} {
  func.func @invariant_poly_kernel(%arg0: i32, %arg1: memref<128x16xf32, #tpu.memory_space<vmem>>, %arg2: memref<128x128xbf16, #tpu.memory_space<vmem>>, %arg3: memref<16x128xbf16, #tpu.memory_space<vmem>>, %arg4: memref<256x384xbf16, #tpu.memory_space<vmem>>, %arg5: memref<384x128xbf16, #tpu.memory_space<vmem>>, %arg6: memref<16x8xf32, #tpu.memory_space<vmem>>) attributes {dimension_semantics = [#tpu.dimension_semantics<parallel>], iteration_bounds = array<i64: 2>, scalar_prefetch = 0 : i64, scratch_operands = 0 : i64, tpu.core_type = #tpu.core_type<tc>, window_params = [{transform_indices = @transform_0, window_bounds = array<i64: 128, 16>}, {transform_indices = @transform_1, window_bounds = array<i64: 128, 128>}, {transform_indices = @transform_2, window_bounds = array<i64: 16, 128>}, {pipeline_mode = #tpu.pipeline_mode<synchronous>, transform_indices = @transform_3, window_bounds = array<i64: 256, 384>}, {pipeline_mode = #tpu.pipeline_mode<synchronous>, transform_indices = @transform_4, window_bounds = array<i64: 384, 128>}, {transform_indices = @transform_5, window_bounds = array<i64: 16, 8>}]} {
    %c0 = arith.constant 0 : index
    %c0_0 = arith.constant 0 : index
    %0 = vector.load %arg1[%c0, %c0_0] : memref<128x16xf32, #tpu.memory_space<vmem>>, vector<128x16xf32>
    %c0_1 = arith.constant 0 : index
    %c0_2 = arith.constant 0 : index
    %1 = vector.load %arg2[%c0_1, %c0_2] : memref<128x128xbf16, #tpu.memory_space<vmem>>, vector<128x128xbf16>
    %c0_3 = arith.constant 0 : index
    %c0_4 = arith.constant 0 : index
    %2 = vector.load %arg3[%c0_3, %c0_4] : memref<16x128xbf16, #tpu.memory_space<vmem>>, vector<16x128xbf16>
    %c0_5 = arith.constant 0 : index
    %c0_6 = arith.constant 0 : index
    %3 = vector.load %arg4[%c0_5, %c0_6] : memref<256x384xbf16, #tpu.memory_space<vmem>>, vector<256x384xbf16>
    %c0_7 = arith.constant 0 : index
    %c0_8 = arith.constant 0 : index
    %4 = vector.load %arg5[%c0_7, %c0_8] : memref<384x128xbf16, #tpu.memory_space<vmem>>, vector<384x128xbf16>
    %5 = arith.truncf %0 : vector<128x16xf32> to vector<128x16xbf16>
    %cst = arith.constant dense<0.000000e+00> : vector<128x16xf32>
    %6 = tpu.matmul %1, %5, %cst {dimension_numbers = #tpu.dot_dimension_numbers<[1], [0], [0], [1], [0, 0, 1, 1], [], []>} : vector<128x128xbf16>, vector<128x16xbf16>, vector<128x16xf32> -> vector<128x16xf32>
    %cst_9 = arith.constant 0.707106769 : f32
    %7 = vector.broadcast %cst_9 : f32 to vector<128x16xf32>
    %8 = arith.mulf %6, %7 : vector<128x16xf32>
    %9 = vector.extract_strided_slice %0 {offsets = [0, 0], sizes = [128, 1], strides = [1, 1]} : vector<128x16xf32> to vector<128x1xf32>
    %10 = vector.broadcast %9 : vector<128x1xf32> to vector<128x16xf32>
    %11 = arith.mulf %10, %8 : vector<128x16xf32>
    %12 = vector.extract_strided_slice %0 {offsets = [0, 1], sizes = [128, 1], strides = [1, 1]} : vector<128x16xf32> to vector<128x1xf32>
    %13 = vector.broadcast %12 : vector<128x1xf32> to vector<128x16xf32>
    %14 = arith.mulf %13, %8 : vector<128x16xf32>
    %15 = vector.extract_strided_slice %0 {offsets = [0, 2], sizes = [128, 1], strides = [1, 1]} : vector<128x16xf32> to vector<128x1xf32>
    %16 = vector.broadcast %15 : vector<128x1xf32> to vector<128x16xf32>
    %17 = arith.mulf %16, %8 : vector<128x16xf32>
    %18 = vector.extract_strided_slice %0 {offsets = [0, 3], sizes = [128, 1], strides = [1, 1]} : vector<128x16xf32> to vector<128x1xf32>
    %19 = vector.broadcast %18 : vector<128x1xf32> to vector<128x16xf32>
    %20 = arith.mulf %19, %8 : vector<128x16xf32>
    %21 = vector.extract_strided_slice %0 {offsets = [0, 4], sizes = [128, 1], strides = [1, 1]} : vector<128x16xf32> to vector<128x1xf32>
    %22 = vector.broadcast %21 : vector<128x1xf32> to vector<128x16xf32>
    %23 = arith.mulf %22, %8 : vector<128x16xf32>
    %24 = vector.extract_strided_slice %0 {offsets = [0, 5], sizes = [128, 1], strides = [1, 1]} : vector<128x16xf32> to vector<128x1xf32>
    %25 = vector.broadcast %24 : vector<128x1xf32> to vector<128x16xf32>
    %26 = arith.mulf %25, %8 : vector<128x16xf32>
    %27 = vector.extract_strided_slice %0 {offsets = [0, 6], sizes = [128, 1], strides = [1, 1]} : vector<128x16xf32> to vector<128x1xf32>
    %28 = vector.broadcast %27 : vector<128x1xf32> to vector<128x16xf32>
    %29 = arith.mulf %28, %8 : vector<128x16xf32>
    %30 = vector.extract_strided_slice %0 {offsets = [0, 7], sizes = [128, 1], strides = [1, 1]} : vector<128x16xf32> to vector<128x1xf32>
    %31 = vector.broadcast %30 : vector<128x1xf32> to vector<128x16xf32>
    %32 = arith.mulf %31, %8 : vector<128x16xf32>
    %33 = vector.extract_strided_slice %0 {offsets = [0, 8], sizes = [128, 1], strides = [1, 1]} : vector<128x16xf32> to vector<128x1xf32>
    %34 = vector.broadcast %33 : vector<128x1xf32> to vector<128x16xf32>
    %35 = arith.mulf %34, %8 : vector<128x16xf32>
    %36 = vector.extract_strided_slice %0 {offsets = [0, 9], sizes = [128, 1], strides = [1, 1]} : vector<128x16xf32> to vector<128x1xf32>
    %37 = vector.broadcast %36 : vector<128x1xf32> to vector<128x16xf32>
    %38 = arith.mulf %37, %8 : vector<128x16xf32>
    %39 = vector.extract_strided_slice %0 {offsets = [0, 10], sizes = [128, 1], strides = [1, 1]} : vector<128x16xf32> to vector<128x1xf32>
    %40 = vector.broadcast %39 : vector<128x1xf32> to vector<128x16xf32>
    %41 = arith.mulf %40, %8 : vector<128x16xf32>
    %42 = vector.extract_strided_slice %0 {offsets = [0, 11], sizes = [128, 1], strides = [1, 1]} : vector<128x16xf32> to vector<128x1xf32>
    %43 = vector.broadcast %42 : vector<128x1xf32> to vector<128x16xf32>
    %44 = arith.mulf %43, %8 : vector<128x16xf32>
    %45 = vector.extract_strided_slice %0 {offsets = [0, 12], sizes = [128, 1], strides = [1, 1]} : vector<128x16xf32> to vector<128x1xf32>
    %46 = vector.broadcast %45 : vector<128x1xf32> to vector<128x16xf32>
    %47 = arith.mulf %46, %8 : vector<128x16xf32>
    %48 = vector.extract_strided_slice %0 {offsets = [0, 13], sizes = [128, 1], strides = [1, 1]} : vector<128x16xf32> to vector<128x1xf32>
    %49 = vector.broadcast %48 : vector<128x1xf32> to vector<128x16xf32>
    %50 = arith.mulf %49, %8 : vector<128x16xf32>
    %51 = vector.extract_strided_slice %0 {offsets = [0, 14], sizes = [128, 1], strides = [1, 1]} : vector<128x16xf32> to vector<128x1xf32>
    %52 = vector.broadcast %51 : vector<128x1xf32> to vector<128x16xf32>
    %53 = arith.mulf %52, %8 : vector<128x16xf32>
    %54 = vector.extract_strided_slice %0 {offsets = [0, 15], sizes = [128, 1], strides = [1, 1]} : vector<128x16xf32> to vector<128x1xf32>
    %55 = vector.broadcast %54 : vector<128x1xf32> to vector<128x16xf32>
    %56 = arith.mulf %55, %8 : vector<128x16xf32>
    %57 = tpu.concatenate %11, %14, %17, %20, %23, %26, %29, %32, %35, %38, %41, %44, %47, %50, %53, %56 in 1 : vector<128x16xf32>, vector<128x16xf32>, vector<128x16xf32>, vector<128x16xf32>, vector<128x16xf32>, vector<128x16xf32>, vector<128x16xf32>, vector<128x16xf32>, vector<128x16xf32>, vector<128x16xf32>, vector<128x16xf32>, vector<128x16xf32>, vector<128x16xf32>, vector<128x16xf32>, vector<128x16xf32>, vector<128x16xf32> -> vector<128x256xf32>
    %58 = arith.truncf %57 : vector<128x256xf32> to vector<128x256xbf16>
    %cst_10 = arith.constant dense<0.000000e+00> : vector<128x384xf32>
    %59 = tpu.matmul %58, %3, %cst_10 {dimension_numbers = #tpu.dot_dimension_numbers<[1], [0], [0], [1], [0, 0, 1, 1], [], []>} : vector<128x256xbf16>, vector<256x384xbf16>, vector<128x384xf32> -> vector<128x384xf32>
    %60 = arith.truncf %59 : vector<128x384xf32> to vector<128x384xbf16>
    %cst_11 = arith.constant dense<0.000000e+00> : vector<128x384xf32>
    %61 = tpu.matmul %1, %60, %cst_11 {dimension_numbers = #tpu.dot_dimension_numbers<[1], [0], [0], [1], [0, 0, 1, 1], [], []>} : vector<128x128xbf16>, vector<128x384xbf16>, vector<128x384xf32> -> vector<128x384xf32>
    %cst_12 = arith.constant 0.707106769 : f32
    %62 = vector.broadcast %cst_12 : f32 to vector<128x384xf32>
    %63 = arith.mulf %61, %62 : vector<128x384xf32>
    %64 = arith.truncf %63 : vector<128x384xf32> to vector<128x384xbf16>
    %cst_13 = arith.constant dense<0.000000e+00> : vector<128x128xf32>
    %65 = tpu.matmul %64, %4, %cst_13 {dimension_numbers = #tpu.dot_dimension_numbers<[1], [0], [0], [1], [0, 0, 1, 1], [], []>} : vector<128x384xbf16>, vector<384x128xbf16>, vector<128x128xf32> -> vector<128x128xf32>
    %66 = vector.extract_strided_slice %0 {offsets = [0, 0], sizes = [128, 1], strides = [1, 1]} : vector<128x16xf32> to vector<128x1xf32>
    %67 = vector.extract_strided_slice %65 {offsets = [0, 0], sizes = [128, 8], strides = [1, 1]} : vector<128x128xf32> to vector<128x8xf32>
    %68 = vector.broadcast %66 : vector<128x1xf32> to vector<128x8xf32>
    %69 = arith.mulf %68, %67 : vector<128x8xf32>
    %70 = vector.extract_strided_slice %0 {offsets = [0, 1], sizes = [128, 1], strides = [1, 1]} : vector<128x16xf32> to vector<128x1xf32>
    %71 = vector.extract_strided_slice %65 {offsets = [0, 8], sizes = [128, 8], strides = [1, 1]} : vector<128x128xf32> to vector<128x8xf32>
    %72 = vector.broadcast %70 : vector<128x1xf32> to vector<128x8xf32>
    %73 = arith.mulf %72, %71 : vector<128x8xf32>
    %74 = arith.addf %69, %73 : vector<128x8xf32>
    %75 = vector.extract_strided_slice %0 {offsets = [0, 2], sizes = [128, 1], strides = [1, 1]} : vector<128x16xf32> to vector<128x1xf32>
    %76 = vector.extract_strided_slice %65 {offsets = [0, 16], sizes = [128, 8], strides = [1, 1]} : vector<128x128xf32> to vector<128x8xf32>
    %77 = vector.broadcast %75 : vector<128x1xf32> to vector<128x8xf32>
    %78 = arith.mulf %77, %76 : vector<128x8xf32>
    %79 = arith.addf %74, %78 : vector<128x8xf32>
    %80 = vector.extract_strided_slice %0 {offsets = [0, 3], sizes = [128, 1], strides = [1, 1]} : vector<128x16xf32> to vector<128x1xf32>
    %81 = vector.extract_strided_slice %65 {offsets = [0, 24], sizes = [128, 8], strides = [1, 1]} : vector<128x128xf32> to vector<128x8xf32>
    %82 = vector.broadcast %80 : vector<128x1xf32> to vector<128x8xf32>
    %83 = arith.mulf %82, %81 : vector<128x8xf32>
    %84 = arith.addf %79, %83 : vector<128x8xf32>
    %85 = vector.extract_strided_slice %0 {offsets = [0, 4], sizes = [128, 1], strides = [1, 1]} : vector<128x16xf32> to vector<128x1xf32>
    %86 = vector.extract_strided_slice %65 {offsets = [0, 32], sizes = [128, 8], strides = [1, 1]} : vector<128x128xf32> to vector<128x8xf32>
    %87 = vector.broadcast %85 : vector<128x1xf32> to vector<128x8xf32>
    %88 = arith.mulf %87, %86 : vector<128x8xf32>
    %89 = arith.addf %84, %88 : vector<128x8xf32>
    %90 = vector.extract_strided_slice %0 {offsets = [0, 5], sizes = [128, 1], strides = [1, 1]} : vector<128x16xf32> to vector<128x1xf32>
    %91 = vector.extract_strided_slice %65 {offsets = [0, 40], sizes = [128, 8], strides = [1, 1]} : vector<128x128xf32> to vector<128x8xf32>
    %92 = vector.broadcast %90 : vector<128x1xf32> to vector<128x8xf32>
    %93 = arith.mulf %92, %91 : vector<128x8xf32>
    %94 = arith.addf %89, %93 : vector<128x8xf32>
    %95 = vector.extract_strided_slice %0 {offsets = [0, 6], sizes = [128, 1], strides = [1, 1]} : vector<128x16xf32> to vector<128x1xf32>
    %96 = vector.extract_strided_slice %65 {offsets = [0, 48], sizes = [128, 8], strides = [1, 1]} : vector<128x128xf32> to vector<128x8xf32>
    %97 = vector.broadcast %95 : vector<128x1xf32> to vector<128x8xf32>
    %98 = arith.mulf %97, %96 : vector<128x8xf32>
    %99 = arith.addf %94, %98 : vector<128x8xf32>
    %100 = vector.extract_strided_slice %0 {offsets = [0, 7], sizes = [128, 1], strides = [1, 1]} : vector<128x16xf32> to vector<128x1xf32>
    %101 = vector.extract_strided_slice %65 {offsets = [0, 56], sizes = [128, 8], strides = [1, 1]} : vector<128x128xf32> to vector<128x8xf32>
    %102 = vector.broadcast %100 : vector<128x1xf32> to vector<128x8xf32>
    %103 = arith.mulf %102, %101 : vector<128x8xf32>
    %104 = arith.addf %99, %103 : vector<128x8xf32>
    %105 = vector.extract_strided_slice %0 {offsets = [0, 8], sizes = [128, 1], strides = [1, 1]} : vector<128x16xf32> to vector<128x1xf32>
    %106 = vector.extract_strided_slice %65 {offsets = [0, 64], sizes = [128, 8], strides = [1, 1]} : vector<128x128xf32> to vector<128x8xf32>
    %107 = vector.broadcast %105 : vector<128x1xf32> to vector<128x8xf32>
    %108 = arith.mulf %107, %106 : vector<128x8xf32>
    %109 = arith.addf %104, %108 : vector<128x8xf32>
    %110 = vector.extract_strided_slice %0 {offsets = [0, 9], sizes = [128, 1], strides = [1, 1]} : vector<128x16xf32> to vector<128x1xf32>
    %111 = vector.extract_strided_slice %65 {offsets = [0, 72], sizes = [128, 8], strides = [1, 1]} : vector<128x128xf32> to vector<128x8xf32>
    %112 = vector.broadcast %110 : vector<128x1xf32> to vector<128x8xf32>
    %113 = arith.mulf %112, %111 : vector<128x8xf32>
    %114 = arith.addf %109, %113 : vector<128x8xf32>
    %115 = vector.extract_strided_slice %0 {offsets = [0, 10], sizes = [128, 1], strides = [1, 1]} : vector<128x16xf32> to vector<128x1xf32>
    %116 = vector.extract_strided_slice %65 {offsets = [0, 80], sizes = [128, 8], strides = [1, 1]} : vector<128x128xf32> to vector<128x8xf32>
    %117 = vector.broadcast %115 : vector<128x1xf32> to vector<128x8xf32>
    %118 = arith.mulf %117, %116 : vector<128x8xf32>
    %119 = arith.addf %114, %118 : vector<128x8xf32>
    %120 = vector.extract_strided_slice %0 {offsets = [0, 11], sizes = [128, 1], strides = [1, 1]} : vector<128x16xf32> to vector<128x1xf32>
    %121 = vector.extract_strided_slice %65 {offsets = [0, 88], sizes = [128, 8], strides = [1, 1]} : vector<128x128xf32> to vector<128x8xf32>
    %122 = vector.broadcast %120 : vector<128x1xf32> to vector<128x8xf32>
    %123 = arith.mulf %122, %121 : vector<128x8xf32>
    %124 = arith.addf %119, %123 : vector<128x8xf32>
    %125 = vector.extract_strided_slice %0 {offsets = [0, 12], sizes = [128, 1], strides = [1, 1]} : vector<128x16xf32> to vector<128x1xf32>
    %126 = vector.extract_strided_slice %65 {offsets = [0, 96], sizes = [128, 8], strides = [1, 1]} : vector<128x128xf32> to vector<128x8xf32>
    %127 = vector.broadcast %125 : vector<128x1xf32> to vector<128x8xf32>
    %128 = arith.mulf %127, %126 : vector<128x8xf32>
    %129 = arith.addf %124, %128 : vector<128x8xf32>
    %130 = vector.extract_strided_slice %0 {offsets = [0, 13], sizes = [128, 1], strides = [1, 1]} : vector<128x16xf32> to vector<128x1xf32>
    %131 = vector.extract_strided_slice %65 {offsets = [0, 104], sizes = [128, 8], strides = [1, 1]} : vector<128x128xf32> to vector<128x8xf32>
    %132 = vector.broadcast %130 : vector<128x1xf32> to vector<128x8xf32>
    %133 = arith.mulf %132, %131 : vector<128x8xf32>
    %134 = arith.addf %129, %133 : vector<128x8xf32>
    %135 = vector.extract_strided_slice %0 {offsets = [0, 14], sizes = [128, 1], strides = [1, 1]} : vector<128x16xf32> to vector<128x1xf32>
    %136 = vector.extract_strided_slice %65 {offsets = [0, 112], sizes = [128, 8], strides = [1, 1]} : vector<128x128xf32> to vector<128x8xf32>
    %137 = vector.broadcast %135 : vector<128x1xf32> to vector<128x8xf32>
    %138 = arith.mulf %137, %136 : vector<128x8xf32>
    %139 = arith.addf %134, %138 : vector<128x8xf32>
    %140 = vector.extract_strided_slice %0 {offsets = [0, 15], sizes = [128, 1], strides = [1, 1]} : vector<128x16xf32> to vector<128x1xf32>
    %141 = vector.extract_strided_slice %65 {offsets = [0, 120], sizes = [128, 8], strides = [1, 1]} : vector<128x128xf32> to vector<128x8xf32>
    %142 = vector.broadcast %140 : vector<128x1xf32> to vector<128x8xf32>
    %143 = arith.mulf %142, %141 : vector<128x8xf32>
    %144 = arith.addf %139, %143 : vector<128x8xf32>
    %145 = arith.truncf %144 : vector<128x8xf32> to vector<128x8xbf16>
    %cst_14 = arith.constant dense<0.000000e+00> : vector<16x8xf32>
    %146 = tpu.matmul %2, %145, %cst_14 {dimension_numbers = #tpu.dot_dimension_numbers<[1], [0], [0], [1], [0, 0, 1, 1], [], []>} : vector<16x128xbf16>, vector<128x8xbf16>, vector<16x8xf32> -> vector<16x8xf32>
    %cst_15 = arith.constant 0.353553385 : f32
    %147 = vector.broadcast %cst_15 : f32 to vector<16x8xf32>
    %148 = arith.mulf %146, %147 : vector<16x8xf32>
    %c0_16 = arith.constant 0 : index
    %c0_17 = arith.constant 0 : index
    %149 = vector.load %arg6[%c0_16, %c0_17] : memref<16x8xf32, #tpu.memory_space<vmem>>, vector<16x8xf32>
    tpu.vector_store %arg6[%c0_16, %c0_17], %148 {strides = array<i32>} : memref<16x8xf32, #tpu.memory_space<vmem>>, vector<16x8xf32>,
    return
  }
  func.func @transform_0(%arg0: i32) -> (i32, i32) {
    %c0_i32 = arith.constant 0 : i32
    %c0_i32_0 = arith.constant 0 : i32
    return %arg0, %c0_i32 : i32, i32
  }
  func.func @transform_1(%arg0: i32) -> (i32, i32) {
    %c0_i32 = arith.constant 0 : i32
    return %arg0, %arg0 : i32, i32
  }
  func.func @transform_2(%arg0: i32) -> (i32, i32) {
    %c0_i32 = arith.constant 0 : i32
    return %arg0, %arg0 : i32, i32
  }
  func.func @transform_3(%arg0: i32) -> (i32, i32) {
    %c0_i32 = arith.constant 0 : i32
    %c0_i32_0 = arith.constant 0 : i32
    %c0_i32_1 = arith.constant 0 : i32
    return %c0_i32, %c0_i32_0 : i32, i32
  }
  func.func @transform_4(%arg0: i32) -> (i32, i32) {
    %c0_i32 = arith.constant 0 : i32
    %c0_i32_0 = arith.constant 0 : i32
    %c0_i32_1 = arith.constant 0 : i32
    return %c0_i32, %c0_i32_0 : i32, i32
  }
  func.func @transform_5(%arg0: i32) -> (i32, i32) {
    %c0_i32 = arith.constant 0 : i32
    %c0_i32_0 = arith.constant 0 : i32
    return %arg0, %c0_i32 : i32, i32
  }
}

</mosaic_0001>

<llo_original>
// kernel: tpu_custom_call.1
$region0: #{tpu_custom_call.1}
  #allocation0 [shape = 'u32[]', space=smem, size = 0x4, offset = 0x4, fixed_abs, tag = 'smem constant byte address 0x4 - core index']
  #allocation1 [shape = 'u32[144,128]{1,0:T(1,128)}', space=vmem, size = 0x12000, scoped, tag = 'internal scratch']
  %s0 = inlined_call_operand.vmem [shape: f32[256,16], index: 0, kind: input, shape index: {}]
  %s1 = inlined_call_operand.vmem [shape: bf16[256,256], index: 1, kind: input, shape index: {}]
  %s2 = inlined_call_operand.vmem [shape: bf16[32,256], index: 2, kind: input, shape index: {}]
  %s3 = inlined_call_operand.hbm [shape: bf16[256,384], index: 3, kind: input, shape index: {}]
  %s4 = inlined_call_operand.hbm [shape: bf16[384,128], index: 4, kind: input, shape index: {}]
  %s5 = inlined_call_operand.vmem [shape: f32[32,8], index: 5, kind: output, shape index: {}]
  %s6 = sld [smem:[#allocation0]]
  $region143: #{tpu_custom_call.1} parent=0
    _
  %s8 = ssub.s32 1, %s6
  %s9 = scalar_select 0, %s8, %s6
  $region1: #{tpu_custom_call.1} parent=0
    #allocation2 [shape = 'u8[65536]{0}', space=vmem, size = 0x10000, scoped, tag = 'input window, operand 1']
    #allocation3 [shape = 'u8[8192]{0}', space=vmem, size = 0x2000, scoped, tag = 'input window, operand 2']
    #allocation4 [shape = 'u8[196608]{0}', space=vmem, size = 0x30000, scoped, tag = 'input window, operand 3, single buffered']
    #allocation5 [shape = 's32[2]{0}', space=sflag, size = 0x8, scoped, tag = 'scoped memory for tpu_custom_call.1']
    #allocation6 [shape = 'u8[98304]{0}', space=vmem, size = 0x18000, scoped, tag = 'input window, operand 4, single buffered']
    #allocation7 [shape = 's32[1]{0}', space=sflag, size = 0x4, scoped, tag = 'scoped memory for tpu_custom_call.1']
    %10 = vsyncpa [#allocation5], 0
    %11 = vsyncpa [#allocation7], 0
    loop: start=0, step=1, limit=4
    $region2: #{tpu_custom_call.1} parent=1 // loop_pre_header
      _
    $region3: #{tpu_custom_call.1} parent=1 // loop_header
      %s13 = sphi 0, %s17
      %p14 = scmp.ge.s32.totalorder %s13, 4
      %s23 = sphi 0, %s25
      %s26 = sphi 0, %s23
      %s27 = sphi 0, %s26
      %s43 = sphi 0, %s27
      %s51 = sphi 0, %s53
      %s54 = sphi 0, %s51
      %s55 = sphi 0, %s54
      %s71 = sphi 0, %s55
      %s79 = sphi 0, %s81
      %s82 = sphi 0, %s79
      %s83 = sphi 0, %s82
      %s99 = sphi 0, %s83
      %s103 = sphi 0, %s103
      %s105 = sphi 0, %s103
      %s106 = sphi 0, %s105
      %s120 = sphi 0, %s106
      %s124 = sphi 0, %s124
      %s126 = sphi 0, %s124
      %s127 = sphi 0, %s126
      %s141 = sphi 0, %s127
      %s147 = sphi 0, %s149
      %s150 = sphi 0, %s147
      %s151 = sphi 0, %s150
      %s167 = sphi 0, %s151
    $region4: #{tpu_custom_call.1} parent=1 // loop_header_branch
      %16 = sbr.rel (%p14) target = $region8
    $region5: #{tpu_custom_call.1} parent=1 // loop_body
      %s18 = ssub.s32 %s13, 1
      %s19 = ssub.s32 %s13, 2
      %s20 = sadd.s32 %s13, 1
      %s21 = ssub.s32 %s13, %s20
      %p22 = scmp.eq.s32.totalorder %s21, 0
      %s24 = sadd.s32 %s23, 1
      %s25 = scalar_select %p22, %s23, %s24
      %p28 = pneg %p22
      %p29 = scmp.eq.s32.totalorder %s13, 1
      %p30 = por %p28, %p29
      %p31 = scmp.ne.s32.totalorder %s23, %s26
      %p32 = scmp.eq.s32.totalorder %s13, 0
      %p33 = por %p31, %p32
      %p34 = scmp.ne.s32.totalorder %s23, %s26
      %p35 = scmp.eq.s32.totalorder %s18, 1
      %p36 = por %p34, %p35
      %p37 = scmp.ne.s32.totalorder %s26, %s27
      %p38 = scmp.eq.s32.totalorder %s18, 0
      %p39 = por %p37, %p38
      %p40 = scmp.ne.s32.totalorder %s26, %s27
      %p41 = scmp.eq.s32.totalorder %s19, 1
      %p42 = por %p40, %p41
      %p44 = scmp.ne.s32.totalorder %s27, %s43
      %p45 = scmp.eq.s32.totalorder %s19, 0
      %p46 = por %p44, %p45
      %s47 = ssub.s32 %s13, %s20
      %s48 = ssub.s32 %s13, %s20
      %s49 = sor.u32 %s47, %s48
      %p50 = scmp.eq.s32.totalorder %s49, 0
      %s52 = sadd.s32 %s51, 1
      %s53 = scalar_select %p50, %s51, %s52
      %p56 = pneg %p50
      %p57 = scmp.eq.s32.totalorder %s13, 1
      %p58 = por %p56, %p57
      %p59 = scmp.ne.s32.totalorder %s51, %s54
      %p60 = scmp.eq.s32.totalorder %s13, 0
      %p61 = por %p59, %p60
      %p62 = scmp.ne.s32.totalorder %s51, %s54
      %p63 = scmp.eq.s32.totalorder %s18, 1
      %p64 = por %p62, %p63
      %p65 = scmp.ne.s32.totalorder %s54, %s55
      %p66 = scmp.eq.s32.totalorder %s18, 0
      %p67 = por %p65, %p66
      %p68 = scmp.ne.s32.totalorder %s54, %s55
      %p69 = scmp.eq.s32.totalorder %s19, 1
      %p70 = por %p68, %p69
      %p72 = scmp.ne.s32.totalorder %s55, %s71
      %p73 = scmp.eq.s32.totalorder %s19, 0
      %p74 = por %p72, %p73
      %s75 = ssub.s32 %s13, %s20
      %s76 = ssub.s32 %s13, %s20
      %s77 = sor.u32 %s75, %s76
      %p78 = scmp.eq.s32.totalorder %s77, 0
      %s80 = sadd.s32 %s79, 1
      %s81 = scalar_select %p78, %s79, %s80
      %p84 = pneg %p78
      %p85 = scmp.eq.s32.totalorder %s13, 1
      %p86 = por %p84, %p85
      %p87 = scmp.ne.s32.totalorder %s79, %s82
      %p88 = scmp.eq.s32.totalorder %s13, 0
      %p89 = por %p87, %p88
      %p90 = scmp.ne.s32.totalorder %s79, %s82
      %p91 = scmp.eq.s32.totalorder %s18, 1
      %p92 = por %p90, %p91
      %p93 = scmp.ne.s32.totalorder %s82, %s83
      %p94 = scmp.eq.s32.totalorder %s18, 0
      %p95 = por %p93, %p94
      %p96 = scmp.ne.s32.totalorder %s82, %s83
      %p97 = scmp.eq.s32.totalorder %s19, 1
      %p98 = por %p96, %p97
      %p100 = scmp.ne.s32.totalorder %s83, %s99
      %p101 = scmp.eq.s32.totalorder %s19, 0
      %p102 = por %p100, %p101
      %s104 = sadd.s32 %s103, 1
      %p107 = scmp.eq.s32.totalorder %s13, 1
      %p108 = scmp.ne.s32.totalorder %s103, %s105
      %p109 = scmp.eq.s32.totalorder %s13, 0
      %p110 = por %p108, %p109
      %p111 = scmp.ne.s32.totalorder %s103, %s105
      %p112 = scmp.eq.s32.totalorder %s18, 1
      %p113 = por %p111, %p112
      %p114 = scmp.ne.s32.totalorder %s105, %s106
      %p115 = scmp.eq.s32.totalorder %s18, 0
      %p116 = por %p114, %p115
      %p117 = scmp.ne.s32.totalorder %s105, %s106
      %p118 = scmp.eq.s32.totalorder %s19, 1
      %p119 = por %p117, %p118
      %p121 = scmp.ne.s32.totalorder %s106, %s120
      %p122 = scmp.eq.s32.totalorder %s19, 0
      %p123 = por %p121, %p122
      %s125 = sadd.s32 %s124, 1
      %p128 = scmp.eq.s32.totalorder %s13, 1
      %p129 = scmp.ne.s32.totalorder %s124, %s126
      %p130 = scmp.eq.s32.totalorder %s13, 0
      %p131 = por %p129, %p130
      %p132 = scmp.ne.s32.totalorder %s124, %s126
      %p133 = scmp.eq.s32.totalorder %s18, 1
      %p134 = por %p132, %p133
      %p135 = scmp.ne.s32.totalorder %s126, %s127
      %p136 = scmp.eq.s32.totalorder %s18, 0
      %p137 = por %p135, %p136
      %p138 = scmp.ne.s32.totalorder %s126, %s127
      %p139 = scmp.eq.s32.totalorder %s19, 1
      %p140 = por %p138, %p139
      %p142 = scmp.ne.s32.totalorder %s127, %s141
      %p143 = scmp.eq.s32.totalorder %s19, 0
      %p144 = por %p142, %p143
      %s145 = ssub.s32 %s13, %s20
      %p146 = scmp.eq.s32.totalorder %s145, 0
      %s148 = sadd.s32 %s147, 1
      %s149 = scalar_select %p146, %s147, %s148
      %p152 = pneg %p146
      %p153 = scmp.eq.s32.totalorder %s13, 1
      %p154 = por %p152, %p153
      %p155 = scmp.ne.s32.totalorder %s147, %s150
      %p156 = scmp.eq.s32.totalorder %s13, 0
      %p157 = por %p155, %p156
      %p158 = scmp.ne.s32.totalorder %s147, %s150
      %p159 = scmp.eq.s32.totalorder %s18, 1
      %p160 = por %p158, %p159
      %p161 = scmp.ne.s32.totalorder %s150, %s151
      %p162 = scmp.eq.s32.totalorder %s18, 0
      %p163 = por %p161, %p162
      %p164 = scmp.ne.s32.totalorder %s150, %s151
      %p165 = scmp.eq.s32.totalorder %s19, 1
      %p166 = por %p164, %p165
      %p168 = scmp.ne.s32.totalorder %s151, %s167
      %p169 = scmp.eq.s32.totalorder %s19, 0
      %p170 = por %p168, %p169
      %p171 = scmp.le.s32.totalorder 1, %s13
      %p172 = scmp.lt.s32.totalorder %s13, 3
      %p173 = pnand %p171, %p172
      %p174 = pneg %p173
      // Predicated region
      $region9: #{tpu_custom_call.1} parent=5 // pred_check
        _
      $region10: #{tpu_custom_call.1} parent=5 // pred_check_branch
        %176 = sbr.rel (%p173) target = $region12
      $region11: #{tpu_custom_call.1} parent=5 // pred_region
        %s177 = ssub.s32 %s13, 1
        // Predicated region
        $region13: #{tpu_custom_call.1} parent=11 // pred_check
          %p178 = pneg %p116
        $region14: #{tpu_custom_call.1} parent=11 // pred_check_branch
          %180 = sbr.rel (%p178) target = $region16
        $region15: #{tpu_custom_call.1} parent=11 // pred_region
          %s182 = ssub.s32 6144, 6144
          %183 = vsyncadd [#allocation5], %s182
          %s184 = sshll.u32 [#allocation4], 4
          %s185 = int_to_ptr.vmem [resolvable:$true] %s184
          %190 = dma.hbm_to_vmem [thread:$0]  %s3, 6144, %s185, [#allocation5], 192, 192, 12
        $region16: #{tpu_custom_call.1} parent=11 // pred_fallthru
          _
        // Predicated region
        $region17: #{tpu_custom_call.1} parent=11 // pred_check
          %p191 = pneg %p137
        $region18: #{tpu_custom_call.1} parent=11 // pred_check_branch
          %193 = sbr.rel (%p191) target = $region20
        $region19: #{tpu_custom_call.1} parent=11 // pred_region
          %s195 = ssub.s32 3072, 3072
          %196 = vsyncadd [#allocation7], %s195
          %s197 = sshll.u32 [#allocation6], 4
          %s198 = int_to_ptr.vmem [resolvable:$true] %s197
          %203 = dma.hbm_to_vmem [thread:$0]  %s4, 3072, %s198, [#allocation7], 64, 64, 4
        $region20: #{tpu_custom_call.1} parent=11 // pred_fallthru
          _
      $region12: #{tpu_custom_call.1} parent=5 // pred_fallthru
        _
      %p204 = scmp.lt.s32.totalorder %s13, 2
      // Predicated region
      $region21: #{tpu_custom_call.1} parent=5 // pred_check
        %p205 = pneg %p204
      $region22: #{tpu_custom_call.1} parent=5 // pred_check_branch
        %207 = sbr.rel (%p205) target = $region24
      $region23: #{tpu_custom_call.1} parent=5 // pred_region
        // Predicated region
        $region25: #{tpu_custom_call.1} parent=23 // pred_check
          %p208 = pneg %p33
        $region26: #{tpu_custom_call.1} parent=23 // pred_check_branch
          %210 = sbr.rel (%p208) target = $region28
        $region27: #{tpu_custom_call.1} parent=23 // pred_region
          %s211 = smul.u32 16, %s13
          %p212 = scmp.lt.s32.totalorder %s211, 31
          %s213 = scalar_select %p212, %s211, 31
          %s214 = smul.addr %s213, 8
          %s215 = scalar_lea.vmem %s0, %s214
          %s216 = smul.u32 16, %s13
        $region28: #{tpu_custom_call.1} parent=23 // pred_fallthru
          _
        // Predicated region
        $region29: #{tpu_custom_call.1} parent=23 // pred_check
          %p217 = pneg %p61
        $region30: #{tpu_custom_call.1} parent=23 // pred_check_branch
          %219 = sbr.rel (%p217) target = $region32
        $region31: #{tpu_custom_call.1} parent=23 // pred_region
          %s220 = sand.u32 %s51, 1
          %s221 = sand.u32 %s51, 1
          %s222 = smul.addr %s221, 64
          %s223 = scalar_lea.vmem [#allocation2], %s222
          %s224 = smul.u32 16, %s13
          %s225 = smul.addr %s224, 2
          %s226 = sadd.s32 %s13, %s225
          %s227 = smul.addr %s226, 4
          %s228 = scalar_lea.vmem %s1, %s227
          // Predicated region
          $region33: #{tpu_custom_call.1} parent=31 // pred_check
            _
          $region34: #{tpu_custom_call.1} parent=31 // pred_check_branch
            %230 = sbr.rel (0) target = $region36
          $region35: #{tpu_custom_call.1} parent=31 // pred_region
            // Predicated region
            $region37: #{tpu_custom_call.1} parent=35 // pred_check
              _
            $region38: #{tpu_custom_call.1} parent=35 // pred_check_branch
              %232 = sbr.rel target = $region40
            $region39: #{tpu_custom_call.1} parent=35 // pred_region
              // Predicated region
              $region52: #{tpu_custom_call.1} parent=39 // pred_check
                _
              $region53: #{tpu_custom_call.1} parent=39 // pred_check_branch
                %278 = sbr.rel (0) target = $region55
              $region54: #{tpu_custom_call.1} parent=39 // pred_region
                loop: start=0, step=1, limit=1
                $region56: #{tpu_custom_call.1} parent=54 // loop_pre_header
                  _
                $region57: #{tpu_custom_call.1} parent=54 // loop_header
                  %s280 = sphi 0, %s284
                  %p281 = scmp.ge.s32.totalorder %s280, 1
                  %s285 = sphi %s228, %s228
                  %s286 = sphi %s223, %s223
                $region58: #{tpu_custom_call.1} parent=54 // loop_header_branch
                  %283 = sbr.rel (%p281) target = $region62
                $region59: #{tpu_custom_call.1} parent=54 // loop_body
                  _
                $region60: #{tpu_custom_call.1} parent=54 // loop_footer
                  %s284 = sadd.s32 1, %s280
                $region61: #{tpu_custom_call.1} parent=54 // loop_footer_branch
                  %279 = sbr.rel target = $region57
                $region62: #{tpu_custom_call.1} parent=54 // loop_exit
                  _
                %s288 = ssub.s32 16, 1
                loop: start=0, step=1, limit=1
                $region63: #{tpu_custom_call.1} parent=54 // loop_pre_header
                  _
                $region64: #{tpu_custom_call.1} parent=54 // loop_header
                  %s290 = sphi 0, %s294
                  %p291 = scmp.ge.s32.totalorder %s290, 1
                  %s295 = sphi %s228, %s228
                  %s296 = sphi %s223, %s223
                $region65: #{tpu_custom_call.1} parent=54 // loop_header_branch
                  %293 = sbr.rel (%p291) target = $region69
                $region66: #{tpu_custom_call.1} parent=54 // loop_body
                  %v297 = vld [vmem:[%s295] sm:%s288]
                  %298 = vst [vmem:[%s296] sm:%s288] %v297
                  %v299 = vld [vmem:[%s295 + $0x8] sm:%s288]
                  %300 = vst [vmem:[%s296 + $0x4] sm:%s288] %v299
                  %v301 = vld [vmem:[%s295 + $0x10] sm:%s288]
                  %302 = vst [vmem:[%s296 + $0x8] sm:%s288] %v301
                  %v303 = vld [vmem:[%s295 + $0x18] sm:%s288]
                  %304 = vst [vmem:[%s296 + $0xc] sm:%s288] %v303
                  %v305 = vld [vmem:[%s295 + $0x20] sm:%s288]
                  %306 = vst [vmem:[%s296 + $0x10] sm:%s288] %v305
                  %v307 = vld [vmem:[%s295 + $0x28] sm:%s288]
                  %308 = vst [vmem:[%s296 + $0x14] sm:%s288] %v307
                  %v309 = vld [vmem:[%s295 + $0x30] sm:%s288]
                  %310 = vst [vmem:[%s296 + $0x18] sm:%s288] %v309
                  %v311 = vld [vmem:[%s295 + $0x38] sm:%s288]
                  %312 = vst [vmem:[%s296 + $0x1c] sm:%s288] %v311
                  %v313 = vld [vmem:[%s295 + $0x40] sm:%s288]
                  %314 = vst [vmem:[%s296 + $0x20] sm:%s288] %v313
                  %v315 = vld [vmem:[%s295 + $0x48] sm:%s288]
                  %316 = vst [vmem:[%s296 + $0x24] sm:%s288] %v315
                  %v317 = vld [vmem:[%s295 + $0x50] sm:%s288]
                  %318 = vst [vmem:[%s296 + $0x28] sm:%s288] %v317
                  %v319 = vld [vmem:[%s295 + $0x58] sm:%s288]
                  %320 = vst [vmem:[%s296 + $0x2c] sm:%s288] %v319
                  %v321 = vld [vmem:[%s295 + $0x60] sm:%s288]
                  %322 = vst [vmem:[%s296 + $0x30] sm:%s288] %v321
                  %v323 = vld [vmem:[%s295 + $0x68] sm:%s288]
                  %324 = vst [vmem:[%s296 + $0x34] sm:%s288] %v323
                  %v325 = vld [vmem:[%s295 + $0x70] sm:%s288]
                  %326 = vst [vmem:[%s296 + $0x38] sm:%s288] %v325
                  %v327 = vld [vmem:[%s295 + $0x78] sm:%s288]
                  %328 = vst [vmem:[%s296 + $0x3c] sm:%s288] %v327
                $region67: #{tpu_custom_call.1} parent=54 // loop_footer
                  %s294 = sadd.s32 1, %s290
                $region68: #{tpu_custom_call.1} parent=54 // loop_footer_branch
                  %289 = sbr.rel target = $region64
                $region69: #{tpu_custom_call.1} parent=54 // loop_exit
                  _
              $region55: #{tpu_custom_call.1} parent=39 // pred_fallthru
                _
            $region40: #{tpu_custom_call.1} parent=35 // pred_fallthru
              _
            // Predicated region
            $region41: #{tpu_custom_call.1} parent=35 // pred_check
              _
            $region42: #{tpu_custom_call.1} parent=35 // pred_check_branch
              %234 = sbr.rel (0) target = $region44
            $region43: #{tpu_custom_call.1} parent=35 // pred_region
              %s236 = ssub.s32 16, 1
              loop: start=0, step=1, limit=1
              $region45: #{tpu_custom_call.1} parent=43 // loop_pre_header
                _
              $region46: #{tpu_custom_call.1} parent=43 // loop_header
                %s238 = sphi 0, %s242
                %p239 = scmp.ge.s32.totalorder %s238, 1
                %s243 = sphi %s228, %s228
                %s244 = sphi %s223, %s223
              $region47: #{tpu_custom_call.1} parent=43 // loop_header_branch
                %241 = sbr.rel (%p239) target = $region51
              $region48: #{tpu_custom_call.1} parent=43 // loop_body
                %v245 = vld [vmem:[%s243] sm:%s236]
                %246 = vst [vmem:[%s244] sm:%s236] %v245
                %v247 = vld [vmem:[%s243 + $0x8] sm:%s236]
                %248 = vst [vmem:[%s244 + $0x4] sm:%s236] %v247
                %v249 = vld [vmem:[%s243 + $0x10] sm:%s236]
                %250 = vst [vmem:[%s244 + $0x8] sm:%s236] %v249
                %v251 = vld [vmem:[%s243 + $0x18] sm:%s236]
                %252 = vst [vmem:[%s244 + $0xc] sm:%s236] %v251
                %v253 = vld [vmem:[%s243 + $0x20] sm:%s236]
                %254 = vst [vmem:[%s244 + $0x10] sm:%s236] %v253
                %v255 = vld [vmem:[%s243 + $0x28] sm:%s236]
                %256 = vst [vmem:[%s244 + $0x14] sm:%s236] %v255
                %v257 = vld [vmem:[%s243 + $0x30] sm:%s236]
                %258 = vst [vmem:[%s244 + $0x18] sm:%s236] %v257
                %v259 = vld [vmem:[%s243 + $0x38] sm:%s236]
                %260 = vst [vmem:[%s244 + $0x1c] sm:%s236] %v259
                %v261 = vld [vmem:[%s243 + $0x40] sm:%s236]
                %262 = vst [vmem:[%s244 + $0x20] sm:%s236] %v261
                %v263 = vld [vmem:[%s243 + $0x48] sm:%s236]
                %264 = vst [vmem:[%s244 + $0x24] sm:%s236] %v263
                %v265 = vld [vmem:[%s243 + $0x50] sm:%s236]
                %266 = vst [vmem:[%s244 + $0x28] sm:%s236] %v265
                %v267 = vld [vmem:[%s243 + $0x58] sm:%s236]
                %268 = vst [vmem:[%s244 + $0x2c] sm:%s236] %v267
                %v269 = vld [vmem:[%s243 + $0x60] sm:%s236]
                %270 = vst [vmem:[%s244 + $0x30] sm:%s236] %v269
                %v271 = vld [vmem:[%s243 + $0x68] sm:%s236]
                %272 = vst [vmem:[%s244 + $0x34] sm:%s236] %v271
                %v273 = vld [vmem:[%s243 + $0x70] sm:%s236]
                %274 = vst [vmem:[%s244 + $0x38] sm:%s236] %v273
                %v275 = vld [vmem:[%s243 + $0x78] sm:%s236]
                %276 = vst [vmem:[%s244 + $0x3c] sm:%s236] %v275
              $region49: #{tpu_custom_call.1} parent=43 // loop_footer
                %s242 = sadd.s32 1, %s238
              $region50: #{tpu_custom_call.1} parent=43 // loop_footer_branch
                %237 = sbr.rel target = $region46
              $region51: #{tpu_custom_call.1} parent=43 // loop_exit
                _
            $region44: #{tpu_custom_call.1} parent=35 // pred_fallthru
              _
          $region36: #{tpu_custom_call.1} parent=31 // pred_fallthru
            _
          %329 = vnop
        $region32: #{tpu_custom_call.1} parent=23 // pred_fallthru
          _
        // Predicated region
        $region70: #{tpu_custom_call.1} parent=23 // pred_check
          %p330 = pneg %p89
        $region71: #{tpu_custom_call.1} parent=23 // pred_check_branch
          %332 = sbr.rel (%p330) target = $region73
        $region72: #{tpu_custom_call.1} parent=23 // pred_region
          %s333 = sand.u32 %s79, 1
          %s334 = sand.u32 %s79, 1
          %s335 = smul.addr %s334, 8
          %s336 = scalar_lea.vmem [#allocation3], %s335
          %s337 = smul.u32 2, %s13
          %s338 = smul.addr %s337, 2
          %s339 = sadd.s32 %s13, %s338
          %s340 = smul.addr %s339, 4
          %s341 = scalar_lea.vmem %s2, %s340
          // Predicated region
          $region74: #{tpu_custom_call.1} parent=72 // pred_check
            _
          $region75: #{tpu_custom_call.1} parent=72 // pred_check_branch
            %343 = sbr.rel (0) target = $region77
          $region76: #{tpu_custom_call.1} parent=72 // pred_region
            // Predicated region
            $region78: #{tpu_custom_call.1} parent=76 // pred_check
              _
            $region79: #{tpu_custom_call.1} parent=76 // pred_check_branch
              %345 = sbr.rel target = $region81
            $region80: #{tpu_custom_call.1} parent=76 // pred_region
              // Predicated region
              $region93: #{tpu_custom_call.1} parent=80 // pred_check
                _
              $region94: #{tpu_custom_call.1} parent=80 // pred_check_branch
                %363 = sbr.rel (0) target = $region96
              $region95: #{tpu_custom_call.1} parent=80 // pred_region
                loop: start=0, step=1, limit=1
                $region97: #{tpu_custom_call.1} parent=95 // loop_pre_header
                  _
                $region98: #{tpu_custom_call.1} parent=95 // loop_header
                  %s365 = sphi 0, %s369
                  %p366 = scmp.ge.s32.totalorder %s365, 1
                  %s370 = sphi %s341, %s341
                  %s371 = sphi %s336, %s336
                $region99: #{tpu_custom_call.1} parent=95 // loop_header_branch
                  %368 = sbr.rel (%p366) target = $region103
                $region100: #{tpu_custom_call.1} parent=95 // loop_body
                  _
                $region101: #{tpu_custom_call.1} parent=95 // loop_footer
                  %s369 = sadd.s32 1, %s365
                $region102: #{tpu_custom_call.1} parent=95 // loop_footer_branch
                  %364 = sbr.rel target = $region98
                $region103: #{tpu_custom_call.1} parent=95 // loop_exit
                  _
                %s373 = ssub.s32 16, 1
                loop: start=0, step=1, limit=1
                $region104: #{tpu_custom_call.1} parent=95 // loop_pre_header
                  _
                $region105: #{tpu_custom_call.1} parent=95 // loop_header
                  %s375 = sphi 0, %s379
                  %p376 = scmp.ge.s32.totalorder %s375, 1
                  %s380 = sphi %s341, %s341
                  %s381 = sphi %s336, %s336
                $region106: #{tpu_custom_call.1} parent=95 // loop_header_branch
                  %378 = sbr.rel (%p376) target = $region110
                $region107: #{tpu_custom_call.1} parent=95 // loop_body
                  %v382 = vld [vmem:[%s380] sm:%s373]
                  %383 = vst [vmem:[%s381] sm:%s373] %v382
                  %v384 = vld [vmem:[%s380 + $0x8] sm:%s373]
                  %385 = vst [vmem:[%s381 + $0x4] sm:%s373] %v384
                $region108: #{tpu_custom_call.1} parent=95 // loop_footer
                  %s379 = sadd.s32 1, %s375
                $region109: #{tpu_custom_call.1} parent=95 // loop_footer_branch
                  %374 = sbr.rel target = $region105
                $region110: #{tpu_custom_call.1} parent=95 // loop_exit
                  _
              $region96: #{tpu_custom_call.1} parent=80 // pred_fallthru
                _
            $region81: #{tpu_custom_call.1} parent=76 // pred_fallthru
              _
            // Predicated region
            $region82: #{tpu_custom_call.1} parent=76 // pred_check
              _
            $region83: #{tpu_custom_call.1} parent=76 // pred_check_branch
              %347 = sbr.rel (0) target = $region85
            $region84: #{tpu_custom_call.1} parent=76 // pred_region
              %s349 = ssub.s32 16, 1
              loop: start=0, step=1, limit=1
              $region86: #{tpu_custom_call.1} parent=84 // loop_pre_header
                _
              $region87: #{tpu_custom_call.1} parent=84 // loop_header
                %s351 = sphi 0, %s355
                %p352 = scmp.ge.s32.totalorder %s351, 1
                %s356 = sphi %s341, %s341
                %s357 = sphi %s336, %s336
              $region88: #{tpu_custom_call.1} parent=84 // loop_header_branch
                %354 = sbr.rel (%p352) target = $region92
              $region89: #{tpu_custom_call.1} parent=84 // loop_body
                %v358 = vld [vmem:[%s356] sm:%s349]
                %359 = vst [vmem:[%s357] sm:%s349] %v358
                %v360 = vld [vmem:[%s356 + $0x8] sm:%s349]
                %361 = vst [vmem:[%s357 + $0x4] sm:%s349] %v360
              $region90: #{tpu_custom_call.1} parent=84 // loop_footer
                %s355 = sadd.s32 1, %s351
              $region91: #{tpu_custom_call.1} parent=84 // loop_footer_branch
                %350 = sbr.rel target = $region87
              $region92: #{tpu_custom_call.1} parent=84 // loop_exit
                _
            $region85: #{tpu_custom_call.1} parent=76 // pred_fallthru
              _
          $region77: #{tpu_custom_call.1} parent=72 // pred_fallthru
            _
          %386 = vnop
        $region73: #{tpu_custom_call.1} parent=23 // pred_fallthru
          _
      $region24: #{tpu_custom_call.1} parent=5 // pred_fallthru
        _
      %p387 = scmp.le.s32.totalorder 1, %s13
      %p388 = scmp.lt.s32.totalorder %s13, 3
      %p389 = pnand %p387, %p388
      %p390 = pneg %p389
      // Predicated region
      $region111: #{tpu_custom_call.1} parent=5 // pred_check
        _
      $region112: #{tpu_custom_call.1} parent=5 // pred_check_branch
        %392 = sbr.rel (%p389) target = $region114
      $region113: #{tpu_custom_call.1} parent=5 // pred_region
        %s393 = ssub.s32 %s13, 1
        %s394 = sand.u32 %s54, 1
        %s395 = sand.u32 %s54, 1
        %s396 = smul.addr %s395, 64
        %s397 = scalar_lea.vmem [#allocation2], %s396
        // Predicated region
        $region115: #{tpu_custom_call.1} parent=113 // pred_check
          %p398 = pneg %p67
        $region116: #{tpu_custom_call.1} parent=113 // pred_check_branch
          %400 = sbr.rel (%p398) target = $region118
        $region117: #{tpu_custom_call.1} parent=113 // pred_region
          _
        $region118: #{tpu_custom_call.1} parent=113 // pred_fallthru
          _
        %s401 = sand.u32 %s82, 1
        %s402 = sand.u32 %s82, 1
        %s403 = smul.addr %s402, 8
        %s404 = scalar_lea.vmem [#allocation3], %s403
        // Predicated region
        $region119: #{tpu_custom_call.1} parent=113 // pred_check
          %p405 = pneg %p95
        $region120: #{tpu_custom_call.1} parent=113 // pred_check_branch
          %407 = sbr.rel (%p405) target = $region122
        $region121: #{tpu_custom_call.1} parent=113 // pred_region
          _
        $region122: #{tpu_custom_call.1} parent=113 // pred_fallthru
          _
        // Predicated region
        $region123: #{tpu_custom_call.1} parent=113 // pred_check
          %p408 = pneg %p116
        $region124: #{tpu_custom_call.1} parent=113 // pred_check_branch
          %410 = sbr.rel (%p408) target = $region126
        $region125: #{tpu_custom_call.1} parent=113 // pred_region
          %411 = dma.done [#allocation5], 6144
        $region126: #{tpu_custom_call.1} parent=113 // pred_fallthru
          _
        // Predicated region
        $region127: #{tpu_custom_call.1} parent=113 // pred_check
          %p412 = pneg %p137
        $region128: #{tpu_custom_call.1} parent=113 // pred_check_branch
          %414 = sbr.rel (%p412) target = $region130
        $region129: #{tpu_custom_call.1} parent=113 // pred_region
          %415 = dma.done [#allocation7], 3072
        $region130: #{tpu_custom_call.1} parent=113 // pred_fallthru
          _
        %s416 = smul.u32 16, %s18
        %p417 = scmp.lt.s32.totalorder %s416, 31
        %s418 = scalar_select %p417, %s416, 31
        %s419 = smul.addr %s418, 8
        %s420 = scalar_lea.vmem %s0, %s419
        %p421 = pneg %p39
        %p422 = pneg %p36
        %s423 = sand.u32 %s54, 1
        %s424 = sand.u32 %s54, 1
        %s425 = smul.addr %s424, 64
        %s426 = scalar_lea.vmem [#allocation2], %s425
        %p427 = pneg %p67
        %p428 = pneg %p64
        %s429 = sand.u32 %s82, 1
        %s430 = sand.u32 %s82, 1
        %s431 = smul.addr %s430, 8
        %s432 = scalar_lea.vmem [#allocation3], %s431
        %p433 = pneg %p95
        %p434 = pneg %p92
        %p435 = pneg %p116
        %p436 = pneg %p113
        %p437 = pneg %p137
        %p438 = pneg %p134
        %p439 = pneg %p163
        %p440 = pneg %p160
        %s441 = smul.u32 2, %s18
        %p442 = scmp.lt.s32.totalorder %s441, 3
        %s443 = scalar_select %p442, %s441, 3
        %s444 = smul.addr %s443, 8
        %s445 = scalar_lea.vmem %s5, %s444
        %s446 = smul.u32 16, %s18
        %p447 = scmp.lt.s32.totalorder %s446, 31
        %s448 = scalar_select %p447, %s446, 31
        %s449 = smul.addr %s448, 8
        %s450 = scalar_lea.vmem %s0, %s449
        %s451 = smul.u32 16, %s18
        %s452 = smul.u32 16, %s18
        %s453 = smul.u32 2, %s18
        %s454 = smul.u32 2, %s18
        %p455 = scmp.lt.s32.totalorder %s454, 3
        %s456 = scalar_select %p455, %s454, 3
        %s457 = smul.addr %s456, 8
        %s458 = scalar_lea.vmem %s5, %s457
        %s459 = smul.u32 2, %s18
        %v461 = vld [vmem:[%s450] sm:$0xff]
        %v462 = vld [vmem:[%s450 + $0x8] sm:$0xff]
        %v463 = vld [vmem:[%s450 + $0x10] sm:$0xff]
        %v464 = vld [vmem:[%s450 + $0x18] sm:$0xff]
        %v465 = vld [vmem:[%s450 + $0x20] sm:$0xff]
        %v466 = vld [vmem:[%s450 + $0x28] sm:$0xff]
        %v467 = vld [vmem:[%s450 + $0x30] sm:$0xff]
        %v468 = vld [vmem:[%s450 + $0x38] sm:$0xff]
        %v469 = vld [vmem:[%s450 + $0x40] sm:$0xff]
        %v470 = vld [vmem:[%s450 + $0x48] sm:$0xff]
        %v471 = vld [vmem:[%s450 + $0x50] sm:$0xff]
        %v472 = vld [vmem:[%s450 + $0x58] sm:$0xff]
        %v473 = vld [vmem:[%s450 + $0x60] sm:$0xff]
        %v474 = vld [vmem:[%s450 + $0x68] sm:$0xff]
        %v475 = vld [vmem:[%s450 + $0x70] sm:$0xff]
        %v476 = vld [vmem:[%s450 + $0x78] sm:$0xff]
        %v477 = vld [vmem:[%s397] sm:$0xf]
        %v478 = vld [vmem:[%s397 + $0x4] sm:$0xf]
        %v479 = vld [vmem:[%s397 + $0x8] sm:$0xf]
        %v480 = vld [vmem:[%s397 + $0xc] sm:$0xf]
        %v481 = vld [vmem:[%s397 + $0x10] sm:$0xf]
        %v482 = vld [vmem:[%s397 + $0x14] sm:$0xf]
        %v483 = vld [vmem:[%s397 + $0x18] sm:$0xf]
        %v484 = vld [vmem:[%s397 + $0x1c] sm:$0xf]
        %v485 = vld [vmem:[%s397 + $0x20] sm:$0xf]
        %v486 = vld [vmem:[%s397 + $0x24] sm:$0xf]
        %v487 = vld [vmem:[%s397 + $0x28] sm:$0xf]
        %v488 = vld [vmem:[%s397 + $0x2c] sm:$0xf]
        %v489 = vld [vmem:[%s397 + $0x30] sm:$0xf]
        %v490 = vld [vmem:[%s397 + $0x34] sm:$0xf]
        %v491 = vld [vmem:[%s397 + $0x38] sm:$0xf]
        %v492 = vld [vmem:[%s397 + $0x3c] sm:$0xf]
        %v493 = vld [vmem:[%s404] sm:$0xf]
        %v494 = vld [vmem:[%s404 + $0x4] sm:$0xf]
        %v495 = vld [vmem:[#allocation4] sm:$0xff]
        %v496 = vld [vmem:[#allocation4 + $0x8] sm:$0xf]
        %v497 = vld [vmem:[#allocation4 + $0xc] sm:$0xff]
        %v498 = vld [vmem:[#allocation4 + $0x14] sm:$0xf]
        %v499 = vld [vmem:[#allocation4 + $0x18] sm:$0xff]
        %v500 = vld [vmem:[#allocation4 + $0x20] sm:$0xf]
        %v501 = vld [vmem:[#allocation4 + $0x24] sm:$0xff]
        %v502 = vld [vmem:[#allocation4 + $0x2c] sm:$0xf]
        %v503 = vld [vmem:[#allocation4 + $0x30] sm:$0xff]
        %v504 = vld [vmem:[#allocation4 + $0x38] sm:$0xf]
        %v505 = vld [vmem:[#allocation4 + $0x3c] sm:$0xff]
        %v506 = vld [vmem:[#allocation4 + $0x44] sm:$0xf]
        %v507 = vld [vmem:[#allocation4 + $0x48] sm:$0xff]
        %v508 = vld [vmem:[#allocation4 + $0x50] sm:$0xf]
        %v509 = vld [vmem:[#allocation4 + $0x54] sm:$0xff]
        %v510 = vld [vmem:[#allocation4 + $0x5c] sm:$0xf]
        %v511 = vld [vmem:[#allocation4 + $0x60] sm:$0xff]
        %v512 = vld [vmem:[#allocation4 + $0x68] sm:$0xf]
        %v513 = vld [vmem:[#allocation4 + $0x6c] sm:$0xff]
        %v514 = vld [vmem:[#allocation4 + $0x74] sm:$0xf]
        %v515 = vld [vmem:[#allocation4 + $0x78] sm:$0xff]
        %v516 = vld [vmem:[#allocation4 + $0x80] sm:$0xf]
        %v517 = vld [vmem:[#allocation4 + $0x84] sm:$0xff]
        %v518 = vld [vmem:[#allocation4 + $0x8c] sm:$0xf]
        %v519 = vld [vmem:[#allocation4 + $0x90] sm:$0xff]
        %v520 = vld [vmem:[#allocation4 + $0x98] sm:$0xf]
        %v521 = vld [vmem:[#allocation4 + $0x9c] sm:$0xff]
        %v522 = vld [vmem:[#allocation4 + $0xa4] sm:$0xf]
        %v523 = vld [vmem:[#allocation4 + $0xa8] sm:$0xff]
        %v524 = vld [vmem:[#allocation4 + $0xb0] sm:$0xf]
        %v525 = vld [vmem:[#allocation4 + $0xb4] sm:$0xff]
        %v526 = vld [vmem:[#allocation4 + $0xbc] sm:$0xf]
        %v527 = vld [vmem:[#allocation4 + $0xc0] sm:$0xff]
        %v528 = vld [vmem:[#allocation4 + $0xc8] sm:$0xf]
        %v529 = vld [vmem:[#allocation4 + $0xcc] sm:$0xff]
        %v530 = vld [vmem:[#allocation4 + $0xd4] sm:$0xf]
        %v531 = vld [vmem:[#allocation4 + $0xd8] sm:$0xff]
        %v532 = vld [vmem:[#allocation4 + $0xe0] sm:$0xf]
        %v533 = vld [vmem:[#allocation4 + $0xe4] sm:$0xff]
        %v534 = vld [vmem:[#allocation4 + $0xec] sm:$0xf]
        %v535 = vld [vmem:[#allocation4 + $0xf0] sm:$0xff]
        %v536 = vld [vmem:[#allocation4 + $0xf8] sm:$0xf]
        %v537 = vld [vmem:[#allocation4 + $0xfc] sm:$0xff]
        %v538 = vld [vmem:[#allocation4 + $0x104] sm:$0xf]
        %v539 = vld [vmem:[#allocation4 + $0x108] sm:$0xff]
        %v540 = vld [vmem:[#allocation4 + $0x110] sm:$0xf]
        %v541 = vld [vmem:[#allocation4 + $0x114] sm:$0xff]
        %v542 = vld [vmem:[#allocation4 + $0x11c] sm:$0xf]
        %v543 = vld [vmem:[#allocation4 + $0x120] sm:$0xff]
        %v544 = vld [vmem:[#allocation4 + $0x128] sm:$0xf]
        %v545 = vld [vmem:[#allocation4 + $0x12c] sm:$0xff]
        %v546 = vld [vmem:[#allocation4 + $0x134] sm:$0xf]
        %v547 = vld [vmem:[#allocation4 + $0x138] sm:$0xff]
        %v548 = vld [vmem:[#allocation4 + $0x140] sm:$0xf]
        %v549 = vld [vmem:[#allocation4 + $0x144] sm:$0xff]
        %v550 = vld [vmem:[#allocation4 + $0x14c] sm:$0xf]
        %v551 = vld [vmem:[#allocation4 + $0x150] sm:$0xff]
        %v552 = vld [vmem:[#allocation4 + $0x158] sm:$0xf]
        %v553 = vld [vmem:[#allocation4 + $0x15c] sm:$0xff]
        %v554 = vld [vmem:[#allocation4 + $0x164] sm:$0xf]
        %v555 = vld [vmem:[#allocation4 + $0x168] sm:$0xff]
        %v556 = vld [vmem:[#allocation4 + $0x170] sm:$0xf]
        %v557 = vld [vmem:[#allocation4 + $0x174] sm:$0xff]
        %v558 = vld [vmem:[#allocation4 + $0x17c] sm:$0xf]
        %v559 = vld [vmem:[#allocation6] sm:$0xf]
        %v560 = vld [vmem:[#allocation6 + $0x4] sm:$0xf]
        %v561 = vld [vmem:[#allocation6 + $0x8] sm:$0xf]
        %v562 = vld [vmem:[#allocation6 + $0xc] sm:$0xf]
        %v563 = vld [vmem:[#allocation6 + $0x10] sm:$0xf]
        %v564 = vld [vmem:[#allocation6 + $0x14] sm:$0xf]
        %v565 = vld [vmem:[#allocation6 + $0x18] sm:$0xf]
        %v566 = vld [vmem:[#allocation6 + $0x1c] sm:$0xf]
        %v567 = vld [vmem:[#allocation6 + $0x20] sm:$0xf]
        %v568 = vld [vmem:[#allocation6 + $0x24] sm:$0xf]
        %v569 = vld [vmem:[#allocation6 + $0x28] sm:$0xf]
        %v570 = vld [vmem:[#allocation6 + $0x2c] sm:$0xf]
        %v571 = vld [vmem:[#allocation6 + $0x30] sm:$0xf]
        %v572 = vld [vmem:[#allocation6 + $0x34] sm:$0xf]
        %v573 = vld [vmem:[#allocation6 + $0x38] sm:$0xf]
        %v574 = vld [vmem:[#allocation6 + $0x3c] sm:$0xf]
        %v575 = vld [vmem:[#allocation6 + $0x40] sm:$0xf]
        %v576 = vld [vmem:[#allocation6 + $0x44] sm:$0xf]
        %v577 = vld [vmem:[#allocation6 + $0x48] sm:$0xf]
        %v578 = vld [vmem:[#allocation6 + $0x4c] sm:$0xf]
        %v579 = vld [vmem:[#allocation6 + $0x50] sm:$0xf]
        %v580 = vld [vmem:[#allocation6 + $0x54] sm:$0xf]
        %v581 = vld [vmem:[#allocation6 + $0x58] sm:$0xf]
        %v582 = vld [vmem:[#allocation6 + $0x5c] sm:$0xf]
        %v583 = vld [vmem:[#allocation6 + $0x60] sm:$0xf]
        %v584 = vld [vmem:[#allocation6 + $0x64] sm:$0xf]
        %v585 = vld [vmem:[#allocation6 + $0x68] sm:$0xf]
        %v586 = vld [vmem:[#allocation6 + $0x6c] sm:$0xf]
        %v587 = vld [vmem:[#allocation6 + $0x70] sm:$0xf]
        %v588 = vld [vmem:[#allocation6 + $0x74] sm:$0xf]
        %v589 = vld [vmem:[#allocation6 + $0x78] sm:$0xf]
        %v590 = vld [vmem:[#allocation6 + $0x7c] sm:$0xf]
        %v591 = vld [vmem:[#allocation6 + $0x80] sm:$0xf]
        %v592 = vld [vmem:[#allocation6 + $0x84] sm:$0xf]
        %v593 = vld [vmem:[#allocation6 + $0x88] sm:$0xf]
        %v594 = vld [vmem:[#allocation6 + $0x8c] sm:$0xf]
        %v595 = vld [vmem:[#allocation6 + $0x90] sm:$0xf]
        %v596 = vld [vmem:[#allocation6 + $0x94] sm:$0xf]
        %v597 = vld [vmem:[#allocation6 + $0x98] sm:$0xf]
        %v598 = vld [vmem:[#allocation6 + $0x9c] sm:$0xf]
        %v599 = vld [vmem:[#allocation6 + $0xa0] sm:$0xf]
        %v600 = vld [vmem:[#allocation6 + $0xa4] sm:$0xf]
        %v601 = vld [vmem:[#allocation6 + $0xa8] sm:$0xf]
        %v602 = vld [vmem:[#allocation6 + $0xac] sm:$0xf]
        %v603 = vld [vmem:[#allocation6 + $0xb0] sm:$0xf]
        %v604 = vld [vmem:[#allocation6 + $0xb4] sm:$0xf]
        %v605 = vld [vmem:[#allocation6 + $0xb8] sm:$0xf]
        %v606 = vld [vmem:[#allocation6 + $0xbc] sm:$0xf]
        %v607 = vpack.c.bf16 %v462, %v461
        %v608 = vpack.c.bf16 %v464, %v463
        %v609 = vpack.c.bf16 %v466, %v465
        %v610 = vpack.c.bf16 %v468, %v467
        %v611 = vpack.c.bf16 %v470, %v469
        %v612 = vpack.c.bf16 %v472, %v471
        %v613 = vpack.c.bf16 %v474, %v473
        %v614 = vpack.c.bf16 %v476, %v475
        %v631 = vunpack.c.l.b16 %v477
        %v632 = vunpack.c.l.b16 %v478
        %v633 = vunpack.c.l.b16 %v479
        %v634 = vunpack.c.l.b16 %v480
        %v635 = vunpack.c.l.b16 %v481
        %v636 = vunpack.c.l.b16 %v482
        %v637 = vunpack.c.l.b16 %v483
        %v638 = vunpack.c.l.b16 %v484
        %v639 = vunpack.c.l.b16 %v485
        %v640 = vunpack.c.l.b16 %v486
        %v641 = vunpack.c.l.b16 %v487
        %v642 = vunpack.c.l.b16 %v488
        %v643 = vunpack.c.l.b16 %v489
        %v644 = vunpack.c.l.b16 %v490
        %v645 = vunpack.c.l.b16 %v491
        %v646 = vunpack.c.l.b16 %v492
        %v647 = vpack.c.b16 %v632, %v631
        %v648 = vpack.c.b16 %v634, %v633
        %v649 = vpack.c.b16 %v636, %v635
        %v650 = vpack.c.b16 %v638, %v637
        %v651 = vpack.c.b16 %v640, %v639
        %v652 = vpack.c.b16 %v642, %v641
        %v653 = vpack.c.b16 %v644, %v643
        %v654 = vpack.c.b16 %v646, %v645
        %663 = vmatprep.subr.bf16.mxu0 0
        %664 = vmatpush1.bf16.msra.mxu0 %v614
        %665 = vmatprep.subr.bf16.mxu0 0
        %666 = vmatpush1.bf16.msra.mxu0 %v613
        %667 = vmatprep.subr.bf16.mxu0 0
        %668 = vmatpush1.bf16.msra.mxu0 %v612
        %669 = vmatprep.subr.bf16.mxu0 0
        %670 = vmatpush1.bf16.msra.mxu0 %v611
        %671 = vmatprep.subr.bf16.mxu0 0
        %672 = vmatpush1.bf16.msra.mxu0 %v610
        %673 = vmatprep.subr.bf16.mxu0 0
        %674 = vmatpush1.bf16.msra.mxu0 %v609
        %675 = vmatprep.subr.bf16.mxu0 0
        %676 = vmatpush1.bf16.msra.mxu0 %v608
        %677 = vmatprep.subr.bf16.mxu0 0
        %678 = vmatpush1.bf16.msra.mxu0 %v607
        %679 = vmatprep.subr.bf16.mxu0 0
        %680 = vmatpush2.bf16.msra.mxu0 0
        %681 = vmatprep.subr.bf16.mxu0 0
        %682 = vmatpush2.bf16.msra.mxu0 0
        %683 = vmatprep.subr.bf16.mxu0 0
        %684 = vmatpush2.bf16.msra.mxu0 0
        %685 = vmatprep.subr.bf16.mxu0 0
        %686 = vmatpush2.bf16.msra.mxu0 0
        %687 = vmatprep.subr.bf16.mxu0 0
        %688 = vmatpush2.bf16.msra.mxu0 0
        %689 = vmatprep.subr.bf16.mxu0 0
        %690 = vmatpush2.bf16.msra.mxu0 0
        %691 = vmatprep.subr.bf16.mxu0 0
        %692 = vmatpush2.bf16.msra.mxu0 0
        %693 = vmatprep.subr.bf16.mxu0 0
        %694 = vmatpush2.bf16.msra.mxu0 0
        %695 = vmatprep.mubr.bf16.mxu0 0
        %696 = vmatmul.mubr.bf16.gmra.mxu0 %v647
        %v697 = vpop.f32.mrf.mxu0
        %v698 = vadd.f32 0.0, %v697
        %v699 = vpop.f32.mrf.mxu0
        %v700 = vpop.f32.mrf.mxu0
        %v701 = vadd.f32 0.0, %v700
        %v702 = vpop.f32.mrf.mxu0
        %703 = vmatprep.mubr.bf16.mxu0 0
        %704 = vmatmul.mubr.bf16.gmra.mxu0 %v648
        %v705 = vpop.f32.mrf.mxu0
        %v706 = vadd.f32 0.0, %v705
        %v707 = vpop.f32.mrf.mxu0
        %v708 = vpop.f32.mrf.mxu0
        %v709 = vadd.f32 0.0, %v708
        %v710 = vpop.f32.mrf.mxu0
        %711 = vmatprep.mubr.bf16.mxu0 0
        %712 = vmatmul.mubr.bf16.gmra.mxu0 %v649
        %v713 = vpop.f32.mrf.mxu0
        %v714 = vadd.f32 0.0, %v713
        %v715 = vpop.f32.mrf.mxu0
        %v716 = vpop.f32.mrf.mxu0
        %v717 = vadd.f32 0.0, %v716
        %v718 = vpop.f32.mrf.mxu0
        %719 = vmatprep.mubr.bf16.mxu0 0
        %720 = vmatmul.mubr.bf16.gmra.mxu0 %v650
        %v721 = vpop.f32.mrf.mxu0
        %v722 = vadd.f32 0.0, %v721
        %v723 = vpop.f32.mrf.mxu0
        %v724 = vpop.f32.mrf.mxu0
        %v725 = vadd.f32 0.0, %v724
        %v726 = vpop.f32.mrf.mxu0
        %727 = vmatprep.mubr.bf16.mxu0 0
        %728 = vmatmul.mubr.bf16.gmra.mxu0 %v651
        %v729 = vpop.f32.mrf.mxu0
        %v730 = vadd.f32 0.0, %v729
        %v731 = vpop.f32.mrf.mxu0
        %v732 = vpop.f32.mrf.mxu0
        %v733 = vadd.f32 0.0, %v732
        %v734 = vpop.f32.mrf.mxu0
        %735 = vmatprep.mubr.bf16.mxu0 0
        %736 = vmatmul.mubr.bf16.gmra.mxu0 %v652
        %v737 = vpop.f32.mrf.mxu0
        %v738 = vadd.f32 0.0, %v737
        %v739 = vpop.f32.mrf.mxu0
        %v740 = vpop.f32.mrf.mxu0
        %v741 = vadd.f32 0.0, %v740
        %v742 = vpop.f32.mrf.mxu0
        %743 = vmatprep.mubr.bf16.mxu0 0
        %744 = vmatmul.mubr.bf16.gmra.mxu0 %v653
        %v745 = vpop.f32.mrf.mxu0
        %v746 = vadd.f32 0.0, %v745
        %v747 = vpop.f32.mrf.mxu0
        %v748 = vpop.f32.mrf.mxu0
        %v749 = vadd.f32 0.0, %v748
        %v750 = vpop.f32.mrf.mxu0
        %751 = vmatprep.mubr.bf16.mxu0 0
        %752 = vmatmul.mubr.bf16.gmra.mxu0 %v654
        %v753 = vpop.f32.mrf.mxu0
        %v754 = vadd.f32 0.0, %v753
        %v755 = vpop.f32.mrf.mxu0
        %v756 = vpop.f32.mrf.mxu0
        %v757 = vadd.f32 0.0, %v756
        %v758 = vpop.f32.mrf.mxu0
        %759 = vdwg.mxu0
        %v760 = vmul.f32 %v698, 0.70710677
        %v761 = vmul.f32 %v701, 0.70710677
        %v762 = vmul.f32 %v706, 0.70710677
        %v763 = vmul.f32 %v709, 0.70710677
        %v764 = vmul.f32 %v714, 0.70710677
        %v765 = vmul.f32 %v717, 0.70710677
        %v766 = vmul.f32 %v722, 0.70710677
        %v767 = vmul.f32 %v725, 0.70710677
        %v768 = vmul.f32 %v730, 0.70710677
        %v769 = vmul.f32 %v733, 0.70710677
        %v770 = vmul.f32 %v738, 0.70710677
        %v771 = vmul.f32 %v741, 0.70710677
        %v772 = vmul.f32 %v746, 0.70710677
        %v773 = vmul.f32 %v749, 0.70710677
        %v774 = vmul.f32 %v754, 0.70710677
        %v775 = vmul.f32 %v757, 0.70710677
        %777 = vset.pattern.permute.xlu0 0
        %778 = vperm.xlu0 %777, %v461
        %v779 = vpop.permute.xlu0 %778
        %782 = vset.pattern.permute.xlu0 0
        %783 = vperm.xlu0 %782, %v462
        %v784 = vpop.permute.xlu0 %783
        %787 = vset.pattern.permute.xlu0 0
        %788 = vperm.xlu0 %787, %v463
        %v789 = vpop.permute.xlu0 %788
        %792 = vset.pattern.permute.xlu0 0
        %793 = vperm.xlu0 %792, %v464
        %v794 = vpop.permute.xlu0 %793
        %797 = vset.pattern.permute.xlu0 0
        %798 = vperm.xlu0 %797, %v465
        %v799 = vpop.permute.xlu0 %798
        %802 = vset.pattern.permute.xlu0 0
        %803 = vperm.xlu0 %802, %v466
        %v804 = vpop.permute.xlu0 %803
        %807 = vset.pattern.permute.xlu0 0
        %808 = vperm.xlu0 %807, %v467
        %v809 = vpop.permute.xlu0 %808
        %812 = vset.pattern.permute.xlu0 0
        %813 = vperm.xlu0 %812, %v468
        %v814 = vpop.permute.xlu0 %813
        %817 = vset.pattern.permute.xlu0 0
        %818 = vperm.xlu0 %817, %v469
        %v819 = vpop.permute.xlu0 %818
        %822 = vset.pattern.permute.xlu0 0
        %823 = vperm.xlu0 %822, %v470
        %v824 = vpop.permute.xlu0 %823
        %827 = vset.pattern.permute.xlu0 0
        %828 = vperm.xlu0 %827, %v471
        %v829 = vpop.permute.xlu0 %828
        %832 = vset.pattern.permute.xlu0 0
        %833 = vperm.xlu0 %832, %v472
        %v834 = vpop.permute.xlu0 %833
        %837 = vset.pattern.permute.xlu0 0
        %838 = vperm.xlu0 %837, %v473
        %v839 = vpop.permute.xlu0 %838
        %842 = vset.pattern.permute.xlu0 0
        %843 = vperm.xlu0 %842, %v474
        %v844 = vpop.permute.xlu0 %843
        %847 = vset.pattern.permute.xlu0 0
        %848 = vperm.xlu0 %847, %v475
        %v849 = vpop.permute.xlu0 %848
        %852 = vset.pattern.permute.xlu0 0
        %853 = vperm.xlu0 %852, %v476
        %v854 = vpop.permute.xlu0 %853
        %v856 = vmul.f32 %v779, %v760
        %v857 = vmul.f32 %v784, %v761
        %v858 = vmul.f32 %v789, %v762
        %v859 = vmul.f32 %v794, %v763
        %v860 = vmul.f32 %v799, %v764
        %v861 = vmul.f32 %v804, %v765
        %v862 = vmul.f32 %v809, %v766
        %v863 = vmul.f32 %v814, %v767
        %v864 = vmul.f32 %v819, %v768
        %v865 = vmul.f32 %v824, %v769
        %v866 = vmul.f32 %v829, %v770
        %v867 = vmul.f32 %v834, %v771
        %v868 = vmul.f32 %v839, %v772
        %v869 = vmul.f32 %v844, %v773
        %v870 = vmul.f32 %v849, %v774
        %v871 = vmul.f32 %v854, %v775
        %872 = vset.pattern.permute.xlu0 1
        %873 = vperm.xlu0 %872, %v461
        %v874 = vpop.permute.xlu0 %873
        %876 = vset.pattern.permute.xlu0 1
        %877 = vperm.xlu0 %876, %v462
        %v878 = vpop.permute.xlu0 %877
        %880 = vset.pattern.permute.xlu0 1
        %881 = vperm.xlu0 %880, %v463
        %v882 = vpop.permute.xlu0 %881
        %884 = vset.pattern.permute.xlu0 1
        %885 = vperm.xlu0 %884, %v464
        %v886 = vpop.permute.xlu0 %885
        %888 = vset.pattern.permute.xlu0 1
        %889 = vperm.xlu0 %888, %v465
        %v890 = vpop.permute.xlu0 %889
        %892 = vset.pattern.permute.xlu0 1
        %893 = vperm.xlu0 %892, %v466
        %v894 = vpop.permute.xlu0 %893
        %896 = vset.pattern.permute.xlu0 1
        %897 = vperm.xlu0 %896, %v467
        %v898 = vpop.permute.xlu0 %897
        %900 = vset.pattern.permute.xlu0 1
        %901 = vperm.xlu0 %900, %v468
        %v902 = vpop.permute.xlu0 %901
        %904 = vset.pattern.permute.xlu0 1
        %905 = vperm.xlu0 %904, %v469
        %v906 = vpop.permute.xlu0 %905
        %908 = vset.pattern.permute.xlu0 1
        %909 = vperm.xlu0 %908, %v470
        %v910 = vpop.permute.xlu0 %909
        %912 = vset.pattern.permute.xlu0 1
        %913 = vperm.xlu0 %912, %v471
        %v914 = vpop.permute.xlu0 %913
        %916 = vset.pattern.permute.xlu0 1
        %917 = vperm.xlu0 %916, %v472
        %v918 = vpop.permute.xlu0 %917
        %920 = vset.pattern.permute.xlu0 1
        %921 = vperm.xlu0 %920, %v473
        %v922 = vpop.permute.xlu0 %921
        %924 = vset.pattern.permute.xlu0 1
        %925 = vperm.xlu0 %924, %v474
        %v926 = vpop.permute.xlu0 %925
        %928 = vset.pattern.permute.xlu0 1
        %929 = vperm.xlu0 %928, %v475
        %v930 = vpop.permute.xlu0 %929
        %932 = vset.pattern.permute.xlu0 1
        %933 = vperm.xlu0 %932, %v476
        %v934 = vpop.permute.xlu0 %933
        %v936 = vmul.f32 %v874, %v760
        %v937 = vmul.f32 %v878, %v761
        %v938 = vmul.f32 %v882, %v762
        %v939 = vmul.f32 %v886, %v763
        %v940 = vmul.f32 %v890, %v764
        %v941 = vmul.f32 %v894, %v765
        %v942 = vmul.f32 %v898, %v766
        %v943 = vmul.f32 %v902, %v767
        %v944 = vmul.f32 %v906, %v768
        %v945 = vmul.f32 %v910, %v769
        %v946 = vmul.f32 %v914, %v770
        %v947 = vmul.f32 %v918, %v771
        %v948 = vmul.f32 %v922, %v772
        %v949 = vmul.f32 %v926, %v773
        %v950 = vmul.f32 %v930, %v774
        %v951 = vmul.f32 %v934, %v775
        %952 = vset.pattern.permute.xlu0 2
        %953 = vperm.xlu0 %952, %v461
        %v954 = vpop.permute.xlu0 %953
        %956 = vset.pattern.permute.xlu0 2
        %957 = vperm.xlu0 %956, %v462
        %v958 = vpop.permute.xlu0 %957
        %960 = vset.pattern.permute.xlu0 2
        %961 = vperm.xlu0 %960, %v463
        %v962 = vpop.permute.xlu0 %961
        %964 = vset.pattern.permute.xlu0 2
        %965 = vperm.xlu0 %964, %v464
        %v966 = vpop.permute.xlu0 %965
        %968 = vset.pattern.permute.xlu0 2
        %969 = vperm.xlu0 %968, %v465
        %v970 = vpop.permute.xlu0 %969
        %972 = vset.pattern.permute.xlu0 2
        %973 = vperm.xlu0 %972, %v466
        %v974 = vpop.permute.xlu0 %973
        %976 = vset.pattern.permute.xlu0 2
        %977 = vperm.xlu0 %976, %v467
        %v978 = vpop.permute.xlu0 %977
        %980 = vset.pattern.permute.xlu0 2
        %981 = vperm.xlu0 %980, %v468
        %v982 = vpop.permute.xlu0 %981
        %984 = vset.pattern.permute.xlu0 2
        %985 = vperm.xlu0 %984, %v469
        %v986 = vpop.permute.xlu0 %985
        %988 = vset.pattern.permute.xlu0 2
        %989 = vperm.xlu0 %988, %v470
        %v990 = vpop.permute.xlu0 %989
        %992 = vset.pattern.permute.xlu0 2
        %993 = vperm.xlu0 %992, %v471
        %v994 = vpop.permute.xlu0 %993
        %996 = vset.pattern.permute.xlu0 2
        %997 = vperm.xlu0 %996, %v472
        %v998 = vpop.permute.xlu0 %997
        %1000 = vset.pattern.permute.xlu0 2
        %1001 = vperm.xlu0 %1000, %v473
        %v1002 = vpop.permute.xlu0 %1001
        %1004 = vset.pattern.permute.xlu0 2
        %1005 = vperm.xlu0 %1004, %v474
        %v1006 = vpop.permute.xlu0 %1005
        %1008 = vset.pattern.permute.xlu0 2
        %1009 = vperm.xlu0 %1008, %v475
        %v1010 = vpop.permute.xlu0 %1009
        %1012 = vset.pattern.permute.xlu0 2
        %1013 = vperm.xlu0 %1012, %v476
        %v1014 = vpop.permute.xlu0 %1013
        %v1016 = vmul.f32 %v954, %v760
        %v1017 = vmul.f32 %v958, %v761
        %v1018 = vmul.f32 %v962, %v762
        %v1019 = vmul.f32 %v966, %v763
        %v1020 = vmul.f32 %v970, %v764
        %v1021 = vmul.f32 %v974, %v765
        %v1022 = vmul.f32 %v978, %v766
        %v1023 = vmul.f32 %v982, %v767
        %v1024 = vmul.f32 %v986, %v768
        %v1025 = vmul.f32 %v990, %v769
        %v1026 = vmul.f32 %v994, %v770
        %v1027 = vmul.f32 %v998, %v771
        %v1028 = vmul.f32 %v1002, %v772
        %v1029 = vmul.f32 %v1006, %v773
        %v1030 = vmul.f32 %v1010, %v774
        %v1031 = vmul.f32 %v1014, %v775
        %1032 = vset.pattern.permute.xlu0 3
        %1033 = vperm.xlu0 %1032, %v461
        %v1034 = vpop.permute.xlu0 %1033
        %1036 = vset.pattern.permute.xlu0 3
        %1037 = vperm.xlu0 %1036, %v462
        %v1038 = vpop.permute.xlu0 %1037
        %1040 = vset.pattern.permute.xlu0 3
        %1041 = vperm.xlu0 %1040, %v463
        %v1042 = vpop.permute.xlu0 %1041
        %1044 = vset.pattern.permute.xlu0 3
        %1045 = vperm.xlu0 %1044, %v464
        %v1046 = vpop.permute.xlu0 %1045
        %1048 = vset.pattern.permute.xlu0 3
        %1049 = vperm.xlu0 %1048, %v465
        %v1050 = vpop.permute.xlu0 %1049
        %1052 = vset.pattern.permute.xlu0 3
        %1053 = vperm.xlu0 %1052, %v466
        %v1054 = vpop.permute.xlu0 %1053
        %1056 = vset.pattern.permute.xlu0 3
        %1057 = vperm.xlu0 %1056, %v467
        %v1058 = vpop.permute.xlu0 %1057
        %1060 = vset.pattern.permute.xlu0 3
        %1061 = vperm.xlu0 %1060, %v468
        %v1062 = vpop.permute.xlu0 %1061
        %1064 = vset.pattern.permute.xlu0 3
        %1065 = vperm.xlu0 %1064, %v469
        %v1066 = vpop.permute.xlu0 %1065
        %1068 = vset.pattern.permute.xlu0 3
        %1069 = vperm.xlu0 %1068, %v470
        %v1070 = vpop.permute.xlu0 %1069
        %1072 = vset.pattern.permute.xlu0 3
        %1073 = vperm.xlu0 %1072, %v471
        %v1074 = vpop.permute.xlu0 %1073
        %1076 = vset.pattern.permute.xlu0 3
        %1077 = vperm.xlu0 %1076, %v472
        %v1078 = vpop.permute.xlu0 %1077
        %1080 = vset.pattern.permute.xlu0 3
        %1081 = vperm.xlu0 %1080, %v473
        %v1082 = vpop.permute.xlu0 %1081
        %1084 = vset.pattern.permute.xlu0 3
        %1085 = vperm.xlu0 %1084, %v474
        %v1086 = vpop.permute.xlu0 %1085
        %1088 = vset.pattern.permute.xlu0 3
        %1089 = vperm.xlu0 %1088, %v475
        %v1090 = vpop.permute.xlu0 %1089
        %1092 = vset.pattern.permute.xlu0 3
        %1093 = vperm.xlu0 %1092, %v476
        %v1094 = vpop.permute.xlu0 %1093
        %v1096 = vmul.f32 %v1034, %v760
        %v1097 = vmul.f32 %v1038, %v761
        %v1098 = vmul.f32 %v1042, %v762
        %v1099 = vmul.f32 %v1046, %v763
        %v1100 = vmul.f32 %v1050, %v764
        %v1101 = vmul.f32 %v1054, %v765
        %v1102 = vmul.f32 %v1058, %v766
        %v1103 = vmul.f32 %v1062, %v767
        %v1104 = vmul.f32 %v1066, %v768
        %v1105 = vmul.f32 %v1070, %v769
        %v1106 = vmul.f32 %v1074, %v770
        %v1107 = vmul.f32 %v1078, %v771
        %v1108 = vmul.f32 %v1082, %v772
        %v1109 = vmul.f32 %v1086, %v773
        %v1110 = vmul.f32 %v1090, %v774
        %v1111 = vmul.f32 %v1094, %v775
        %1112 = vset.pattern.permute.xlu0 4
        %1113 = vperm.xlu0 %1112, %v461
        %v1114 = vpop.permute.xlu0 %1113
        %1116 = vset.pattern.permute.xlu0 4
        %1117 = vperm.xlu0 %1116, %v462
        %v1118 = vpop.permute.xlu0 %1117
        %1120 = vset.pattern.permute.xlu0 4
        %1121 = vperm.xlu0 %1120, %v463
        %v1122 = vpop.permute.xlu0 %1121
        %1124 = vset.pattern.permute.xlu0 4
        %1125 = vperm.xlu0 %1124, %v464
        %v1126 = vpop.permute.xlu0 %1125
        %1128 = vset.pattern.permute.xlu0 4
        %1129 = vperm.xlu0 %1128, %v465
        %v1130 = vpop.permute.xlu0 %1129
        %1132 = vset.pattern.permute.xlu0 4
        %1133 = vperm.xlu0 %1132, %v466
        %v1134 = vpop.permute.xlu0 %1133
        %1136 = vset.pattern.permute.xlu0 4
        %1137 = vperm.xlu0 %1136, %v467
        %v1138 = vpop.permute.xlu0 %1137
        %1140 = vset.pattern.permute.xlu0 4
        %1141 = vperm.xlu0 %1140, %v468
        %v1142 = vpop.permute.xlu0 %1141
        %1144 = vset.pattern.permute.xlu0 4
        %1145 = vperm.xlu0 %1144, %v469
        %v1146 = vpop.permute.xlu0 %1145
        %1148 = vset.pattern.permute.xlu0 4
        %1149 = vperm.xlu0 %1148, %v470
        %v1150 = vpop.permute.xlu0 %1149
        %1152 = vset.pattern.permute.xlu0 4
        %1153 = vperm.xlu0 %1152, %v471
        %v1154 = vpop.permute.xlu0 %1153
        %1156 = vset.pattern.permute.xlu0 4
        %1157 = vperm.xlu0 %1156, %v472
        %v1158 = vpop.permute.xlu0 %1157
        %1160 = vset.pattern.permute.xlu0 4
        %1161 = vperm.xlu0 %1160, %v473
        %v1162 = vpop.permute.xlu0 %1161
        %1164 = vset.pattern.permute.xlu0 4
        %1165 = vperm.xlu0 %1164, %v474
        %v1166 = vpop.permute.xlu0 %1165
        %1168 = vset.pattern.permute.xlu0 4
        %1169 = vperm.xlu0 %1168, %v475
        %v1170 = vpop.permute.xlu0 %1169
        %1172 = vset.pattern.permute.xlu0 4
        %1173 = vperm.xlu0 %1172, %v476
        %v1174 = vpop.permute.xlu0 %1173
        %v1176 = vmul.f32 %v1114, %v760
        %v1177 = vmul.f32 %v1118, %v761
        %v1178 = vmul.f32 %v1122, %v762
        %v1179 = vmul.f32 %v1126, %v763
        %v1180 = vmul.f32 %v1130, %v764
        %v1181 = vmul.f32 %v1134, %v765
        %v1182 = vmul.f32 %v1138, %v766
        %v1183 = vmul.f32 %v1142, %v767
        %v1184 = vmul.f32 %v1146, %v768
        %v1185 = vmul.f32 %v1150, %v769
        %v1186 = vmul.f32 %v1154, %v770
        %v1187 = vmul.f32 %v1158, %v771
        %v1188 = vmul.f32 %v1162, %v772
        %v1189 = vmul.f32 %v1166, %v773
        %v1190 = vmul.f32 %v1170, %v774
        %v1191 = vmul.f32 %v1174, %v775
        %1192 = vset.pattern.permute.xlu0 5
        %1193 = vperm.xlu0 %1192, %v461
        %v1194 = vpop.permute.xlu0 %1193
        %1196 = vset.pattern.permute.xlu0 5
        %1197 = vperm.xlu0 %1196, %v462
        %v1198 = vpop.permute.xlu0 %1197
        %1200 = vset.pattern.permute.xlu0 5
        %1201 = vperm.xlu0 %1200, %v463
        %v1202 = vpop.permute.xlu0 %1201
        %1204 = vset.pattern.permute.xlu0 5
        %1205 = vperm.xlu0 %1204, %v464
        %v1206 = vpop.permute.xlu0 %1205
        %1208 = vset.pattern.permute.xlu0 5
        %1209 = vperm.xlu0 %1208, %v465
        %v1210 = vpop.permute.xlu0 %1209
        %1212 = vset.pattern.permute.xlu0 5
        %1213 = vperm.xlu0 %1212, %v466
        %v1214 = vpop.permute.xlu0 %1213
        %1216 = vset.pattern.permute.xlu0 5
        %1217 = vperm.xlu0 %1216, %v467
        %v1218 = vpop.permute.xlu0 %1217
        %1220 = vset.pattern.permute.xlu0 5
        %1221 = vperm.xlu0 %1220, %v468
        %v1222 = vpop.permute.xlu0 %1221
        %1224 = vset.pattern.permute.xlu0 5
        %1225 = vperm.xlu0 %1224, %v469
        %v1226 = vpop.permute.xlu0 %1225
        %1228 = vset.pattern.permute.xlu0 5
        %1229 = vperm.xlu0 %1228, %v470
        %v1230 = vpop.permute.xlu0 %1229
        %1232 = vset.pattern.permute.xlu0 5
        %1233 = vperm.xlu0 %1232, %v471
        %v1234 = vpop.permute.xlu0 %1233
        %1236 = vset.pattern.permute.xlu0 5
        %1237 = vperm.xlu0 %1236, %v472
        %v1238 = vpop.permute.xlu0 %1237
        %1240 = vset.pattern.permute.xlu0 5
        %1241 = vperm.xlu0 %1240, %v473
        %v1242 = vpop.permute.xlu0 %1241
        %1244 = vset.pattern.permute.xlu0 5
        %1245 = vperm.xlu0 %1244, %v474
        %v1246 = vpop.permute.xlu0 %1245
        %1248 = vset.pattern.permute.xlu0 5
        %1249 = vperm.xlu0 %1248, %v475
        %v1250 = vpop.permute.xlu0 %1249
        %1252 = vset.pattern.permute.xlu0 5
        %1253 = vperm.xlu0 %1252, %v476
        %v1254 = vpop.permute.xlu0 %1253
        %v1256 = vmul.f32 %v1194, %v760
        %v1257 = vmul.f32 %v1198, %v761
        %v1258 = vmul.f32 %v1202, %v762
        %v1259 = vmul.f32 %v1206, %v763
        %v1260 = vmul.f32 %v1210, %v764
        %v1261 = vmul.f32 %v1214, %v765
        %v1262 = vmul.f32 %v1218, %v766
        %v1263 = vmul.f32 %v1222, %v767
        %v1264 = vmul.f32 %v1226, %v768
        %v1265 = vmul.f32 %v1230, %v769
        %v1266 = vmul.f32 %v1234, %v770
        %v1267 = vmul.f32 %v1238, %v771
        %v1268 = vmul.f32 %v1242, %v772
        %v1269 = vmul.f32 %v1246, %v773
        %v1270 = vmul.f32 %v1250, %v774
        %v1271 = vmul.f32 %v1254, %v775
        %1272 = vset.pattern.permute.xlu0 6
        %1273 = vperm.xlu0 %1272, %v461
        %v1274 = vpop.permute.xlu0 %1273
        %1276 = vset.pattern.permute.xlu0 6
        %1277 = vperm.xlu0 %1276, %v462
        %v1278 = vpop.permute.xlu0 %1277
        %1280 = vset.pattern.permute.xlu0 6
        %1281 = vperm.xlu0 %1280, %v463
        %v1282 = vpop.permute.xlu0 %1281
        %1284 = vset.pattern.permute.xlu0 6
        %1285 = vperm.xlu0 %1284, %v464
        %v1286 = vpop.permute.xlu0 %1285
        %1288 = vset.pattern.permute.xlu0 6
        %1289 = vperm.xlu0 %1288, %v465
        %v1290 = vpop.permute.xlu0 %1289
        %1292 = vset.pattern.permute.xlu0 6
        %1293 = vperm.xlu0 %1292, %v466
        %v1294 = vpop.permute.xlu0 %1293
        %1296 = vset.pattern.permute.xlu0 6
        %1297 = vperm.xlu0 %1296, %v467
        %v1298 = vpop.permute.xlu0 %1297
        %1300 = vset.pattern.permute.xlu0 6
        %1301 = vperm.xlu0 %1300, %v468
        %v1302 = vpop.permute.xlu0 %1301
        %1304 = vset.pattern.permute.xlu0 6
        %1305 = vperm.xlu0 %1304, %v469
        %v1306 = vpop.permute.xlu0 %1305
        %1308 = vset.pattern.permute.xlu0 6
        %1309 = vperm.xlu0 %1308, %v470
        %v1310 = vpop.permute.xlu0 %1309
        %1312 = vset.pattern.permute.xlu0 6
        %1313 = vperm.xlu0 %1312, %v471
        %v1314 = vpop.permute.xlu0 %1313
        %1316 = vset.pattern.permute.xlu0 6
        %1317 = vperm.xlu0 %1316, %v472
        %v1318 = vpop.permute.xlu0 %1317
        %1320 = vset.pattern.permute.xlu0 6
        %1321 = vperm.xlu0 %1320, %v473
        %v1322 = vpop.permute.xlu0 %1321
        %1324 = vset.pattern.permute.xlu0 6
        %1325 = vperm.xlu0 %1324, %v474
        %v1326 = vpop.permute.xlu0 %1325
        %1328 = vset.pattern.permute.xlu0 6
        %1329 = vperm.xlu0 %1328, %v475
        %v1330 = vpop.permute.xlu0 %1329
        %1332 = vset.pattern.permute.xlu0 6
        %1333 = vperm.xlu0 %1332, %v476
        %v1334 = vpop.permute.xlu0 %1333
        %v1336 = vmul.f32 %v1274, %v760
        %v1337 = vmul.f32 %v1278, %v761
        %v1338 = vmul.f32 %v1282, %v762
        %v1339 = vmul.f32 %v1286, %v763
        %v1340 = vmul.f32 %v1290, %v764
        %v1341 = vmul.f32 %v1294, %v765
        %v1342 = vmul.f32 %v1298, %v766
        %v1343 = vmul.f32 %v1302, %v767
        %v1344 = vmul.f32 %v1306, %v768
        %v1345 = vmul.f32 %v1310, %v769
        %v1346 = vmul.f32 %v1314, %v770
        %v1347 = vmul.f32 %v1318, %v771
        %v1348 = vmul.f32 %v1322, %v772
        %v1349 = vmul.f32 %v1326, %v773
        %v1350 = vmul.f32 %v1330, %v774
        %v1351 = vmul.f32 %v1334, %v775
        %1352 = vset.pattern.permute.xlu0 7
        %1353 = vperm.xlu0 %1352, %v461
        %v1354 = vpop.permute.xlu0 %1353
        %1356 = vset.pattern.permute.xlu0 7
        %1357 = vperm.xlu0 %1356, %v462
        %v1358 = vpop.permute.xlu0 %1357
        %1360 = vset.pattern.permute.xlu0 7
        %1361 = vperm.xlu0 %1360, %v463
        %v1362 = vpop.permute.xlu0 %1361
        %1364 = vset.pattern.permute.xlu0 7
        %1365 = vperm.xlu0 %1364, %v464
        %v1366 = vpop.permute.xlu0 %1365
        %1368 = vset.pattern.permute.xlu0 7
        %1369 = vperm.xlu0 %1368, %v465
        %v1370 = vpop.permute.xlu0 %1369
        %1372 = vset.pattern.permute.xlu0 7
        %1373 = vperm.xlu0 %1372, %v466
        %v1374 = vpop.permute.xlu0 %1373
        %1376 = vset.pattern.permute.xlu0 7
        %1377 = vperm.xlu0 %1376, %v467
        %v1378 = vpop.permute.xlu0 %1377
        %1380 = vset.pattern.permute.xlu0 7
        %1381 = vperm.xlu0 %1380, %v468
        %v1382 = vpop.permute.xlu0 %1381
        %1384 = vset.pattern.permute.xlu0 7
        %1385 = vperm.xlu0 %1384, %v469
        %v1386 = vpop.permute.xlu0 %1385
        %1388 = vset.pattern.permute.xlu0 7
        %1389 = vperm.xlu0 %1388, %v470
        %v1390 = vpop.permute.xlu0 %1389
        %1392 = vset.pattern.permute.xlu0 7
        %1393 = vperm.xlu0 %1392, %v471
        %v1394 = vpop.permute.xlu0 %1393
        %1396 = vset.pattern.permute.xlu0 7
        %1397 = vperm.xlu0 %1396, %v472
        %v1398 = vpop.permute.xlu0 %1397
        %1400 = vset.pattern.permute.xlu0 7
        %1401 = vperm.xlu0 %1400, %v473
        %v1402 = vpop.permute.xlu0 %1401
        %1404 = vset.pattern.permute.xlu0 7
        %1405 = vperm.xlu0 %1404, %v474
        %v1406 = vpop.permute.xlu0 %1405
        %1408 = vset.pattern.permute.xlu0 7
        %1409 = vperm.xlu0 %1408, %v475
        %v1410 = vpop.permute.xlu0 %1409
        %1412 = vset.pattern.permute.xlu0 7
        %1413 = vperm.xlu0 %1412, %v476
        %v1414 = vpop.permute.xlu0 %1413
        %v1416 = vmul.f32 %v1354, %v760
        %v1417 = vmul.f32 %v1358, %v761
        %v1418 = vmul.f32 %v1362, %v762
        %v1419 = vmul.f32 %v1366, %v763
        %v1420 = vmul.f32 %v1370, %v764
        %v1421 = vmul.f32 %v1374, %v765
        %v1422 = vmul.f32 %v1378, %v766
        %v1423 = vmul.f32 %v1382, %v767
        %v1424 = vmul.f32 %v1386, %v768
        %v1425 = vmul.f32 %v1390, %v769
        %v1426 = vmul.f32 %v1394, %v770
        %v1427 = vmul.f32 %v1398, %v771
        %v1428 = vmul.f32 %v1402, %v772
        %v1429 = vmul.f32 %v1406, %v773
        %v1430 = vmul.f32 %v1410, %v774
        %v1431 = vmul.f32 %v1414, %v775
        %1432 = vset.pattern.permute.xlu0 8
        %1433 = vperm.xlu0 %1432, %v461
        %v1434 = vpop.permute.xlu0 %1433
        %1436 = vset.pattern.permute.xlu0 8
        %1437 = vperm.xlu0 %1436, %v462
        %v1438 = vpop.permute.xlu0 %1437
        %1440 = vset.pattern.permute.xlu0 8
        %1441 = vperm.xlu0 %1440, %v463
        %v1442 = vpop.permute.xlu0 %1441
        %1444 = vset.pattern.permute.xlu0 8
        %1445 = vperm.xlu0 %1444, %v464
        %v1446 = vpop.permute.xlu0 %1445
        %1448 = vset.pattern.permute.xlu0 8
        %1449 = vperm.xlu0 %1448, %v465
        %v1450 = vpop.permute.xlu0 %1449
        %1452 = vset.pattern.permute.xlu0 8
        %1453 = vperm.xlu0 %1452, %v466
        %v1454 = vpop.permute.xlu0 %1453
        %1456 = vset.pattern.permute.xlu0 8
        %1457 = vperm.xlu0 %1456, %v467
        %v1458 = vpop.permute.xlu0 %1457
        %1460 = vset.pattern.permute.xlu0 8
        %1461 = vperm.xlu0 %1460, %v468
        %v1462 = vpop.permute.xlu0 %1461
        %1464 = vset.pattern.permute.xlu0 8
        %1465 = vperm.xlu0 %1464, %v469
        %v1466 = vpop.permute.xlu0 %1465
        %1468 = vset.pattern.permute.xlu0 8
        %1469 = vperm.xlu0 %1468, %v470
        %v1470 = vpop.permute.xlu0 %1469
        %1472 = vset.pattern.permute.xlu0 8
        %1473 = vperm.xlu0 %1472, %v471
        %v1474 = vpop.permute.xlu0 %1473
        %1476 = vset.pattern.permute.xlu0 8
        %1477 = vperm.xlu0 %1476, %v472
        %v1478 = vpop.permute.xlu0 %1477
        %1480 = vset.pattern.permute.xlu0 8
        %1481 = vperm.xlu0 %1480, %v473
        %v1482 = vpop.permute.xlu0 %1481
        %1484 = vset.pattern.permute.xlu0 8
        %1485 = vperm.xlu0 %1484, %v474
        %v1486 = vpop.permute.xlu0 %1485
        %1488 = vset.pattern.permute.xlu0 8
        %1489 = vperm.xlu0 %1488, %v475
        %v1490 = vpop.permute.xlu0 %1489
        %1492 = vset.pattern.permute.xlu0 8
        %1493 = vperm.xlu0 %1492, %v476
        %v1494 = vpop.permute.xlu0 %1493
        %v1496 = vmul.f32 %v1434, %v760
        %v1497 = vmul.f32 %v1438, %v761
        %v1498 = vmul.f32 %v1442, %v762
        %v1499 = vmul.f32 %v1446, %v763
        %v1500 = vmul.f32 %v1450, %v764
        %v1501 = vmul.f32 %v1454, %v765
        %v1502 = vmul.f32 %v1458, %v766
        %v1503 = vmul.f32 %v1462, %v767
        %v1504 = vmul.f32 %v1466, %v768
        %v1505 = vmul.f32 %v1470, %v769
        %v1506 = vmul.f32 %v1474, %v770
        %v1507 = vmul.f32 %v1478, %v771
        %v1508 = vmul.f32 %v1482, %v772
        %v1509 = vmul.f32 %v1486, %v773
        %v1510 = vmul.f32 %v1490, %v774
        %v1511 = vmul.f32 %v1494, %v775
        %1512 = vset.pattern.permute.xlu0 9
        %1513 = vperm.xlu0 %1512, %v461
        %v1514 = vpop.permute.xlu0 %1513
        %1516 = vset.pattern.permute.xlu0 9
        %1517 = vperm.xlu0 %1516, %v462
        %v1518 = vpop.permute.xlu0 %1517
        %1520 = vset.pattern.permute.xlu0 9
        %1521 = vperm.xlu0 %1520, %v463
        %v1522 = vpop.permute.xlu0 %1521
        %1524 = vset.pattern.permute.xlu0 9
        %1525 = vperm.xlu0 %1524, %v464
        %v1526 = vpop.permute.xlu0 %1525
        %1528 = vset.pattern.permute.xlu0 9
        %1529 = vperm.xlu0 %1528, %v465
        %v1530 = vpop.permute.xlu0 %1529
        %1532 = vset.pattern.permute.xlu0 9
        %1533 = vperm.xlu0 %1532, %v466
        %v1534 = vpop.permute.xlu0 %1533
        %1536 = vset.pattern.permute.xlu0 9
        %1537 = vperm.xlu0 %1536, %v467
        %v1538 = vpop.permute.xlu0 %1537
        %1540 = vset.pattern.permute.xlu0 9
        %1541 = vperm.xlu0 %1540, %v468
        %v1542 = vpop.permute.xlu0 %1541
        %1544 = vset.pattern.permute.xlu0 9
        %1545 = vperm.xlu0 %1544, %v469
        %v1546 = vpop.permute.xlu0 %1545
        %1548 = vset.pattern.permute.xlu0 9
        %1549 = vperm.xlu0 %1548, %v470
        %v1550 = vpop.permute.xlu0 %1549
        %1552 = vset.pattern.permute.xlu0 9
        %1553 = vperm.xlu0 %1552, %v471
        %v1554 = vpop.permute.xlu0 %1553
        %1556 = vset.pattern.permute.xlu0 9
        %1557 = vperm.xlu0 %1556, %v472
        %v1558 = vpop.permute.xlu0 %1557
        %1560 = vset.pattern.permute.xlu0 9
        %1561 = vperm.xlu0 %1560, %v473
        %v1562 = vpop.permute.xlu0 %1561
        %1564 = vset.pattern.permute.xlu0 9
        %1565 = vperm.xlu0 %1564, %v474
        %v1566 = vpop.permute.xlu0 %1565
        %1568 = vset.pattern.permute.xlu0 9
        %1569 = vperm.xlu0 %1568, %v475
        %v1570 = vpop.permute.xlu0 %1569
        %1572 = vset.pattern.permute.xlu0 9
        %1573 = vperm.xlu0 %1572, %v476
        %v1574 = vpop.permute.xlu0 %1573
        %v1576 = vmul.f32 %v1514, %v760
        %v1577 = vmul.f32 %v1518, %v761
        %v1578 = vmul.f32 %v1522, %v762
        %v1579 = vmul.f32 %v1526, %v763
        %v1580 = vmul.f32 %v1530, %v764
        %v1581 = vmul.f32 %v1534, %v765
        %v1582 = vmul.f32 %v1538, %v766
        %v1583 = vmul.f32 %v1542, %v767
        %v1584 = vmul.f32 %v1546, %v768
        %v1585 = vmul.f32 %v1550, %v769
        %v1586 = vmul.f32 %v1554, %v770
        %v1587 = vmul.f32 %v1558, %v771
        %v1588 = vmul.f32 %v1562, %v772
        %v1589 = vmul.f32 %v1566, %v773
        %v1590 = vmul.f32 %v1570, %v774
        %v1591 = vmul.f32 %v1574, %v775
        %1592 = vset.pattern.permute.xlu0 10
        %1593 = vperm.xlu0 %1592, %v461
        %v1594 = vpop.permute.xlu0 %1593
        %1596 = vset.pattern.permute.xlu0 10
        %1597 = vperm.xlu0 %1596, %v462
        %v1598 = vpop.permute.xlu0 %1597
        %1600 = vset.pattern.permute.xlu0 10
        %1601 = vperm.xlu0 %1600, %v463
        %v1602 = vpop.permute.xlu0 %1601
        %1604 = vset.pattern.permute.xlu0 10
        %1605 = vperm.xlu0 %1604, %v464
        %v1606 = vpop.permute.xlu0 %1605
        %1608 = vset.pattern.permute.xlu0 10
        %1609 = vperm.xlu0 %1608, %v465
        %v1610 = vpop.permute.xlu0 %1609
        %1612 = vset.pattern.permute.xlu0 10
        %1613 = vperm.xlu0 %1612, %v466
        %v1614 = vpop.permute.xlu0 %1613
        %1616 = vset.pattern.permute.xlu0 10
        %1617 = vperm.xlu0 %1616, %v467
        %v1618 = vpop.permute.xlu0 %1617
        %1620 = vset.pattern.permute.xlu0 10
        %1621 = vperm.xlu0 %1620, %v468
        %v1622 = vpop.permute.xlu0 %1621
        %1624 = vset.pattern.permute.xlu0 10
        %1625 = vperm.xlu0 %1624, %v469
        %v1626 = vpop.permute.xlu0 %1625
        %1628 = vset.pattern.permute.xlu0 10
        %1629 = vperm.xlu0 %1628, %v470
        %v1630 = vpop.permute.xlu0 %1629
        %1632 = vset.pattern.permute.xlu0 10
        %1633 = vperm.xlu0 %1632, %v471
        %v1634 = vpop.permute.xlu0 %1633
        %1636 = vset.pattern.permute.xlu0 10
        %1637 = vperm.xlu0 %1636, %v472
        %v1638 = vpop.permute.xlu0 %1637
        %1640 = vset.pattern.permute.xlu0 10
        %1641 = vperm.xlu0 %1640, %v473
        %v1642 = vpop.permute.xlu0 %1641
        %1644 = vset.pattern.permute.xlu0 10
        %1645 = vperm.xlu0 %1644, %v474
        %v1646 = vpop.permute.xlu0 %1645
        %1648 = vset.pattern.permute.xlu0 10
        %1649 = vperm.xlu0 %1648, %v475
        %v1650 = vpop.permute.xlu0 %1649
        %1652 = vset.pattern.permute.xlu0 10
        %1653 = vperm.xlu0 %1652, %v476
        %v1654 = vpop.permute.xlu0 %1653
        %v1656 = vmul.f32 %v1594, %v760
        %v1657 = vmul.f32 %v1598, %v761
        %v1658 = vmul.f32 %v1602, %v762
        %v1659 = vmul.f32 %v1606, %v763
        %v1660 = vmul.f32 %v1610, %v764
        %v1661 = vmul.f32 %v1614, %v765
        %v1662 = vmul.f32 %v1618, %v766
        %v1663 = vmul.f32 %v1622, %v767
        %v1664 = vmul.f32 %v1626, %v768
        %v1665 = vmul.f32 %v1630, %v769
        %v1666 = vmul.f32 %v1634, %v770
        %v1667 = vmul.f32 %v1638, %v771
        %v1668 = vmul.f32 %v1642, %v772
        %v1669 = vmul.f32 %v1646, %v773
        %v1670 = vmul.f32 %v1650, %v774
        %v1671 = vmul.f32 %v1654, %v775
        %1672 = vset.pattern.permute.xlu0 11
        %1673 = vperm.xlu0 %1672, %v461
        %v1674 = vpop.permute.xlu0 %1673
        %1676 = vset.pattern.permute.xlu0 11
        %1677 = vperm.xlu0 %1676, %v462
        %v1678 = vpop.permute.xlu0 %1677
        %1680 = vset.pattern.permute.xlu0 11
        %1681 = vperm.xlu0 %1680, %v463
        %v1682 = vpop.permute.xlu0 %1681
        %1684 = vset.pattern.permute.xlu0 11
        %1685 = vperm.xlu0 %1684, %v464
        %v1686 = vpop.permute.xlu0 %1685
        %1688 = vset.pattern.permute.xlu0 11
        %1689 = vperm.xlu0 %1688, %v465
        %v1690 = vpop.permute.xlu0 %1689
        %1692 = vset.pattern.permute.xlu0 11
        %1693 = vperm.xlu0 %1692, %v466
        %v1694 = vpop.permute.xlu0 %1693
        %1696 = vset.pattern.permute.xlu0 11
        %1697 = vperm.xlu0 %1696, %v467
        %v1698 = vpop.permute.xlu0 %1697
        %1700 = vset.pattern.permute.xlu0 11
        %1701 = vperm.xlu0 %1700, %v468
        %v1702 = vpop.permute.xlu0 %1701
        %1704 = vset.pattern.permute.xlu0 11
        %1705 = vperm.xlu0 %1704, %v469
        %v1706 = vpop.permute.xlu0 %1705
        %1708 = vset.pattern.permute.xlu0 11
        %1709 = vperm.xlu0 %1708, %v470
        %v1710 = vpop.permute.xlu0 %1709
        %1712 = vset.pattern.permute.xlu0 11
        %1713 = vperm.xlu0 %1712, %v471
        %v1714 = vpop.permute.xlu0 %1713
        %1716 = vset.pattern.permute.xlu0 11
        %1717 = vperm.xlu0 %1716, %v472
        %v1718 = vpop.permute.xlu0 %1717
        %1720 = vset.pattern.permute.xlu0 11
        %1721 = vperm.xlu0 %1720, %v473
        %v1722 = vpop.permute.xlu0 %1721
        %1724 = vset.pattern.permute.xlu0 11
        %1725 = vperm.xlu0 %1724, %v474
        %v1726 = vpop.permute.xlu0 %1725
        %1728 = vset.pattern.permute.xlu0 11
        %1729 = vperm.xlu0 %1728, %v475
        %v1730 = vpop.permute.xlu0 %1729
        %1732 = vset.pattern.permute.xlu0 11
        %1733 = vperm.xlu0 %1732, %v476
        %v1734 = vpop.permute.xlu0 %1733
        %v1736 = vmul.f32 %v1674, %v760
        %v1737 = vmul.f32 %v1678, %v761
        %v1738 = vmul.f32 %v1682, %v762
        %v1739 = vmul.f32 %v1686, %v763
        %v1740 = vmul.f32 %v1690, %v764
        %v1741 = vmul.f32 %v1694, %v765
        %v1742 = vmul.f32 %v1698, %v766
        %v1743 = vmul.f32 %v1702, %v767
        %v1744 = vmul.f32 %v1706, %v768
        %v1745 = vmul.f32 %v1710, %v769
        %v1746 = vmul.f32 %v1714, %v770
        %v1747 = vmul.f32 %v1718, %v771
        %v1748 = vmul.f32 %v1722, %v772
        %v1749 = vmul.f32 %v1726, %v773
        %v1750 = vmul.f32 %v1730, %v774
        %v1751 = vmul.f32 %v1734, %v775
        %1752 = vset.pattern.permute.xlu0 12
        %1753 = vperm.xlu0 %1752, %v461
        %v1754 = vpop.permute.xlu0 %1753
        %1756 = vset.pattern.permute.xlu0 12
        %1757 = vperm.xlu0 %1756, %v462
        %v1758 = vpop.permute.xlu0 %1757
        %1760 = vset.pattern.permute.xlu0 12
        %1761 = vperm.xlu0 %1760, %v463
        %v1762 = vpop.permute.xlu0 %1761
        %1764 = vset.pattern.permute.xlu0 12
        %1765 = vperm.xlu0 %1764, %v464
        %v1766 = vpop.permute.xlu0 %1765
        %1768 = vset.pattern.permute.xlu0 12
        %1769 = vperm.xlu0 %1768, %v465
        %v1770 = vpop.permute.xlu0 %1769
        %1772 = vset.pattern.permute.xlu0 12
        %1773 = vperm.xlu0 %1772, %v466
        %v1774 = vpop.permute.xlu0 %1773
        %1776 = vset.pattern.permute.xlu0 12
        %1777 = vperm.xlu0 %1776, %v467
        %v1778 = vpop.permute.xlu0 %1777
        %1780 = vset.pattern.permute.xlu0 12
        %1781 = vperm.xlu0 %1780, %v468
        %v1782 = vpop.permute.xlu0 %1781
        %1784 = vset.pattern.permute.xlu0 12
        %1785 = vperm.xlu0 %1784, %v469
        %v1786 = vpop.permute.xlu0 %1785
        %1788 = vset.pattern.permute.xlu0 12
        %1789 = vperm.xlu0 %1788, %v470
        %v1790 = vpop.permute.xlu0 %1789
        %1792 = vset.pattern.permute.xlu0 12
        %1793 = vperm.xlu0 %1792, %v471
        %v1794 = vpop.permute.xlu0 %1793
        %1796 = vset.pattern.permute.xlu0 12
        %1797 = vperm.xlu0 %1796, %v472
        %v1798 = vpop.permute.xlu0 %1797
        %1800 = vset.pattern.permute.xlu0 12
        %1801 = vperm.xlu0 %1800, %v473
        %v1802 = vpop.permute.xlu0 %1801
        %1804 = vset.pattern.permute.xlu0 12
        %1805 = vperm.xlu0 %1804, %v474
        %v1806 = vpop.permute.xlu0 %1805
        %1808 = vset.pattern.permute.xlu0 12
        %1809 = vperm.xlu0 %1808, %v475
        %v1810 = vpop.permute.xlu0 %1809
        %1812 = vset.pattern.permute.xlu0 12
        %1813 = vperm.xlu0 %1812, %v476
        %v1814 = vpop.permute.xlu0 %1813
        %v1816 = vmul.f32 %v1754, %v760
        %v1817 = vmul.f32 %v1758, %v761
        %v1818 = vmul.f32 %v1762, %v762
        %v1819 = vmul.f32 %v1766, %v763
        %v1820 = vmul.f32 %v1770, %v764
        %v1821 = vmul.f32 %v1774, %v765
        %v1822 = vmul.f32 %v1778, %v766
        %v1823 = vmul.f32 %v1782, %v767
        %v1824 = vmul.f32 %v1786, %v768
        %v1825 = vmul.f32 %v1790, %v769
        %v1826 = vmul.f32 %v1794, %v770
        %v1827 = vmul.f32 %v1798, %v771
        %v1828 = vmul.f32 %v1802, %v772
        %v1829 = vmul.f32 %v1806, %v773
        %v1830 = vmul.f32 %v1810, %v774
        %v1831 = vmul.f32 %v1814, %v775
        %1832 = vset.pattern.permute.xlu0 13
        %1833 = vperm.xlu0 %1832, %v461
        %v1834 = vpop.permute.xlu0 %1833
        %1836 = vset.pattern.permute.xlu0 13
        %1837 = vperm.xlu0 %1836, %v462
        %v1838 = vpop.permute.xlu0 %1837
        %1840 = vset.pattern.permute.xlu0 13
        %1841 = vperm.xlu0 %1840, %v463
        %v1842 = vpop.permute.xlu0 %1841
        %1844 = vset.pattern.permute.xlu0 13
        %1845 = vperm.xlu0 %1844, %v464
        %v1846 = vpop.permute.xlu0 %1845
        %1848 = vset.pattern.permute.xlu0 13
        %1849 = vperm.xlu0 %1848, %v465
        %v1850 = vpop.permute.xlu0 %1849
        %1852 = vset.pattern.permute.xlu0 13
        %1853 = vperm.xlu0 %1852, %v466
        %v1854 = vpop.permute.xlu0 %1853
        %1856 = vset.pattern.permute.xlu0 13
        %1857 = vperm.xlu0 %1856, %v467
        %v1858 = vpop.permute.xlu0 %1857
        %1860 = vset.pattern.permute.xlu0 13
        %1861 = vperm.xlu0 %1860, %v468
        %v1862 = vpop.permute.xlu0 %1861
        %1864 = vset.pattern.permute.xlu0 13
        %1865 = vperm.xlu0 %1864, %v469
        %v1866 = vpop.permute.xlu0 %1865
        %1868 = vset.pattern.permute.xlu0 13
        %1869 = vperm.xlu0 %1868, %v470
        %v1870 = vpop.permute.xlu0 %1869
        %1872 = vset.pattern.permute.xlu0 13
        %1873 = vperm.xlu0 %1872, %v471
        %v1874 = vpop.permute.xlu0 %1873
        %1876 = vset.pattern.permute.xlu0 13
        %1877 = vperm.xlu0 %1876, %v472
        %v1878 = vpop.permute.xlu0 %1877
        %1880 = vset.pattern.permute.xlu0 13
        %1881 = vperm.xlu0 %1880, %v473
        %v1882 = vpop.permute.xlu0 %1881
        %1884 = vset.pattern.permute.xlu0 13
        %1885 = vperm.xlu0 %1884, %v474
        %v1886 = vpop.permute.xlu0 %1885
        %1888 = vset.pattern.permute.xlu0 13
        %1889 = vperm.xlu0 %1888, %v475
        %v1890 = vpop.permute.xlu0 %1889
        %1892 = vset.pattern.permute.xlu0 13
        %1893 = vperm.xlu0 %1892, %v476
        %v1894 = vpop.permute.xlu0 %1893
        %v1896 = vmul.f32 %v1834, %v760
        %v1897 = vmul.f32 %v1838, %v761
        %v1898 = vmul.f32 %v1842, %v762
        %v1899 = vmul.f32 %v1846, %v763
        %v1900 = vmul.f32 %v1850, %v764
        %v1901 = vmul.f32 %v1854, %v765
        %v1902 = vmul.f32 %v1858, %v766
        %v1903 = vmul.f32 %v1862, %v767
        %v1904 = vmul.f32 %v1866, %v768
        %v1905 = vmul.f32 %v1870, %v769
        %v1906 = vmul.f32 %v1874, %v770
        %v1907 = vmul.f32 %v1878, %v771
        %v1908 = vmul.f32 %v1882, %v772
        %v1909 = vmul.f32 %v1886, %v773
        %v1910 = vmul.f32 %v1890, %v774
        %v1911 = vmul.f32 %v1894, %v775
        %1912 = vset.pattern.permute.xlu0 14
        %1913 = vperm.xlu0 %1912, %v461
        %v1914 = vpop.permute.xlu0 %1913
        %1916 = vset.pattern.permute.xlu0 14
        %1917 = vperm.xlu0 %1916, %v462
        %v1918 = vpop.permute.xlu0 %1917
        %1920 = vset.pattern.permute.xlu0 14
        %1921 = vperm.xlu0 %1920, %v463
        %v1922 = vpop.permute.xlu0 %1921
        %1924 = vset.pattern.permute.xlu0 14
        %1925 = vperm.xlu0 %1924, %v464
        %v1926 = vpop.permute.xlu0 %1925
        %1928 = vset.pattern.permute.xlu0 14
        %1929 = vperm.xlu0 %1928, %v465
        %v1930 = vpop.permute.xlu0 %1929
        %1932 = vset.pattern.permute.xlu0 14
        %1933 = vperm.xlu0 %1932, %v466
        %v1934 = vpop.permute.xlu0 %1933
        %1936 = vset.pattern.permute.xlu0 14
        %1937 = vperm.xlu0 %1936, %v467
        %v1938 = vpop.permute.xlu0 %1937
        %1940 = vset.pattern.permute.xlu0 14
        %1941 = vperm.xlu0 %1940, %v468
        %v1942 = vpop.permute.xlu0 %1941
        %1944 = vset.pattern.permute.xlu0 14
        %1945 = vperm.xlu0 %1944, %v469
        %v1946 = vpop.permute.xlu0 %1945
        %1948 = vset.pattern.permute.xlu0 14
        %1949 = vperm.xlu0 %1948, %v470
        %v1950 = vpop.permute.xlu0 %1949
        %1952 = vset.pattern.permute.xlu0 14
        %1953 = vperm.xlu0 %1952, %v471
        %v1954 = vpop.permute.xlu0 %1953
        %1956 = vset.pattern.permute.xlu0 14
        %1957 = vperm.xlu0 %1956, %v472
        %v1958 = vpop.permute.xlu0 %1957
        %1960 = vset.pattern.permute.xlu0 14
        %1961 = vperm.xlu0 %1960, %v473
        %v1962 = vpop.permute.xlu0 %1961
        %1964 = vset.pattern.permute.xlu0 14
        %1965 = vperm.xlu0 %1964, %v474
        %v1966 = vpop.permute.xlu0 %1965
        %1968 = vset.pattern.permute.xlu0 14
        %1969 = vperm.xlu0 %1968, %v475
        %v1970 = vpop.permute.xlu0 %1969
        %1972 = vset.pattern.permute.xlu0 14
        %1973 = vperm.xlu0 %1972, %v476
        %v1974 = vpop.permute.xlu0 %1973
        %v1976 = vmul.f32 %v1914, %v760
        %v1977 = vmul.f32 %v1918, %v761
        %v1978 = vmul.f32 %v1922, %v762
        %v1979 = vmul.f32 %v1926, %v763
        %v1980 = vmul.f32 %v1930, %v764
        %v1981 = vmul.f32 %v1934, %v765
        %v1982 = vmul.f32 %v1938, %v766
        %v1983 = vmul.f32 %v1942, %v767
        %v1984 = vmul.f32 %v1946, %v768
        %v1985 = vmul.f32 %v1950, %v769
        %v1986 = vmul.f32 %v1954, %v770
        %v1987 = vmul.f32 %v1958, %v771
        %v1988 = vmul.f32 %v1962, %v772
        %v1989 = vmul.f32 %v1966, %v773
        %v1990 = vmul.f32 %v1970, %v774
        %v1991 = vmul.f32 %v1974, %v775
        %1992 = vset.pattern.permute.xlu0 15
        %1993 = vperm.xlu0 %1992, %v461
        %v1994 = vpop.permute.xlu0 %1993
        %1996 = vset.pattern.permute.xlu0 15
        %1997 = vperm.xlu0 %1996, %v462
        %v1998 = vpop.permute.xlu0 %1997
        %2000 = vset.pattern.permute.xlu0 15
        %2001 = vperm.xlu0 %2000, %v463
        %v2002 = vpop.permute.xlu0 %2001
        %2004 = vset.pattern.permute.xlu0 15
        %2005 = vperm.xlu0 %2004, %v464
        %v2006 = vpop.permute.xlu0 %2005
        %2008 = vset.pattern.permute.xlu0 15
        %2009 = vperm.xlu0 %2008, %v465
        %v2010 = vpop.permute.xlu0 %2009
        %2012 = vset.pattern.permute.xlu0 15
        %2013 = vperm.xlu0 %2012, %v466
        %v2014 = vpop.permute.xlu0 %2013
        %2016 = vset.pattern.permute.xlu0 15
        %2017 = vperm.xlu0 %2016, %v467
        %v2018 = vpop.permute.xlu0 %2017
        %2020 = vset.pattern.permute.xlu0 15
        %2021 = vperm.xlu0 %2020, %v468
        %v2022 = vpop.permute.xlu0 %2021
        %2024 = vset.pattern.permute.xlu0 15
        %2025 = vperm.xlu0 %2024, %v469
        %v2026 = vpop.permute.xlu0 %2025
        %2028 = vset.pattern.permute.xlu0 15
        %2029 = vperm.xlu0 %2028, %v470
        %v2030 = vpop.permute.xlu0 %2029
        %2032 = vset.pattern.permute.xlu0 15
        %2033 = vperm.xlu0 %2032, %v471
        %v2034 = vpop.permute.xlu0 %2033
        %2036 = vset.pattern.permute.xlu0 15
        %2037 = vperm.xlu0 %2036, %v472
        %v2038 = vpop.permute.xlu0 %2037
        %2040 = vset.pattern.permute.xlu0 15
        %2041 = vperm.xlu0 %2040, %v473
        %v2042 = vpop.permute.xlu0 %2041
        %2044 = vset.pattern.permute.xlu0 15
        %2045 = vperm.xlu0 %2044, %v474
        %v2046 = vpop.permute.xlu0 %2045
        %2048 = vset.pattern.permute.xlu0 15
        %2049 = vperm.xlu0 %2048, %v475
        %v2050 = vpop.permute.xlu0 %2049
        %2052 = vset.pattern.permute.xlu0 15
        %2053 = vperm.xlu0 %2052, %v476
        %v2054 = vpop.permute.xlu0 %2053
        %v2056 = vmul.f32 %v1994, %v760
        %v2057 = vmul.f32 %v1998, %v761
        %v2058 = vmul.f32 %v2002, %v762
        %v2059 = vmul.f32 %v2006, %v763
        %v2060 = vmul.f32 %v2010, %v764
        %v2061 = vmul.f32 %v2014, %v765
        %v2062 = vmul.f32 %v2018, %v766
        %v2063 = vmul.f32 %v2022, %v767
        %v2064 = vmul.f32 %v2026, %v768
        %v2065 = vmul.f32 %v2030, %v769
        %v2066 = vmul.f32 %v2034, %v770
        %v2067 = vmul.f32 %v2038, %v771
        %v2068 = vmul.f32 %v2042, %v772
        %v2069 = vmul.f32 %v2046, %v773
        %v2070 = vmul.f32 %v2050, %v774
        %v2071 = vmul.f32 %v2054, %v775
        %2088 = vrot.lane.b32.xlu0 %v936, 16
        %v2089 = vpop.permute.xlu0 %2088
        %2090 = vrot.lane.b32.xlu0 %v937, 16
        %v2091 = vpop.permute.xlu0 %2090
        %2092 = vrot.lane.b32.xlu0 %v938, 16
        %v2093 = vpop.permute.xlu0 %2092
        %2094 = vrot.lane.b32.xlu0 %v939, 16
        %v2095 = vpop.permute.xlu0 %2094
        %2096 = vrot.lane.b32.xlu0 %v940, 16
        %v2097 = vpop.permute.xlu0 %2096
        %2098 = vrot.lane.b32.xlu0 %v941, 16
        %v2099 = vpop.permute.xlu0 %2098
        %2100 = vrot.lane.b32.xlu0 %v942, 16
        %v2101 = vpop.permute.xlu0 %2100
        %2102 = vrot.lane.b32.xlu0 %v943, 16
        %v2103 = vpop.permute.xlu0 %2102
        %2104 = vrot.lane.b32.xlu0 %v944, 16
        %v2105 = vpop.permute.xlu0 %2104
        %2106 = vrot.lane.b32.xlu0 %v945, 16
        %v2107 = vpop.permute.xlu0 %2106
        %2108 = vrot.lane.b32.xlu0 %v946, 16
        %v2109 = vpop.permute.xlu0 %2108
        %2110 = vrot.lane.b32.xlu0 %v947, 16
        %v2111 = vpop.permute.xlu0 %2110
        %2112 = vrot.lane.b32.xlu0 %v948, 16
        %v2113 = vpop.permute.xlu0 %2112
        %2114 = vrot.lane.b32.xlu0 %v949, 16
        %v2115 = vpop.permute.xlu0 %2114
        %2116 = vrot.lane.b32.xlu0 %v950, 16
        %v2117 = vpop.permute.xlu0 %2116
        %2118 = vrot.lane.b32.xlu0 %v951, 16
        %v2119 = vpop.permute.xlu0 %2118
        %2152 = vrot.lane.b32.xlu0 %v1016, 32
        %v2153 = vpop.permute.xlu0 %2152
        %2154 = vrot.lane.b32.xlu0 %v1017, 32
        %v2155 = vpop.permute.xlu0 %2154
        %2156 = vrot.lane.b32.xlu0 %v1018, 32
        %v2157 = vpop.permute.xlu0 %2156
        %2158 = vrot.lane.b32.xlu0 %v1019, 32
        %v2159 = vpop.permute.xlu0 %2158
        %2160 = vrot.lane.b32.xlu0 %v1020, 32
        %v2161 = vpop.permute.xlu0 %2160
        %2162 = vrot.lane.b32.xlu0 %v1021, 32
        %v2163 = vpop.permute.xlu0 %2162
        %2164 = vrot.lane.b32.xlu0 %v1022, 32
        %v2165 = vpop.permute.xlu0 %2164
        %2166 = vrot.lane.b32.xlu0 %v1023, 32
        %v2167 = vpop.permute.xlu0 %2166
        %2168 = vrot.lane.b32.xlu0 %v1024, 32
        %v2169 = vpop.permute.xlu0 %2168
        %2170 = vrot.lane.b32.xlu0 %v1025, 32
        %v2171 = vpop.permute.xlu0 %2170
        %2172 = vrot.lane.b32.xlu0 %v1026, 32
        %v2173 = vpop.permute.xlu0 %2172
        %2174 = vrot.lane.b32.xlu0 %v1027, 32
        %v2175 = vpop.permute.xlu0 %2174
        %2176 = vrot.lane.b32.xlu0 %v1028, 32
        %v2177 = vpop.permute.xlu0 %2176
        %2178 = vrot.lane.b32.xlu0 %v1029, 32
        %v2179 = vpop.permute.xlu0 %2178
        %2180 = vrot.lane.b32.xlu0 %v1030, 32
        %v2181 = vpop.permute.xlu0 %2180
        %2182 = vrot.lane.b32.xlu0 %v1031, 32
        %v2183 = vpop.permute.xlu0 %2182
        %2216 = vrot.lane.b32.xlu0 %v1096, 48
        %v2217 = vpop.permute.xlu0 %2216
        %2218 = vrot.lane.b32.xlu0 %v1097, 48
        %v2219 = vpop.permute.xlu0 %2218
        %2220 = vrot.lane.b32.xlu0 %v1098, 48
        %v2221 = vpop.permute.xlu0 %2220
        %2222 = vrot.lane.b32.xlu0 %v1099, 48
        %v2223 = vpop.permute.xlu0 %2222
        %2224 = vrot.lane.b32.xlu0 %v1100, 48
        %v2225 = vpop.permute.xlu0 %2224
        %2226 = vrot.lane.b32.xlu0 %v1101, 48
        %v2227 = vpop.permute.xlu0 %2226
        %2228 = vrot.lane.b32.xlu0 %v1102, 48
        %v2229 = vpop.permute.xlu0 %2228
        %2230 = vrot.lane.b32.xlu0 %v1103, 48
        %v2231 = vpop.permute.xlu0 %2230
        %2232 = vrot.lane.b32.xlu0 %v1104, 48
        %v2233 = vpop.permute.xlu0 %2232
        %2234 = vrot.lane.b32.xlu0 %v1105, 48
        %v2235 = vpop.permute.xlu0 %2234
        %2236 = vrot.lane.b32.xlu0 %v1106, 48
        %v2237 = vpop.permute.xlu0 %2236
        %2238 = vrot.lane.b32.xlu0 %v1107, 48
        %v2239 = vpop.permute.xlu0 %2238
        %2240 = vrot.lane.b32.xlu0 %v1108, 48
        %v2241 = vpop.permute.xlu0 %2240
        %2242 = vrot.lane.b32.xlu0 %v1109, 48
        %v2243 = vpop.permute.xlu0 %2242
        %2244 = vrot.lane.b32.xlu0 %v1110, 48
        %v2245 = vpop.permute.xlu0 %2244
        %2246 = vrot.lane.b32.xlu0 %v1111, 48
        %v2247 = vpop.permute.xlu0 %2246
        %2280 = vrot.lane.b32.xlu0 %v1176, 64
        %v2281 = vpop.permute.xlu0 %2280
        %2282 = vrot.lane.b32.xlu0 %v1177, 64
        %v2283 = vpop.permute.xlu0 %2282
        %2284 = vrot.lane.b32.xlu0 %v1178, 64
        %v2285 = vpop.permute.xlu0 %2284
        %2286 = vrot.lane.b32.xlu0 %v1179, 64
        %v2287 = vpop.permute.xlu0 %2286
        %2288 = vrot.lane.b32.xlu0 %v1180, 64
        %v2289 = vpop.permute.xlu0 %2288
        %2290 = vrot.lane.b32.xlu0 %v1181, 64
        %v2291 = vpop.permute.xlu0 %2290
        %2292 = vrot.lane.b32.xlu0 %v1182, 64
        %v2293 = vpop.permute.xlu0 %2292
        %2294 = vrot.lane.b32.xlu0 %v1183, 64
        %v2295 = vpop.permute.xlu0 %2294
        %2296 = vrot.lane.b32.xlu0 %v1184, 64
        %v2297 = vpop.permute.xlu0 %2296
        %2298 = vrot.lane.b32.xlu0 %v1185, 64
        %v2299 = vpop.permute.xlu0 %2298
        %2300 = vrot.lane.b32.xlu0 %v1186, 64
        %v2301 = vpop.permute.xlu0 %2300
        %2302 = vrot.lane.b32.xlu0 %v1187, 64
        %v2303 = vpop.permute.xlu0 %2302
        %2304 = vrot.lane.b32.xlu0 %v1188, 64
        %v2305 = vpop.permute.xlu0 %2304
        %2306 = vrot.lane.b32.xlu0 %v1189, 64
        %v2307 = vpop.permute.xlu0 %2306
        %2308 = vrot.lane.b32.xlu0 %v1190, 64
        %v2309 = vpop.permute.xlu0 %2308
        %2310 = vrot.lane.b32.xlu0 %v1191, 64
        %v2311 = vpop.permute.xlu0 %2310
        %2344 = vrot.lane.b32.xlu0 %v1256, 80
        %v2345 = vpop.permute.xlu0 %2344
        %2346 = vrot.lane.b32.xlu0 %v1257, 80
        %v2347 = vpop.permute.xlu0 %2346
        %2348 = vrot.lane.b32.xlu0 %v1258, 80
        %v2349 = vpop.permute.xlu0 %2348
        %2350 = vrot.lane.b32.xlu0 %v1259, 80
        %v2351 = vpop.permute.xlu0 %2350
        %2352 = vrot.lane.b32.xlu0 %v1260, 80
        %v2353 = vpop.permute.xlu0 %2352
        %2354 = vrot.lane.b32.xlu0 %v1261, 80
        %v2355 = vpop.permute.xlu0 %2354
        %2356 = vrot.lane.b32.xlu0 %v1262, 80
        %v2357 = vpop.permute.xlu0 %2356
        %2358 = vrot.lane.b32.xlu0 %v1263, 80
        %v2359 = vpop.permute.xlu0 %2358
        %2360 = vrot.lane.b32.xlu0 %v1264, 80
        %v2361 = vpop.permute.xlu0 %2360
        %2362 = vrot.lane.b32.xlu0 %v1265, 80
        %v2363 = vpop.permute.xlu0 %2362
        %2364 = vrot.lane.b32.xlu0 %v1266, 80
        %v2365 = vpop.permute.xlu0 %2364
        %2366 = vrot.lane.b32.xlu0 %v1267, 80
        %v2367 = vpop.permute.xlu0 %2366
        %2368 = vrot.lane.b32.xlu0 %v1268, 80
        %v2369 = vpop.permute.xlu0 %2368
        %2370 = vrot.lane.b32.xlu0 %v1269, 80
        %v2371 = vpop.permute.xlu0 %2370
        %2372 = vrot.lane.b32.xlu0 %v1270, 80
        %v2373 = vpop.permute.xlu0 %2372
        %2374 = vrot.lane.b32.xlu0 %v1271, 80
        %v2375 = vpop.permute.xlu0 %2374
        %2408 = vrot.lane.b32.xlu0 %v1336, 96
        %v2409 = vpop.permute.xlu0 %2408
        %2410 = vrot.lane.b32.xlu0 %v1337, 96
        %v2411 = vpop.permute.xlu0 %2410
        %2412 = vrot.lane.b32.xlu0 %v1338, 96
        %v2413 = vpop.permute.xlu0 %2412
        %2414 = vrot.lane.b32.xlu0 %v1339, 96
        %v2415 = vpop.permute.xlu0 %2414
        %2416 = vrot.lane.b32.xlu0 %v1340, 96
        %v2417 = vpop.permute.xlu0 %2416
        %2418 = vrot.lane.b32.xlu0 %v1341, 96
        %v2419 = vpop.permute.xlu0 %2418
        %2420 = vrot.lane.b32.xlu0 %v1342, 96
        %v2421 = vpop.permute.xlu0 %2420
        %2422 = vrot.lane.b32.xlu0 %v1343, 96
        %v2423 = vpop.permute.xlu0 %2422
        %2424 = vrot.lane.b32.xlu0 %v1344, 96
        %v2425 = vpop.permute.xlu0 %2424
        %2426 = vrot.lane.b32.xlu0 %v1345, 96
        %v2427 = vpop.permute.xlu0 %2426
        %2428 = vrot.lane.b32.xlu0 %v1346, 96
        %v2429 = vpop.permute.xlu0 %2428
        %2430 = vrot.lane.b32.xlu0 %v1347, 96
        %v2431 = vpop.permute.xlu0 %2430
        %2432 = vrot.lane.b32.xlu0 %v1348, 96
        %v2433 = vpop.permute.xlu0 %2432
        %2434 = vrot.lane.b32.xlu0 %v1349, 96
        %v2435 = vpop.permute.xlu0 %2434
        %2436 = vrot.lane.b32.xlu0 %v1350, 96
        %v2437 = vpop.permute.xlu0 %2436
        %2438 = vrot.lane.b32.xlu0 %v1351, 96
        %v2439 = vpop.permute.xlu0 %2438
        %2472 = vrot.lane.b32.xlu0 %v1416, 112
        %v2473 = vpop.permute.xlu0 %2472
        %2474 = vrot.lane.b32.xlu0 %v1417, 112
        %v2475 = vpop.permute.xlu0 %2474
        %2476 = vrot.lane.b32.xlu0 %v1418, 112
        %v2477 = vpop.permute.xlu0 %2476
        %2478 = vrot.lane.b32.xlu0 %v1419, 112
        %v2479 = vpop.permute.xlu0 %2478
        %2480 = vrot.lane.b32.xlu0 %v1420, 112
        %v2481 = vpop.permute.xlu0 %2480
        %2482 = vrot.lane.b32.xlu0 %v1421, 112
        %v2483 = vpop.permute.xlu0 %2482
        %2484 = vrot.lane.b32.xlu0 %v1422, 112
        %v2485 = vpop.permute.xlu0 %2484
        %2486 = vrot.lane.b32.xlu0 %v1423, 112
        %v2487 = vpop.permute.xlu0 %2486
        %2488 = vrot.lane.b32.xlu0 %v1424, 112
        %v2489 = vpop.permute.xlu0 %2488
        %2490 = vrot.lane.b32.xlu0 %v1425, 112
        %v2491 = vpop.permute.xlu0 %2490
        %2492 = vrot.lane.b32.xlu0 %v1426, 112
        %v2493 = vpop.permute.xlu0 %2492
        %2494 = vrot.lane.b32.xlu0 %v1427, 112
        %v2495 = vpop.permute.xlu0 %2494
        %2496 = vrot.lane.b32.xlu0 %v1428, 112
        %v2497 = vpop.permute.xlu0 %2496
        %2498 = vrot.lane.b32.xlu0 %v1429, 112
        %v2499 = vpop.permute.xlu0 %2498
        %2500 = vrot.lane.b32.xlu0 %v1430, 112
        %v2501 = vpop.permute.xlu0 %2500
        %2502 = vrot.lane.b32.xlu0 %v1431, 112
        %v2503 = vpop.permute.xlu0 %2502
        %2536 = vrot.lane.b32.xlu0 %v1576, 16
        %v2537 = vpop.permute.xlu0 %2536
        %2538 = vrot.lane.b32.xlu0 %v1577, 16
        %v2539 = vpop.permute.xlu0 %2538
        %2540 = vrot.lane.b32.xlu0 %v1578, 16
        %v2541 = vpop.permute.xlu0 %2540
        %2542 = vrot.lane.b32.xlu0 %v1579, 16
        %v2543 = vpop.permute.xlu0 %2542
        %2544 = vrot.lane.b32.xlu0 %v1580, 16
        %v2545 = vpop.permute.xlu0 %2544
        %2546 = vrot.lane.b32.xlu0 %v1581, 16
        %v2547 = vpop.permute.xlu0 %2546
        %2548 = vrot.lane.b32.xlu0 %v1582, 16
        %v2549 = vpop.permute.xlu0 %2548
        %2550 = vrot.lane.b32.xlu0 %v1583, 16
        %v2551 = vpop.permute.xlu0 %2550
        %2552 = vrot.lane.b32.xlu0 %v1584, 16
        %v2553 = vpop.permute.xlu0 %2552
        %2554 = vrot.lane.b32.xlu0 %v1585, 16
        %v2555 = vpop.permute.xlu0 %2554
        %2556 = vrot.lane.b32.xlu0 %v1586, 16
        %v2557 = vpop.permute.xlu0 %2556
        %2558 = vrot.lane.b32.xlu0 %v1587, 16
        %v2559 = vpop.permute.xlu0 %2558
        %2560 = vrot.lane.b32.xlu0 %v1588, 16
        %v2561 = vpop.permute.xlu0 %2560
        %2562 = vrot.lane.b32.xlu0 %v1589, 16
        %v2563 = vpop.permute.xlu0 %2562
        %2564 = vrot.lane.b32.xlu0 %v1590, 16
        %v2565 = vpop.permute.xlu0 %2564
        %2566 = vrot.lane.b32.xlu0 %v1591, 16
        %v2567 = vpop.permute.xlu0 %2566
        %2600 = vrot.lane.b32.xlu0 %v1656, 32
        %v2601 = vpop.permute.xlu0 %2600
        %2602 = vrot.lane.b32.xlu0 %v1657, 32
        %v2603 = vpop.permute.xlu0 %2602
        %2604 = vrot.lane.b32.xlu0 %v1658, 32
        %v2605 = vpop.permute.xlu0 %2604
        %2606 = vrot.lane.b32.xlu0 %v1659, 32
        %v2607 = vpop.permute.xlu0 %2606
        %2608 = vrot.lane.b32.xlu0 %v1660, 32
        %v2609 = vpop.permute.xlu0 %2608
        %2610 = vrot.lane.b32.xlu0 %v1661, 32
        %v2611 = vpop.permute.xlu0 %2610
        %2612 = vrot.lane.b32.xlu0 %v1662, 32
        %v2613 = vpop.permute.xlu0 %2612
        %2614 = vrot.lane.b32.xlu0 %v1663, 32
        %v2615 = vpop.permute.xlu0 %2614
        %2616 = vrot.lane.b32.xlu0 %v1664, 32
        %v2617 = vpop.permute.xlu0 %2616
        %2618 = vrot.lane.b32.xlu0 %v1665, 32
        %v2619 = vpop.permute.xlu0 %2618
        %2620 = vrot.lane.b32.xlu0 %v1666, 32
        %v2621 = vpop.permute.xlu0 %2620
        %2622 = vrot.lane.b32.xlu0 %v1667, 32
        %v2623 = vpop.permute.xlu0 %2622
        %2624 = vrot.lane.b32.xlu0 %v1668, 32
        %v2625 = vpop.permute.xlu0 %2624
        %2626 = vrot.lane.b32.xlu0 %v1669, 32
        %v2627 = vpop.permute.xlu0 %2626
        %2628 = vrot.lane.b32.xlu0 %v1670, 32
        %v2629 = vpop.permute.xlu0 %2628
        %2630 = vrot.lane.b32.xlu0 %v1671, 32
        %v2631 = vpop.permute.xlu0 %2630
        %2664 = vrot.lane.b32.xlu0 %v1736, 48
        %v2665 = vpop.permute.xlu0 %2664
        %2666 = vrot.lane.b32.xlu0 %v1737, 48
        %v2667 = vpop.permute.xlu0 %2666
        %2668 = vrot.lane.b32.xlu0 %v1738, 48
        %v2669 = vpop.permute.xlu0 %2668
        %2670 = vrot.lane.b32.xlu0 %v1739, 48
        %v2671 = vpop.permute.xlu0 %2670
        %2672 = vrot.lane.b32.xlu0 %v1740, 48
        %v2673 = vpop.permute.xlu0 %2672
        %2674 = vrot.lane.b32.xlu0 %v1741, 48
        %v2675 = vpop.permute.xlu0 %2674
        %2676 = vrot.lane.b32.xlu0 %v1742, 48
        %v2677 = vpop.permute.xlu0 %2676
        %2678 = vrot.lane.b32.xlu0 %v1743, 48
        %v2679 = vpop.permute.xlu0 %2678
        %2680 = vrot.lane.b32.xlu0 %v1744, 48
        %v2681 = vpop.permute.xlu0 %2680
        %2682 = vrot.lane.b32.xlu0 %v1745, 48
        %v2683 = vpop.permute.xlu0 %2682
        %2684 = vrot.lane.b32.xlu0 %v1746, 48
        %v2685 = vpop.permute.xlu0 %2684
        %2686 = vrot.lane.b32.xlu0 %v1747, 48
        %v2687 = vpop.permute.xlu0 %2686
        %2688 = vrot.lane.b32.xlu0 %v1748, 48
        %v2689 = vpop.permute.xlu0 %2688
        %2690 = vrot.lane.b32.xlu0 %v1749, 48
        %v2691 = vpop.permute.xlu0 %2690
        %2692 = vrot.lane.b32.xlu0 %v1750, 48
        %v2693 = vpop.permute.xlu0 %2692
        %2694 = vrot.lane.b32.xlu0 %v1751, 48
        %v2695 = vpop.permute.xlu0 %2694
        %2728 = vrot.lane.b32.xlu0 %v1816, 64
        %v2729 = vpop.permute.xlu0 %2728
        %2730 = vrot.lane.b32.xlu0 %v1817, 64
        %v2731 = vpop.permute.xlu0 %2730
        %2732 = vrot.lane.b32.xlu0 %v1818, 64
        %v2733 = vpop.permute.xlu0 %2732
        %2734 = vrot.lane.b32.xlu0 %v1819, 64
        %v2735 = vpop.permute.xlu0 %2734
        %2736 = vrot.lane.b32.xlu0 %v1820, 64
        %v2737 = vpop.permute.xlu0 %2736
        %2738 = vrot.lane.b32.xlu0 %v1821, 64
        %v2739 = vpop.permute.xlu0 %2738
        %2740 = vrot.lane.b32.xlu0 %v1822, 64
        %v2741 = vpop.permute.xlu0 %2740
        %2742 = vrot.lane.b32.xlu0 %v1823, 64
        %v2743 = vpop.permute.xlu0 %2742
        %2744 = vrot.lane.b32.xlu0 %v1824, 64
        %v2745 = vpop.permute.xlu0 %2744
        %2746 = vrot.lane.b32.xlu0 %v1825, 64
        %v2747 = vpop.permute.xlu0 %2746
        %2748 = vrot.lane.b32.xlu0 %v1826, 64
        %v2749 = vpop.permute.xlu0 %2748
        %2750 = vrot.lane.b32.xlu0 %v1827, 64
        %v2751 = vpop.permute.xlu0 %2750
        %2752 = vrot.lane.b32.xlu0 %v1828, 64
        %v2753 = vpop.permute.xlu0 %2752
        %2754 = vrot.lane.b32.xlu0 %v1829, 64
        %v2755 = vpop.permute.xlu0 %2754
        %2756 = vrot.lane.b32.xlu0 %v1830, 64
        %v2757 = vpop.permute.xlu0 %2756
        %2758 = vrot.lane.b32.xlu0 %v1831, 64
        %v2759 = vpop.permute.xlu0 %2758
        %2792 = vrot.lane.b32.xlu0 %v1896, 80
        %v2793 = vpop.permute.xlu0 %2792
        %2794 = vrot.lane.b32.xlu0 %v1897, 80
        %v2795 = vpop.permute.xlu0 %2794
        %2796 = vrot.lane.b32.xlu0 %v1898, 80
        %v2797 = vpop.permute.xlu0 %2796
        %2798 = vrot.lane.b32.xlu0 %v1899, 80
        %v2799 = vpop.permute.xlu0 %2798
        %2800 = vrot.lane.b32.xlu0 %v1900, 80
        %v2801 = vpop.permute.xlu0 %2800
        %2802 = vrot.lane.b32.xlu0 %v1901, 80
        %v2803 = vpop.permute.xlu0 %2802
        %2804 = vrot.lane.b32.xlu0 %v1902, 80
        %v2805 = vpop.permute.xlu0 %2804
        %2806 = vrot.lane.b32.xlu0 %v1903, 80
        %v2807 = vpop.permute.xlu0 %2806
        %2808 = vrot.lane.b32.xlu0 %v1904, 80
        %v2809 = vpop.permute.xlu0 %2808
        %2810 = vrot.lane.b32.xlu0 %v1905, 80
        %v2811 = vpop.permute.xlu0 %2810
        %2812 = vrot.lane.b32.xlu0 %v1906, 80
        %v2813 = vpop.permute.xlu0 %2812
        %2814 = vrot.lane.b32.xlu0 %v1907, 80
        %v2815 = vpop.permute.xlu0 %2814
        %2816 = vrot.lane.b32.xlu0 %v1908, 80
        %v2817 = vpop.permute.xlu0 %2816
        %2818 = vrot.lane.b32.xlu0 %v1909, 80
        %v2819 = vpop.permute.xlu0 %2818
        %2820 = vrot.lane.b32.xlu0 %v1910, 80
        %v2821 = vpop.permute.xlu0 %2820
        %2822 = vrot.lane.b32.xlu0 %v1911, 80
        %v2823 = vpop.permute.xlu0 %2822
        %2856 = vrot.lane.b32.xlu0 %v1976, 96
        %v2857 = vpop.permute.xlu0 %2856
        %2858 = vrot.lane.b32.xlu0 %v1977, 96
        %v2859 = vpop.permute.xlu0 %2858
        %2860 = vrot.lane.b32.xlu0 %v1978, 96
        %v2861 = vpop.permute.xlu0 %2860
        %2862 = vrot.lane.b32.xlu0 %v1979, 96
        %v2863 = vpop.permute.xlu0 %2862
        %2864 = vrot.lane.b32.xlu0 %v1980, 96
        %v2865 = vpop.permute.xlu0 %2864
        %2866 = vrot.lane.b32.xlu0 %v1981, 96
        %v2867 = vpop.permute.xlu0 %2866
        %2868 = vrot.lane.b32.xlu0 %v1982, 96
        %v2869 = vpop.permute.xlu0 %2868
        %2870 = vrot.lane.b32.xlu0 %v1983, 96
        %v2871 = vpop.permute.xlu0 %2870
        %2872 = vrot.lane.b32.xlu0 %v1984, 96
        %v2873 = vpop.permute.xlu0 %2872
        %2874 = vrot.lane.b32.xlu0 %v1985, 96
        %v2875 = vpop.permute.xlu0 %2874
        %2876 = vrot.lane.b32.xlu0 %v1986, 96
        %v2877 = vpop.permute.xlu0 %2876
        %2878 = vrot.lane.b32.xlu0 %v1987, 96
        %v2879 = vpop.permute.xlu0 %2878
        %2880 = vrot.lane.b32.xlu0 %v1988, 96
        %v2881 = vpop.permute.xlu0 %2880
        %2882 = vrot.lane.b32.xlu0 %v1989, 96
        %v2883 = vpop.permute.xlu0 %2882
        %2884 = vrot.lane.b32.xlu0 %v1990, 96
        %v2885 = vpop.permute.xlu0 %2884
        %2886 = vrot.lane.b32.xlu0 %v1991, 96
        %v2887 = vpop.permute.xlu0 %2886
        %2920 = vrot.lane.b32.xlu0 %v2056, 112
        %v2921 = vpop.permute.xlu0 %2920
        %2922 = vrot.lane.b32.xlu0 %v2057, 112
        %v2923 = vpop.permute.xlu0 %2922
        %2924 = vrot.lane.b32.xlu0 %v2058, 112
        %v2925 = vpop.permute.xlu0 %2924
        %2926 = vrot.lane.b32.xlu0 %v2059, 112
        %v2927 = vpop.permute.xlu0 %2926
        %2928 = vrot.lane.b32.xlu0 %v2060, 112
        %v2929 = vpop.permute.xlu0 %2928
        %2930 = vrot.lane.b32.xlu0 %v2061, 112
        %v2931 = vpop.permute.xlu0 %2930
        %2932 = vrot.lane.b32.xlu0 %v2062, 112
        %v2933 = vpop.permute.xlu0 %2932
        %2934 = vrot.lane.b32.xlu0 %v2063, 112
        %v2935 = vpop.permute.xlu0 %2934
        %2936 = vrot.lane.b32.xlu0 %v2064, 112
        %v2937 = vpop.permute.xlu0 %2936
        %2938 = vrot.lane.b32.xlu0 %v2065, 112
        %v2939 = vpop.permute.xlu0 %2938
        %2940 = vrot.lane.b32.xlu0 %v2066, 112
        %v2941 = vpop.permute.xlu0 %2940
        %2942 = vrot.lane.b32.xlu0 %v2067, 112
        %v2943 = vpop.permute.xlu0 %2942
        %2944 = vrot.lane.b32.xlu0 %v2068, 112
        %v2945 = vpop.permute.xlu0 %2944
        %2946 = vrot.lane.b32.xlu0 %v2069, 112
        %v2947 = vpop.permute.xlu0 %2946
        %2948 = vrot.lane.b32.xlu0 %v2070, 112
        %v2949 = vpop.permute.xlu0 %2948
        %2950 = vrot.lane.b32.xlu0 %v2071, 112
        %v2951 = vpop.permute.xlu0 %2950
        %vm2968 = vcmask 130048
        %v2969 = vsel %vm2968, %v856, %v2089
        %v2970 = vsel %vm2968, %v857, %v2091
        %v2971 = vsel %vm2968, %v858, %v2093
        %v2972 = vsel %vm2968, %v859, %v2095
        %v2973 = vsel %vm2968, %v860, %v2097
        %v2974 = vsel %vm2968, %v861, %v2099
        %v2975 = vsel %vm2968, %v862, %v2101
        %v2976 = vsel %vm2968, %v863, %v2103
        %v2977 = vsel %vm2968, %v864, %v2105
        %v2978 = vsel %vm2968, %v865, %v2107
        %v2979 = vsel %vm2968, %v866, %v2109
        %v2980 = vsel %vm2968, %v867, %v2111
        %v2981 = vsel %vm2968, %v868, %v2113
        %v2982 = vsel %vm2968, %v869, %v2115
        %v2983 = vsel %vm2968, %v870, %v2117
        %v2984 = vsel %vm2968, %v871, %v2119
        %vm2985 = vcmask 261120
        %v2986 = vsel %vm2985, %v2969, %v2153
        %v2987 = vsel %vm2985, %v2970, %v2155
        %v2988 = vsel %vm2985, %v2971, %v2157
        %v2989 = vsel %vm2985, %v2972, %v2159
        %v2990 = vsel %vm2985, %v2973, %v2161
        %v2991 = vsel %vm2985, %v2974, %v2163
        %v2992 = vsel %vm2985, %v2975, %v2165
        %v2993 = vsel %vm2985, %v2976, %v2167
        %v2994 = vsel %vm2985, %v2977, %v2169
        %v2995 = vsel %vm2985, %v2978, %v2171
        %v2996 = vsel %vm2985, %v2979, %v2173
        %v2997 = vsel %vm2985, %v2980, %v2175
        %v2998 = vsel %vm2985, %v2981, %v2177
        %v2999 = vsel %vm2985, %v2982, %v2179
        %v3000 = vsel %vm2985, %v2983, %v2181
        %v3001 = vsel %vm2985, %v2984, %v2183
        %vm3002 = vcmask 392192
        %v3003 = vsel %vm3002, %v2986, %v2217
        %v3004 = vsel %vm3002, %v2987, %v2219
        %v3005 = vsel %vm3002, %v2988, %v2221
        %v3006 = vsel %vm3002, %v2989, %v2223
        %v3007 = vsel %vm3002, %v2990, %v2225
        %v3008 = vsel %vm3002, %v2991, %v2227
        %v3009 = vsel %vm3002, %v2992, %v2229
        %v3010 = vsel %vm3002, %v2993, %v2231
        %v3011 = vsel %vm3002, %v2994, %v2233
        %v3012 = vsel %vm3002, %v2995, %v2235
        %v3013 = vsel %vm3002, %v2996, %v2237
        %v3014 = vsel %vm3002, %v2997, %v2239
        %v3015 = vsel %vm3002, %v2998, %v2241
        %v3016 = vsel %vm3002, %v2999, %v2243
        %v3017 = vsel %vm3002, %v3000, %v2245
        %v3018 = vsel %vm3002, %v3001, %v2247
        %vm3019 = vcmask 523264
        %v3020 = vsel %vm3019, %v3003, %v2281
        %v3021 = vsel %vm3019, %v3004, %v2283
        %v3022 = vsel %vm3019, %v3005, %v2285
        %v3023 = vsel %vm3019, %v3006, %v2287
        %v3024 = vsel %vm3019, %v3007, %v2289
        %v3025 = vsel %vm3019, %v3008, %v2291
        %v3026 = vsel %vm3019, %v3009, %v2293
        %v3027 = vsel %vm3019, %v3010, %v2295
        %v3028 = vsel %vm3019, %v3011, %v2297
        %v3029 = vsel %vm3019, %v3012, %v2299
        %v3030 = vsel %vm3019, %v3013, %v2301
        %v3031 = vsel %vm3019, %v3014, %v2303
        %v3032 = vsel %vm3019, %v3015, %v2305
        %v3033 = vsel %vm3019, %v3016, %v2307
        %v3034 = vsel %vm3019, %v3017, %v2309
        %v3035 = vsel %vm3019, %v3018, %v2311
        %vm3036 = vcmask 654336
        %v3037 = vsel %vm3036, %v3020, %v2345
        %v3038 = vsel %vm3036, %v3021, %v2347
        %v3039 = vsel %vm3036, %v3022, %v2349
        %v3040 = vsel %vm3036, %v3023, %v2351
        %v3041 = vsel %vm3036, %v3024, %v2353
        %v3042 = vsel %vm3036, %v3025, %v2355
        %v3043 = vsel %vm3036, %v3026, %v2357
        %v3044 = vsel %vm3036, %v3027, %v2359
        %v3045 = vsel %vm3036, %v3028, %v2361
        %v3046 = vsel %vm3036, %v3029, %v2363
        %v3047 = vsel %vm3036, %v3030, %v2365
        %v3048 = vsel %vm3036, %v3031, %v2367
        %v3049 = vsel %vm3036, %v3032, %v2369
        %v3050 = vsel %vm3036, %v3033, %v2371
        %v3051 = vsel %vm3036, %v3034, %v2373
        %v3052 = vsel %vm3036, %v3035, %v2375
        %vm3053 = vcmask 785408
        %v3054 = vsel %vm3053, %v3037, %v2409
        %v3055 = vsel %vm3053, %v3038, %v2411
        %v3056 = vsel %vm3053, %v3039, %v2413
        %v3057 = vsel %vm3053, %v3040, %v2415
        %v3058 = vsel %vm3053, %v3041, %v2417
        %v3059 = vsel %vm3053, %v3042, %v2419
        %v3060 = vsel %vm3053, %v3043, %v2421
        %v3061 = vsel %vm3053, %v3044, %v2423
        %v3062 = vsel %vm3053, %v3045, %v2425
        %v3063 = vsel %vm3053, %v3046, %v2427
        %v3064 = vsel %vm3053, %v3047, %v2429
        %v3065 = vsel %vm3053, %v3048, %v2431
        %v3066 = vsel %vm3053, %v3049, %v2433
        %v3067 = vsel %vm3053, %v3050, %v2435
        %v3068 = vsel %vm3053, %v3051, %v2437
        %v3069 = vsel %vm3053, %v3052, %v2439
        %vm3070 = vcmask 916480
        %v3071 = vsel %vm3070, %v3054, %v2473
        %v3072 = vsel %vm3070, %v3055, %v2475
        %v3073 = vsel %vm3070, %v3056, %v2477
        %v3074 = vsel %vm3070, %v3057, %v2479
        %v3075 = vsel %vm3070, %v3058, %v2481
        %v3076 = vsel %vm3070, %v3059, %v2483
        %v3077 = vsel %vm3070, %v3060, %v2485
        %v3078 = vsel %vm3070, %v3061, %v2487
        %v3079 = vsel %vm3070, %v3062, %v2489
        %v3080 = vsel %vm3070, %v3063, %v2491
        %v3081 = vsel %vm3070, %v3064, %v2493
        %v3082 = vsel %vm3070, %v3065, %v2495
        %v3083 = vsel %vm3070, %v3066, %v2497
        %v3084 = vsel %vm3070, %v3067, %v2499
        %v3085 = vsel %vm3070, %v3068, %v2501
        %v3086 = vsel %vm3070, %v3069, %v2503
        %v3087 = vsel %vm2968, %v1496, %v2537
        %v3088 = vsel %vm2968, %v1497, %v2539
        %v3089 = vsel %vm2968, %v1498, %v2541
        %v3090 = vsel %vm2968, %v1499, %v2543
        %v3091 = vsel %vm2968, %v1500, %v2545
        %v3092 = vsel %vm2968, %v1501, %v2547
        %v3093 = vsel %vm2968, %v1502, %v2549
        %v3094 = vsel %vm2968, %v1503, %v2551
        %v3095 = vsel %vm2968, %v1504, %v2553
        %v3096 = vsel %vm2968, %v1505, %v2555
        %v3097 = vsel %vm2968, %v1506, %v2557
        %v3098 = vsel %vm2968, %v1507, %v2559
        %v3099 = vsel %vm2968, %v1508, %v2561
        %v3100 = vsel %vm2968, %v1509, %v2563
        %v3101 = vsel %vm2968, %v1510, %v2565
        %v3102 = vsel %vm2968, %v1511, %v2567
        %v3103 = vsel %vm2985, %v3087, %v2601
        %v3104 = vsel %vm2985, %v3088, %v2603
        %v3105 = vsel %vm2985, %v3089, %v2605
        %v3106 = vsel %vm2985, %v3090, %v2607
        %v3107 = vsel %vm2985, %v3091, %v2609
        %v3108 = vsel %vm2985, %v3092, %v2611
        %v3109 = vsel %vm2985, %v3093, %v2613
        %v3110 = vsel %vm2985, %v3094, %v2615
        %v3111 = vsel %vm2985, %v3095, %v2617
        %v3112 = vsel %vm2985, %v3096, %v2619
        %v3113 = vsel %vm2985, %v3097, %v2621
        %v3114 = vsel %vm2985, %v3098, %v2623
        %v3115 = vsel %vm2985, %v3099, %v2625
        %v3116 = vsel %vm2985, %v3100, %v2627
        %v3117 = vsel %vm2985, %v3101, %v2629
        %v3118 = vsel %vm2985, %v3102, %v2631
        %v3119 = vsel %vm3002, %v3103, %v2665
        %v3120 = vsel %vm3002, %v3104, %v2667
        %v3121 = vsel %vm3002, %v3105, %v2669
        %v3122 = vsel %vm3002, %v3106, %v2671
        %v3123 = vsel %vm3002, %v3107, %v2673
        %v3124 = vsel %vm3002, %v3108, %v2675
        %v3125 = vsel %vm3002, %v3109, %v2677
        %v3126 = vsel %vm3002, %v3110, %v2679
        %v3127 = vsel %vm3002, %v3111, %v2681
        %v3128 = vsel %vm3002, %v3112, %v2683
        %v3129 = vsel %vm3002, %v3113, %v2685
        %v3130 = vsel %vm3002, %v3114, %v2687
        %v3131 = vsel %vm3002, %v3115, %v2689
        %v3132 = vsel %vm3002, %v3116, %v2691
        %v3133 = vsel %vm3002, %v3117, %v2693
        %v3134 = vsel %vm3002, %v3118, %v2695
        %v3135 = vsel %vm3019, %v3119, %v2729
        %v3136 = vsel %vm3019, %v3120, %v2731
        %v3137 = vsel %vm3019, %v3121, %v2733
        %v3138 = vsel %vm3019, %v3122, %v2735
        %v3139 = vsel %vm3019, %v3123, %v2737
        %v3140 = vsel %vm3019, %v3124, %v2739
        %v3141 = vsel %vm3019, %v3125, %v2741
        %v3142 = vsel %vm3019, %v3126, %v2743
        %v3143 = vsel %vm3019, %v3127, %v2745
        %v3144 = vsel %vm3019, %v3128, %v2747
        %v3145 = vsel %vm3019, %v3129, %v2749
        %v3146 = vsel %vm3019, %v3130, %v2751
        %v3147 = vsel %vm3019, %v3131, %v2753
        %v3148 = vsel %vm3019, %v3132, %v2755
        %v3149 = vsel %vm3019, %v3133, %v2757
        %v3150 = vsel %vm3019, %v3134, %v2759
        %v3151 = vsel %vm3036, %v3135, %v2793
        %v3152 = vsel %vm3036, %v3136, %v2795
        %v3153 = vsel %vm3036, %v3137, %v2797
        %v3154 = vsel %vm3036, %v3138, %v2799
        %v3155 = vsel %vm3036, %v3139, %v2801
        %v3156 = vsel %vm3036, %v3140, %v2803
        %v3157 = vsel %vm3036, %v3141, %v2805
        %v3158 = vsel %vm3036, %v3142, %v2807
        %v3159 = vsel %vm3036, %v3143, %v2809
        %v3160 = vsel %vm3036, %v3144, %v2811
        %v3161 = vsel %vm3036, %v3145, %v2813
        %v3162 = vsel %vm3036, %v3146, %v2815
        %v3163 = vsel %vm3036, %v3147, %v2817
        %v3164 = vsel %vm3036, %v3148, %v2819
        %v3165 = vsel %vm3036, %v3149, %v2821
        %v3166 = vsel %vm3036, %v3150, %v2823
        %v3167 = vsel %vm3053, %v3151, %v2857
        %v3168 = vsel %vm3053, %v3152, %v2859
        %v3169 = vsel %vm3053, %v3153, %v2861
        %v3170 = vsel %vm3053, %v3154, %v2863
        %v3171 = vsel %vm3053, %v3155, %v2865
        %v3172 = vsel %vm3053, %v3156, %v2867
        %v3173 = vsel %vm3053, %v3157, %v2869
        %v3174 = vsel %vm3053, %v3158, %v2871
        %v3175 = vsel %vm3053, %v3159, %v2873
        %v3176 = vsel %vm3053, %v3160, %v2875
        %v3177 = vsel %vm3053, %v3161, %v2877
        %v3178 = vsel %vm3053, %v3162, %v2879
        %v3179 = vsel %vm3053, %v3163, %v2881
        %v3180 = vsel %vm3053, %v3164, %v2883
        %v3181 = vsel %vm3053, %v3165, %v2885
        %v3182 = vsel %vm3053, %v3166, %v2887
        %v3183 = vsel %vm3070, %v3167, %v2921
        %v3184 = vsel %vm3070, %v3168, %v2923
        %v3185 = vsel %vm3070, %v3169, %v2925
        %v3186 = vsel %vm3070, %v3170, %v2927
        %v3187 = vsel %vm3070, %v3171, %v2929
        %v3188 = vsel %vm3070, %v3172, %v2931
        %v3189 = vsel %vm3070, %v3173, %v2933
        %v3190 = vsel %vm3070, %v3174, %v2935
        %v3191 = vsel %vm3070, %v3175, %v2937
        %v3192 = vsel %vm3070, %v3176, %v2939
        %v3193 = vsel %vm3070, %v3177, %v2941
        %v3194 = vsel %vm3070, %v3178, %v2943
        %v3195 = vsel %vm3070, %v3179, %v2945
        %v3196 = vsel %vm3070, %v3180, %v2947
        %v3197 = vsel %vm3070, %v3181, %v2949
        %v3198 = vsel %vm3070, %v3182, %v2951
        %v3199 = vpack.c.bf16 %v3072, %v3071
        %v3200 = vpack.c.bf16 %v3184, %v3183
        %v3201 = vpack.c.bf16 %v3074, %v3073
        %v3202 = vpack.c.bf16 %v3186, %v3185
        %v3203 = vpack.c.bf16 %v3076, %v3075
        %v3204 = vpack.c.bf16 %v3188, %v3187
        %v3205 = vpack.c.bf16 %v3078, %v3077
        %v3206 = vpack.c.bf16 %v3190, %v3189
        %v3207 = vpack.c.bf16 %v3080, %v3079
        %v3208 = vpack.c.bf16 %v3192, %v3191
        %v3209 = vpack.c.bf16 %v3082, %v3081
        %v3210 = vpack.c.bf16 %v3194, %v3193
        %v3211 = vpack.c.bf16 %v3084, %v3083
        %v3212 = vpack.c.bf16 %v3196, %v3195
        %v3213 = vpack.c.bf16 %v3086, %v3085
        %v3214 = vpack.c.bf16 %v3198, %v3197
        %v3279 = vunpack.c.l.b16 %v495
        %v3280 = vunpack.c.h.b16 %v495
        %v3281 = vunpack.c.l.b16 %v496
        %v3282 = vunpack.c.l.b16 %v497
        %v3283 = vunpack.c.h.b16 %v497
        %v3284 = vunpack.c.l.b16 %v498
        %v3285 = vunpack.c.l.b16 %v499
        %v3286 = vunpack.c.h.b16 %v499
        %v3287 = vunpack.c.l.b16 %v500
        %v3288 = vunpack.c.l.b16 %v501
        %v3289 = vunpack.c.h.b16 %v501
        %v3290 = vunpack.c.l.b16 %v502
        %v3291 = vunpack.c.l.b16 %v503
        %v3292 = vunpack.c.h.b16 %v503
        %v3293 = vunpack.c.l.b16 %v504
        %v3294 = vunpack.c.l.b16 %v505
        %v3295 = vunpack.c.h.b16 %v505
        %v3296 = vunpack.c.l.b16 %v506
        %v3297 = vunpack.c.l.b16 %v507
        %v3298 = vunpack.c.h.b16 %v507
        %v3299 = vunpack.c.l.b16 %v508
        %v3300 = vunpack.c.l.b16 %v509
        %v3301 = vunpack.c.h.b16 %v509
        %v3302 = vunpack.c.l.b16 %v510
        %v3303 = vunpack.c.l.b16 %v511
        %v3304 = vunpack.c.h.b16 %v511
        %v3305 = vunpack.c.l.b16 %v512
        %v3306 = vunpack.c.l.b16 %v513
        %v3307 = vunpack.c.h.b16 %v513
        %v3308 = vunpack.c.l.b16 %v514
        %v3309 = vunpack.c.l.b16 %v515
        %v3310 = vunpack.c.h.b16 %v515
        %v3311 = vunpack.c.l.b16 %v516
        %v3312 = vunpack.c.l.b16 %v517
        %v3313 = vunpack.c.h.b16 %v517
        %v3314 = vunpack.c.l.b16 %v518
        %v3315 = vunpack.c.l.b16 %v519
        %v3316 = vunpack.c.h.b16 %v519
        %v3317 = vunpack.c.l.b16 %v520
        %v3318 = vunpack.c.l.b16 %v521
        %v3319 = vunpack.c.h.b16 %v521
        %v3320 = vunpack.c.l.b16 %v522
        %v3321 = vunpack.c.l.b16 %v523
        %v3322 = vunpack.c.h.b16 %v523
        %v3323 = vunpack.c.l.b16 %v524
        %v3324 = vunpack.c.l.b16 %v525
        %v3325 = vunpack.c.h.b16 %v525
        %v3326 = vunpack.c.l.b16 %v526
        %v3327 = vunpack.c.l.b16 %v527
        %v3328 = vunpack.c.h.b16 %v527
        %v3329 = vunpack.c.l.b16 %v528
        %v3330 = vunpack.c.l.b16 %v529
        %v3331 = vunpack.c.h.b16 %v529
        %v3332 = vunpack.c.l.b16 %v530
        %v3333 = vunpack.c.l.b16 %v531
        %v3334 = vunpack.c.h.b16 %v531
        %v3335 = vunpack.c.l.b16 %v532
        %v3336 = vunpack.c.l.b16 %v533
        %v3337 = vunpack.c.h.b16 %v533
        %v3338 = vunpack.c.l.b16 %v534
        %v3339 = vunpack.c.l.b16 %v535
        %v3340 = vunpack.c.h.b16 %v535
        %v3341 = vunpack.c.l.b16 %v536
        %v3342 = vunpack.c.l.b16 %v537
        %v3343 = vunpack.c.h.b16 %v537
        %v3344 = vunpack.c.l.b16 %v538
        %v3345 = vunpack.c.l.b16 %v539
        %v3346 = vunpack.c.h.b16 %v539
        %v3347 = vunpack.c.l.b16 %v540
        %v3348 = vunpack.c.l.b16 %v541
        %v3349 = vunpack.c.h.b16 %v541
        %v3350 = vunpack.c.l.b16 %v542
        %v3351 = vunpack.c.l.b16 %v543
        %v3352 = vunpack.c.h.b16 %v543
        %v3353 = vunpack.c.l.b16 %v544
        %v3354 = vunpack.c.l.b16 %v545
        %v3355 = vunpack.c.h.b16 %v545
        %v3356 = vunpack.c.l.b16 %v546
        %v3357 = vunpack.c.l.b16 %v547
        %v3358 = vunpack.c.h.b16 %v547
        %v3359 = vunpack.c.l.b16 %v548
        %v3360 = vunpack.c.l.b16 %v549
        %v3361 = vunpack.c.h.b16 %v549
        %v3362 = vunpack.c.l.b16 %v550
        %v3363 = vunpack.c.l.b16 %v551
        %v3364 = vunpack.c.h.b16 %v551
        %v3365 = vunpack.c.l.b16 %v552
        %v3366 = vunpack.c.l.b16 %v553
        %v3367 = vunpack.c.h.b16 %v553
        %v3368 = vunpack.c.l.b16 %v554
        %v3369 = vunpack.c.l.b16 %v555
        %v3370 = vunpack.c.h.b16 %v555
        %v3371 = vunpack.c.l.b16 %v556
        %v3372 = vunpack.c.l.b16 %v557
        %v3373 = vunpack.c.h.b16 %v557
        %v3374 = vunpack.c.l.b16 %v558
        %v3375 = vpack.c.b16 %v3282, %v3279
        %v3376 = vpack.c.b16 %v3283, %v3280
        %v3377 = vpack.c.b16 %v3284, %v3281
        %v3378 = vpack.c.b16 %v3288, %v3285
        %v3379 = vpack.c.b16 %v3289, %v3286
        %v3380 = vpack.c.b16 %v3290, %v3287
        %v3381 = vpack.c.b16 %v3294, %v3291
        %v3382 = vpack.c.b16 %v3295, %v3292
        %v3383 = vpack.c.b16 %v3296, %v3293
        %v3384 = vpack.c.b16 %v3300, %v3297
        %v3385 = vpack.c.b16 %v3301, %v3298
        %v3386 = vpack.c.b16 %v3302, %v3299
        %v3387 = vpack.c.b16 %v3306, %v3303
        %v3388 = vpack.c.b16 %v3307, %v3304
        %v3389 = vpack.c.b16 %v3308, %v3305
        %v3390 = vpack.c.b16 %v3312, %v3309
        %v3391 = vpack.c.b16 %v3313, %v3310
        %v3392 = vpack.c.b16 %v3314, %v3311
        %v3393 = vpack.c.b16 %v3318, %v3315
        %v3394 = vpack.c.b16 %v3319, %v3316
        %v3395 = vpack.c.b16 %v3320, %v3317
        %v3396 = vpack.c.b16 %v3324, %v3321
        %v3397 = vpack.c.b16 %v3325, %v3322
        %v3398 = vpack.c.b16 %v3326, %v3323
        %v3399 = vpack.c.b16 %v3330, %v3327
        %v3400 = vpack.c.b16 %v3331, %v3328
        %v3401 = vpack.c.b16 %v3332, %v3329
        %v3402 = vpack.c.b16 %v3336, %v3333
        %v3403 = vpack.c.b16 %v3337, %v3334
        %v3404 = vpack.c.b16 %v3338, %v3335
        %v3405 = vpack.c.b16 %v3342, %v3339
        %v3406 = vpack.c.b16 %v3343, %v3340
        %v3407 = vpack.c.b16 %v3344, %v3341
        %v3408 = vpack.c.b16 %v3348, %v3345
        %v3409 = vpack.c.b16 %v3349, %v3346
        %v3410 = vpack.c.b16 %v3350, %v3347
        %v3411 = vpack.c.b16 %v3354, %v3351
        %v3412 = vpack.c.b16 %v3355, %v3352
        %v3413 = vpack.c.b16 %v3356, %v3353
        %v3414 = vpack.c.b16 %v3360, %v3357
        %v3415 = vpack.c.b16 %v3361, %v3358
        %v3416 = vpack.c.b16 %v3362, %v3359
        %v3417 = vpack.c.b16 %v3366, %v3363
        %v3418 = vpack.c.b16 %v3367, %v3364
        %v3419 = vpack.c.b16 %v3368, %v3365
        %v3420 = vpack.c.b16 %v3372, %v3369
        %v3421 = vpack.c.b16 %v3373, %v3370
        %v3422 = vpack.c.b16 %v3374, %v3371
        %3471 = vmatprep.subr.bf16.mxu0 %v3397
        %3472 = vmatpush1.bf16.msra.mxu0 %v3396
        %3473 = vmatprep.subr.bf16.mxu0 %v3394
        %3474 = vmatpush1.bf16.msra.mxu0 %v3393
        %3475 = vmatprep.subr.bf16.mxu0 %v3391
        %3476 = vmatpush1.bf16.msra.mxu0 %v3390
        %3477 = vmatprep.subr.bf16.mxu0 %v3388
        %3478 = vmatpush1.bf16.msra.mxu0 %v3387
        %3479 = vmatprep.subr.bf16.mxu0 %v3385
        %3480 = vmatpush1.bf16.msra.mxu0 %v3384
        %3481 = vmatprep.subr.bf16.mxu0 %v3382
        %3482 = vmatpush1.bf16.msra.mxu0 %v3381
        %3483 = vmatprep.subr.bf16.mxu0 %v3379
        %3484 = vmatpush1.bf16.msra.mxu0 %v3378
        %3485 = vmatprep.subr.bf16.mxu0 %v3376
        %3486 = vmatpush1.bf16.msra.mxu0 %v3375
        %3487 = vmatprep.subr.bf16.mxu0 %v3421
        %3488 = vmatpush2.bf16.msra.mxu0 %v3420
        %3489 = vmatprep.subr.bf16.mxu0 %v3418
        %3490 = vmatpush2.bf16.msra.mxu0 %v3417
        %3491 = vmatprep.subr.bf16.mxu0 %v3415
        %3492 = vmatpush2.bf16.msra.mxu0 %v3414
        %3493 = vmatprep.subr.bf16.mxu0 %v3412
        %3494 = vmatpush2.bf16.msra.mxu0 %v3411
        %3495 = vmatprep.subr.bf16.mxu0 %v3409
        %3496 = vmatpush2.bf16.msra.mxu0 %v3408
        %3497 = vmatprep.subr.bf16.mxu0 %v3406
        %3498 = vmatpush2.bf16.msra.mxu0 %v3405
        %3499 = vmatprep.subr.bf16.mxu0 %v3403
        %3500 = vmatpush2.bf16.msra.mxu0 %v3402
        %3501 = vmatprep.subr.bf16.mxu0 %v3400
        %3502 = vmatpush2.bf16.msra.mxu0 %v3399
        %3503 = vmatprep.mubr.bf16.mxu0 %v3200
        %3504 = vmatmul.mubr.bf16.gmra.mxu0 %v3199
        %v3505 = vpop.f32.mrf.mxu0
        %v3506 = vadd.f32 0.0, %v3505
        %v3507 = vpop.f32.mrf.mxu0
        %v3508 = vadd.f32 0.0, %v3507
        %v3509 = vpop.f32.mrf.mxu0
        %v3510 = vadd.f32 0.0, %v3509
        %v3511 = vpop.f32.mrf.mxu0
        %v3512 = vadd.f32 0.0, %v3511
        %3513 = vmatprep.mubr.bf16.mxu0 %v3202
        %3514 = vmatmul.mubr.bf16.gmra.mxu0 %v3201
        %v3515 = vpop.f32.mrf.mxu0
        %v3516 = vadd.f32 0.0, %v3515
        %v3517 = vpop.f32.mrf.mxu0
        %v3518 = vadd.f32 0.0, %v3517
        %v3519 = vpop.f32.mrf.mxu0
        %v3520 = vadd.f32 0.0, %v3519
        %v3521 = vpop.f32.mrf.mxu0
        %v3522 = vadd.f32 0.0, %v3521
        %3523 = vmatprep.mubr.bf16.mxu0 %v3204
        %3524 = vmatmul.mubr.bf16.gmra.mxu0 %v3203
        %v3525 = vpop.f32.mrf.mxu0
        %v3526 = vadd.f32 0.0, %v3525
        %v3527 = vpop.f32.mrf.mxu0
        %v3528 = vadd.f32 0.0, %v3527
        %v3529 = vpop.f32.mrf.mxu0
        %v3530 = vadd.f32 0.0, %v3529
        %v3531 = vpop.f32.mrf.mxu0
        %v3532 = vadd.f32 0.0, %v3531
        %3533 = vmatprep.mubr.bf16.mxu0 %v3206
        %3534 = vmatmul.mubr.bf16.gmra.mxu0 %v3205
        %v3535 = vpop.f32.mrf.mxu0
        %v3536 = vadd.f32 0.0, %v3535
        %v3537 = vpop.f32.mrf.mxu0
        %v3538 = vadd.f32 0.0, %v3537
        %v3539 = vpop.f32.mrf.mxu0
        %v3540 = vadd.f32 0.0, %v3539
        %v3541 = vpop.f32.mrf.mxu0
        %v3542 = vadd.f32 0.0, %v3541
        %3543 = vmatprep.mubr.bf16.mxu0 %v3208
        %3544 = vmatmul.mubr.bf16.gmra.mxu0 %v3207
        %v3545 = vpop.f32.mrf.mxu0
        %v3546 = vadd.f32 0.0, %v3545
        %v3547 = vpop.f32.mrf.mxu0
        %v3548 = vadd.f32 0.0, %v3547
        %v3549 = vpop.f32.mrf.mxu0
        %v3550 = vadd.f32 0.0, %v3549
        %v3551 = vpop.f32.mrf.mxu0
        %v3552 = vadd.f32 0.0, %v3551
        %3553 = vmatprep.mubr.bf16.mxu0 %v3210
        %3554 = vmatmul.mubr.bf16.gmra.mxu0 %v3209
        %v3555 = vpop.f32.mrf.mxu0
        %v3556 = vadd.f32 0.0, %v3555
        %v3557 = vpop.f32.mrf.mxu0
        %v3558 = vadd.f32 0.0, %v3557
        %v3559 = vpop.f32.mrf.mxu0
        %v3560 = vadd.f32 0.0, %v3559
        %v3561 = vpop.f32.mrf.mxu0
        %v3562 = vadd.f32 0.0, %v3561
        %3563 = vmatprep.mubr.bf16.mxu0 %v3212
        %3564 = vmatmul.mubr.bf16.gmra.mxu0 %v3211
        %v3565 = vpop.f32.mrf.mxu0
        %v3566 = vadd.f32 0.0, %v3565
        %v3567 = vpop.f32.mrf.mxu0
        %v3568 = vadd.f32 0.0, %v3567
        %v3569 = vpop.f32.mrf.mxu0
        %v3570 = vadd.f32 0.0, %v3569
        %v3571 = vpop.f32.mrf.mxu0
        %v3572 = vadd.f32 0.0, %v3571
        %3573 = vmatprep.mubr.bf16.mxu0 %v3214
        %3574 = vmatmul.mubr.bf16.gmra.mxu0 %v3213
        %v3575 = vpop.f32.mrf.mxu0
        %v3576 = vadd.f32 0.0, %v3575
        %v3577 = vpop.f32.mrf.mxu0
        %v3578 = vadd.f32 0.0, %v3577
        %v3579 = vpop.f32.mrf.mxu0
        %v3580 = vadd.f32 0.0, %v3579
        %v3581 = vpop.f32.mrf.mxu0
        %v3582 = vadd.f32 0.0, %v3581
        %3583 = vdwg.mxu0
        %3584 = vmatprep.subr.bf16.mxu0 0
        %3585 = vmatpush1.bf16.msra.mxu0 %v3398
        %3586 = vmatprep.subr.bf16.mxu0 0
        %3587 = vmatpush1.bf16.msra.mxu0 %v3395
        %3588 = vmatprep.subr.bf16.mxu0 0
        %3589 = vmatpush1.bf16.msra.mxu0 %v3392
        %3590 = vmatprep.subr.bf16.mxu0 0
        %3591 = vmatpush1.bf16.msra.mxu0 %v3389
        %3592 = vmatprep.subr.bf16.mxu0 0
        %3593 = vmatpush1.bf16.msra.mxu0 %v3386
        %3594 = vmatprep.subr.bf16.mxu0 0
        %3595 = vmatpush1.bf16.msra.mxu0 %v3383
        %3596 = vmatprep.subr.bf16.mxu0 0
        %3597 = vmatpush1.bf16.msra.mxu0 %v3380
        %3598 = vmatprep.subr.bf16.mxu0 0
        %3599 = vmatpush1.bf16.msra.mxu0 %v3377
        %3600 = vmatprep.subr.bf16.mxu0 0
        %3601 = vmatpush2.bf16.msra.mxu0 %v3422
        %3602 = vmatprep.subr.bf16.mxu0 0
        %3603 = vmatpush2.bf16.msra.mxu0 %v3419
        %3604 = vmatprep.subr.bf16.mxu0 0
        %3605 = vmatpush2.bf16.msra.mxu0 %v3416
        %3606 = vmatprep.subr.bf16.mxu0 0
        %3607 = vmatpush2.bf16.msra.mxu0 %v3413
        %3608 = vmatprep.subr.bf16.mxu0 0
        %3609 = vmatpush2.bf16.msra.mxu0 %v3410
        %3610 = vmatprep.subr.bf16.mxu0 0
        %3611 = vmatpush2.bf16.msra.mxu0 %v3407
        %3612 = vmatprep.subr.bf16.mxu0 0
        %3613 = vmatpush2.bf16.msra.mxu0 %v3404
        %3614 = vmatprep.subr.bf16.mxu0 0
        %3615 = vmatpush2.bf16.msra.mxu0 %v3401
        %3616 = vmatprep.mubr.bf16.mxu0 %v3200
        %3617 = vmatmul.mubr.bf16.gmra.mxu0 %v3199
        %v3618 = vpop.f32.mrf.mxu0
        %v3619 = vadd.f32 0.0, %v3618
        %v3620 = vpop.f32.mrf.mxu0
        %v3621 = vpop.f32.mrf.mxu0
        %v3622 = vadd.f32 0.0, %v3621
        %v3623 = vpop.f32.mrf.mxu0
        %3624 = vmatprep.mubr.bf16.mxu0 %v3202
        %3625 = vmatmul.mubr.bf16.gmra.mxu0 %v3201
        %v3626 = vpop.f32.mrf.mxu0
        %v3627 = vadd.f32 0.0, %v3626
        %v3628 = vpop.f32.mrf.mxu0
        %v3629 = vpop.f32.mrf.mxu0
        %v3630 = vadd.f32 0.0, %v3629
        %v3631 = vpop.f32.mrf.mxu0
        %3632 = vmatprep.mubr.bf16.mxu0 %v3204
        %3633 = vmatmul.mubr.bf16.gmra.mxu0 %v3203
        %v3634 = vpop.f32.mrf.mxu0
        %v3635 = vadd.f32 0.0, %v3634
        %v3636 = vpop.f32.mrf.mxu0
        %v3637 = vpop.f32.mrf.mxu0
        %v3638 = vadd.f32 0.0, %v3637
        %v3639 = vpop.f32.mrf.mxu0
        %3640 = vmatprep.mubr.bf16.mxu0 %v3206
        %3641 = vmatmul.mubr.bf16.gmra.mxu0 %v3205
        %v3642 = vpop.f32.mrf.mxu0
        %v3643 = vadd.f32 0.0, %v3642
        %v3644 = vpop.f32.mrf.mxu0
        %v3645 = vpop.f32.mrf.mxu0
        %v3646 = vadd.f32 0.0, %v3645
        %v3647 = vpop.f32.mrf.mxu0
        %3648 = vmatprep.mubr.bf16.mxu0 %v3208
        %3649 = vmatmul.mubr.bf16.gmra.mxu0 %v3207
        %v3650 = vpop.f32.mrf.mxu0
        %v3651 = vadd.f32 0.0, %v3650
        %v3652 = vpop.f32.mrf.mxu0
        %v3653 = vpop.f32.mrf.mxu0
        %v3654 = vadd.f32 0.0, %v3653
        %v3655 = vpop.f32.mrf.mxu0
        %3656 = vmatprep.mubr.bf16.mxu0 %v3210
        %3657 = vmatmul.mubr.bf16.gmra.mxu0 %v3209
        %v3658 = vpop.f32.mrf.mxu0
        %v3659 = vadd.f32 0.0, %v3658
        %v3660 = vpop.f32.mrf.mxu0
        %v3661 = vpop.f32.mrf.mxu0
        %v3662 = vadd.f32 0.0, %v3661
        %v3663 = vpop.f32.mrf.mxu0
        %3664 = vmatprep.mubr.bf16.mxu0 %v3212
        %3665 = vmatmul.mubr.bf16.gmra.mxu0 %v3211
        %v3666 = vpop.f32.mrf.mxu0
        %v3667 = vadd.f32 0.0, %v3666
        %v3668 = vpop.f32.mrf.mxu0
        %v3669 = vpop.f32.mrf.mxu0
        %v3670 = vadd.f32 0.0, %v3669
        %v3671 = vpop.f32.mrf.mxu0
        %3672 = vmatprep.mubr.bf16.mxu0 %v3214
        %3673 = vmatmul.mubr.bf16.gmra.mxu0 %v3213
        %v3674 = vpop.f32.mrf.mxu0
        %v3675 = vadd.f32 0.0, %v3674
        %v3676 = vpop.f32.mrf.mxu0
        %v3677 = vpop.f32.mrf.mxu0
        %v3678 = vadd.f32 0.0, %v3677
        %v3679 = vpop.f32.mrf.mxu0
        %3680 = vdwg.mxu0
        %v3681 = vpack.c.bf16 %v3510, %v3506
        %v3682 = vpack.c.bf16 %v3512, %v3508
        %v3683 = vpack.c.bf16 %v3622, %v3619
        %v3684 = vpack.c.bf16 %v3520, %v3516
        %v3685 = vpack.c.bf16 %v3522, %v3518
        %v3686 = vpack.c.bf16 %v3630, %v3627
        %v3687 = vpack.c.bf16 %v3530, %v3526
        %v3688 = vpack.c.bf16 %v3532, %v3528
        %v3689 = vpack.c.bf16 %v3638, %v3635
        %v3690 = vpack.c.bf16 %v3540, %v3536
        %v3691 = vpack.c.bf16 %v3542, %v3538
        %v3692 = vpack.c.bf16 %v3646, %v3643
        %v3693 = vpack.c.bf16 %v3550, %v3546
        %v3694 = vpack.c.bf16 %v3552, %v3548
        %v3695 = vpack.c.bf16 %v3654, %v3651
        %v3696 = vpack.c.bf16 %v3560, %v3556
        %v3697 = vpack.c.bf16 %v3562, %v3558
        %v3698 = vpack.c.bf16 %v3662, %v3659
        %v3699 = vpack.c.bf16 %v3570, %v3566
        %v3700 = vpack.c.bf16 %v3572, %v3568
        %v3701 = vpack.c.bf16 %v3670, %v3667
        %v3702 = vpack.c.bf16 %v3580, %v3576
        %v3703 = vpack.c.bf16 %v3582, %v3578
        %v3704 = vpack.c.bf16 %v3678, %v3675
        %3705 = vmatprep.subr.bf16.mxu0 %v3703
        %3706 = vmatpush1.bf16.msra.mxu0 %v3702
        %3707 = vmatprep.subr.bf16.mxu0 %v3700
        %3708 = vmatpush1.bf16.msra.mxu0 %v3699
        %3709 = vmatprep.subr.bf16.mxu0 %v3697
        %3710 = vmatpush1.bf16.msra.mxu0 %v3696
        %3711 = vmatprep.subr.bf16.mxu0 %v3694
        %3712 = vmatpush1.bf16.msra.mxu0 %v3693
        %3713 = vmatprep.subr.bf16.mxu0 %v3691
        %3714 = vmatpush1.bf16.msra.mxu0 %v3690
        %3715 = vmatprep.subr.bf16.mxu0 %v3688
        %3716 = vmatpush1.bf16.msra.mxu0 %v3687
        %3717 = vmatprep.subr.bf16.mxu0 %v3685
        %3718 = vmatpush1.bf16.msra.mxu0 %v3684
        %3719 = vmatprep.subr.bf16.mxu0 %v3682
        %3720 = vmatpush1.bf16.msra.mxu0 %v3681
        %3721 = vmatprep.subr.bf16.mxu0 0
        %3722 = vmatpush2.bf16.msra.mxu0 0
        %3723 = vmatprep.subr.bf16.mxu0 0
        %3724 = vmatpush2.bf16.msra.mxu0 0
        %3725 = vmatprep.subr.bf16.mxu0 0
        %3726 = vmatpush2.bf16.msra.mxu0 0
        %3727 = vmatprep.subr.bf16.mxu0 0
        %3728 = vmatpush2.bf16.msra.mxu0 0
        %3729 = vmatprep.subr.bf16.mxu0 0
        %3730 = vmatpush2.bf16.msra.mxu0 0
        %3731 = vmatprep.subr.bf16.mxu0 0
        %3732 = vmatpush2.bf16.msra.mxu0 0
        %3733 = vmatprep.subr.bf16.mxu0 0
        %3734 = vmatpush2.bf16.msra.mxu0 0
        %3735 = vmatprep.subr.bf16.mxu0 0
        %3736 = vmatpush2.bf16.msra.mxu0 0
        %3737 = vmatprep.mubr.bf16.mxu0 0
        %3738 = vmatmul.mubr.bf16.gmra.mxu0 %v647
        %v3739 = vpop.f32.mrf.mxu0
        %v3740 = vadd.f32 0.0, %v3739
        %v3741 = vpop.f32.mrf.mxu0
        %v3742 = vadd.f32 0.0, %v3741
        %v3743 = vpop.f32.mrf.mxu0
        %v3744 = vadd.f32 0.0, %v3743
        %v3745 = vpop.f32.mrf.mxu0
        %v3746 = vadd.f32 0.0, %v3745
        %3747 = vmatprep.mubr.bf16.mxu0 0
        %3748 = vmatmul.mubr.bf16.gmra.mxu0 %v648
        %v3749 = vpop.f32.mrf.mxu0
        %v3750 = vadd.f32 0.0, %v3749
        %v3751 = vpop.f32.mrf.mxu0
        %v3752 = vadd.f32 0.0, %v3751
        %v3753 = vpop.f32.mrf.mxu0
        %v3754 = vadd.f32 0.0, %v3753
        %v3755 = vpop.f32.mrf.mxu0
        %v3756 = vadd.f32 0.0, %v3755
        %3757 = vmatprep.mubr.bf16.mxu0 0
        %3758 = vmatmul.mubr.bf16.gmra.mxu0 %v649
        %v3759 = vpop.f32.mrf.mxu0
        %v3760 = vadd.f32 0.0, %v3759
        %v3761 = vpop.f32.mrf.mxu0
        %v3762 = vadd.f32 0.0, %v3761
        %v3763 = vpop.f32.mrf.mxu0
        %v3764 = vadd.f32 0.0, %v3763
        %v3765 = vpop.f32.mrf.mxu0
        %v3766 = vadd.f32 0.0, %v3765
        %3767 = vmatprep.mubr.bf16.mxu0 0
        %3768 = vmatmul.mubr.bf16.gmra.mxu0 %v650
        %v3769 = vpop.f32.mrf.mxu0
        %v3770 = vadd.f32 0.0, %v3769
        %v3771 = vpop.f32.mrf.mxu0
        %v3772 = vadd.f32 0.0, %v3771
        %v3773 = vpop.f32.mrf.mxu0
        %v3774 = vadd.f32 0.0, %v3773
        %v3775 = vpop.f32.mrf.mxu0
        %v3776 = vadd.f32 0.0, %v3775
        %3777 = vmatprep.mubr.bf16.mxu0 0
        %3778 = vmatmul.mubr.bf16.gmra.mxu0 %v651
        %v3779 = vpop.f32.mrf.mxu0
        %v3780 = vadd.f32 0.0, %v3779
        %v3781 = vpop.f32.mrf.mxu0
        %v3782 = vadd.f32 0.0, %v3781
        %v3783 = vpop.f32.mrf.mxu0
        %v3784 = vadd.f32 0.0, %v3783
        %v3785 = vpop.f32.mrf.mxu0
        %v3786 = vadd.f32 0.0, %v3785
        %3787 = vmatprep.mubr.bf16.mxu0 0
        %3788 = vmatmul.mubr.bf16.gmra.mxu0 %v652
        %v3789 = vpop.f32.mrf.mxu0
        %v3790 = vadd.f32 0.0, %v3789
        %v3791 = vpop.f32.mrf.mxu0
        %v3792 = vadd.f32 0.0, %v3791
        %v3793 = vpop.f32.mrf.mxu0
        %v3794 = vadd.f32 0.0, %v3793
        %v3795 = vpop.f32.mrf.mxu0
        %v3796 = vadd.f32 0.0, %v3795
        %3797 = vmatprep.mubr.bf16.mxu0 0
        %3798 = vmatmul.mubr.bf16.gmra.mxu0 %v653
        %v3799 = vpop.f32.mrf.mxu0
        %v3800 = vadd.f32 0.0, %v3799
        %v3801 = vpop.f32.mrf.mxu0
        %v3802 = vadd.f32 0.0, %v3801
        %v3803 = vpop.f32.mrf.mxu0
        %v3804 = vadd.f32 0.0, %v3803
        %v3805 = vpop.f32.mrf.mxu0
        %v3806 = vadd.f32 0.0, %v3805
        %3807 = vmatprep.mubr.bf16.mxu0 0
        %3808 = vmatmul.mubr.bf16.gmra.mxu0 %v654
        %v3809 = vpop.f32.mrf.mxu0
        %v3810 = vadd.f32 0.0, %v3809
        %v3811 = vpop.f32.mrf.mxu0
        %v3812 = vadd.f32 0.0, %v3811
        %v3813 = vpop.f32.mrf.mxu0
        %v3814 = vadd.f32 0.0, %v3813
        %v3815 = vpop.f32.mrf.mxu0
        %v3816 = vadd.f32 0.0, %v3815
        %3817 = vdwg.mxu0
        %3818 = vmatprep.subr.bf16.mxu0 0
        %3819 = vmatpush1.bf16.msra.mxu0 %v3704
        %3820 = vmatprep.subr.bf16.mxu0 0
        %3821 = vmatpush1.bf16.msra.mxu0 %v3701
        %3822 = vmatprep.subr.bf16.mxu0 0
        %3823 = vmatpush1.bf16.msra.mxu0 %v3698
        %3824 = vmatprep.subr.bf16.mxu0 0
        %3825 = vmatpush1.bf16.msra.mxu0 %v3695
        %3826 = vmatprep.subr.bf16.mxu0 0
        %3827 = vmatpush1.bf16.msra.mxu0 %v3692
        %3828 = vmatprep.subr.bf16.mxu0 0
        %3829 = vmatpush1.bf16.msra.mxu0 %v3689
        %3830 = vmatprep.subr.bf16.mxu0 0
        %3831 = vmatpush1.bf16.msra.mxu0 %v3686
        %3832 = vmatprep.subr.bf16.mxu0 0
        %3833 = vmatpush1.bf16.msra.mxu0 %v3683
        %3834 = vmatprep.subr.bf16.mxu0 0
        %3835 = vmatpush2.bf16.msra.mxu0 0
        %3836 = vmatprep.subr.bf16.mxu0 0
        %3837 = vmatpush2.bf16.msra.mxu0 0
        %3838 = vmatprep.subr.bf16.mxu0 0
        %3839 = vmatpush2.bf16.msra.mxu0 0
        %3840 = vmatprep.subr.bf16.mxu0 0
        %3841 = vmatpush2.bf16.msra.mxu0 0
        %3842 = vmatprep.subr.bf16.mxu0 0
        %3843 = vmatpush2.bf16.msra.mxu0 0
        %3844 = vmatprep.subr.bf16.mxu0 0
        %3845 = vmatpush2.bf16.msra.mxu0 0
        %3846 = vmatprep.subr.bf16.mxu0 0
        %3847 = vmatpush2.bf16.msra.mxu0 0
        %3848 = vmatprep.subr.bf16.mxu0 0
        %3849 = vmatpush2.bf16.msra.mxu0 0
        %3850 = vmatprep.mubr.bf16.mxu0 0
        %3851 = vmatmul.mubr.bf16.gmra.mxu0 %v647
        %v3852 = vpop.f32.mrf.mxu0
        %v3853 = vadd.f32 0.0, %v3852
        %v3854 = vpop.f32.mrf.mxu0
        %v3855 = vpop.f32.mrf.mxu0
        %v3856 = vadd.f32 0.0, %v3855
        %v3857 = vpop.f32.mrf.mxu0
        %3858 = vmatprep.mubr.bf16.mxu0 0
        %3859 = vmatmul.mubr.bf16.gmra.mxu0 %v648
        %v3860 = vpop.f32.mrf.mxu0
        %v3861 = vadd.f32 0.0, %v3860
        %v3862 = vpop.f32.mrf.mxu0
        %v3863 = vpop.f32.mrf.mxu0
        %v3864 = vadd.f32 0.0, %v3863
        %v3865 = vpop.f32.mrf.mxu0
        %3866 = vmatprep.mubr.bf16.mxu0 0
        %3867 = vmatmul.mubr.bf16.gmra.mxu0 %v649
        %v3868 = vpop.f32.mrf.mxu0
        %v3869 = vadd.f32 0.0, %v3868
        %v3870 = vpop.f32.mrf.mxu0
        %v3871 = vpop.f32.mrf.mxu0
        %v3872 = vadd.f32 0.0, %v3871
        %v3873 = vpop.f32.mrf.mxu0
        %3874 = vmatprep.mubr.bf16.mxu0 0
        %3875 = vmatmul.mubr.bf16.gmra.mxu0 %v650
        %v3876 = vpop.f32.mrf.mxu0
        %v3877 = vadd.f32 0.0, %v3876
        %v3878 = vpop.f32.mrf.mxu0
        %v3879 = vpop.f32.mrf.mxu0
        %v3880 = vadd.f32 0.0, %v3879
        %v3881 = vpop.f32.mrf.mxu0
        %3882 = vmatprep.mubr.bf16.mxu0 0
        %3883 = vmatmul.mubr.bf16.gmra.mxu0 %v651
        %v3884 = vpop.f32.mrf.mxu0
        %v3885 = vadd.f32 0.0, %v3884
        %v3886 = vpop.f32.mrf.mxu0
        %v3887 = vpop.f32.mrf.mxu0
        %v3888 = vadd.f32 0.0, %v3887
        %v3889 = vpop.f32.mrf.mxu0
        %3890 = vmatprep.mubr.bf16.mxu0 0
        %3891 = vmatmul.mubr.bf16.gmra.mxu0 %v652
        %v3892 = vpop.f32.mrf.mxu0
        %v3893 = vadd.f32 0.0, %v3892
        %v3894 = vpop.f32.mrf.mxu0
        %v3895 = vpop.f32.mrf.mxu0
        %v3896 = vadd.f32 0.0, %v3895
        %v3897 = vpop.f32.mrf.mxu0
        %3898 = vmatprep.mubr.bf16.mxu0 0
        %3899 = vmatmul.mubr.bf16.gmra.mxu0 %v653
        %v3900 = vpop.f32.mrf.mxu0
        %v3901 = vadd.f32 0.0, %v3900
        %v3902 = vpop.f32.mrf.mxu0
        %v3903 = vpop.f32.mrf.mxu0
        %v3904 = vadd.f32 0.0, %v3903
        %v3905 = vpop.f32.mrf.mxu0
        %3906 = vmatprep.mubr.bf16.mxu0 0
        %3907 = vmatmul.mubr.bf16.gmra.mxu0 %v654
        %v3908 = vpop.f32.mrf.mxu0
        %v3909 = vadd.f32 0.0, %v3908
        %v3910 = vpop.f32.mrf.mxu0
        %v3911 = vpop.f32.mrf.mxu0
        %v3912 = vadd.f32 0.0, %v3911
        %v3913 = vpop.f32.mrf.mxu0
        %3914 = vdwg.mxu0
        %v3915 = vmul.f32 %v3740, 0.70710677
        %v3916 = vmul.f32 %v3742, 0.70710677
        %v3917 = vmul.f32 %v3853, 0.70710677
        %v3918 = vmul.f32 %v3744, 0.70710677
        %v3919 = vmul.f32 %v3746, 0.70710677
        %v3920 = vmul.f32 %v3856, 0.70710677
        %v3921 = vmul.f32 %v3750, 0.70710677
        %v3922 = vmul.f32 %v3752, 0.70710677
        %v3923 = vmul.f32 %v3861, 0.70710677
        %v3924 = vmul.f32 %v3754, 0.70710677
        %v3925 = vmul.f32 %v3756, 0.70710677
        %v3926 = vmul.f32 %v3864, 0.70710677
        %v3927 = vmul.f32 %v3760, 0.70710677
        %v3928 = vmul.f32 %v3762, 0.70710677
        %v3929 = vmul.f32 %v3869, 0.70710677
        %v3930 = vmul.f32 %v3764, 0.70710677
        %v3931 = vmul.f32 %v3766, 0.70710677
        %v3932 = vmul.f32 %v3872, 0.70710677
        %v3933 = vmul.f32 %v3770, 0.70710677
        %v3934 = vmul.f32 %v3772, 0.70710677
        %v3935 = vmul.f32 %v3877, 0.70710677
        %v3936 = vmul.f32 %v3774, 0.70710677
        %v3937 = vmul.f32 %v3776, 0.70710677
        %v3938 = vmul.f32 %v3880, 0.70710677
        %v3939 = vmul.f32 %v3780, 0.70710677
        %v3940 = vmul.f32 %v3782, 0.70710677
        %v3941 = vmul.f32 %v3885, 0.70710677
        %v3942 = vmul.f32 %v3784, 0.70710677
        %v3943 = vmul.f32 %v3786, 0.70710677
        %v3944 = vmul.f32 %v3888, 0.70710677
        %v3945 = vmul.f32 %v3790, 0.70710677
        %v3946 = vmul.f32 %v3792, 0.70710677
        %v3947 = vmul.f32 %v3893, 0.70710677
        %v3948 = vmul.f32 %v3794, 0.70710677
        %v3949 = vmul.f32 %v3796, 0.70710677
        %v3950 = vmul.f32 %v3896, 0.70710677
        %v3951 = vmul.f32 %v3800, 0.70710677
        %v3952 = vmul.f32 %v3802, 0.70710677
        %v3953 = vmul.f32 %v3901, 0.70710677
        %v3954 = vmul.f32 %v3804, 0.70710677
        %v3955 = vmul.f32 %v3806, 0.70710677
        %v3956 = vmul.f32 %v3904, 0.70710677
        %v3957 = vmul.f32 %v3810, 0.70710677
        %v3958 = vmul.f32 %v3812, 0.70710677
        %v3959 = vmul.f32 %v3909, 0.70710677
        %v3960 = vmul.f32 %v3814, 0.70710677
        %v3961 = vmul.f32 %v3816, 0.70710677
        %v3962 = vmul.f32 %v3912, 0.70710677
        %v3963 = vpack.c.bf16 %v3918, %v3915
        %v3964 = vpack.c.bf16 %v3919, %v3916
        %v3965 = vpack.c.bf16 %v3920, %v3917
        %v3966 = vpack.c.bf16 %v3924, %v3921
        %v3967 = vpack.c.bf16 %v3925, %v3922
        %v3968 = vpack.c.bf16 %v3926, %v3923
        %v3969 = vpack.c.bf16 %v3930, %v3927
        %v3970 = vpack.c.bf16 %v3931, %v3928
        %v3971 = vpack.c.bf16 %v3932, %v3929
        %v3972 = vpack.c.bf16 %v3936, %v3933
        %v3973 = vpack.c.bf16 %v3937, %v3934
        %v3974 = vpack.c.bf16 %v3938, %v3935
        %v3975 = vpack.c.bf16 %v3942, %v3939
        %v3976 = vpack.c.bf16 %v3943, %v3940
        %v3977 = vpack.c.bf16 %v3944, %v3941
        %v3978 = vpack.c.bf16 %v3948, %v3945
        %v3979 = vpack.c.bf16 %v3949, %v3946
        %v3980 = vpack.c.bf16 %v3950, %v3947
        %v3981 = vpack.c.bf16 %v3954, %v3951
        %v3982 = vpack.c.bf16 %v3955, %v3952
        %v3983 = vpack.c.bf16 %v3956, %v3953
        %v3984 = vpack.c.bf16 %v3960, %v3957
        %v3985 = vpack.c.bf16 %v3961, %v3958
        %v3986 = vpack.c.bf16 %v3962, %v3959
        %v4035 = vunpack.c.l.b16 %v559
        %v4036 = vunpack.c.l.b16 %v560
        %v4037 = vunpack.c.l.b16 %v561
        %v4038 = vunpack.c.l.b16 %v562
        %v4039 = vunpack.c.l.b16 %v563
        %v4040 = vunpack.c.l.b16 %v564
        %v4041 = vunpack.c.l.b16 %v565
        %v4042 = vunpack.c.l.b16 %v566
        %v4043 = vunpack.c.l.b16 %v567
        %v4044 = vunpack.c.l.b16 %v568
        %v4045 = vunpack.c.l.b16 %v569
        %v4046 = vunpack.c.l.b16 %v570
        %v4047 = vunpack.c.l.b16 %v571
        %v4048 = vunpack.c.l.b16 %v572
        %v4049 = vunpack.c.l.b16 %v573
        %v4050 = vunpack.c.l.b16 %v574
        %v4051 = vunpack.c.l.b16 %v575
        %v4052 = vunpack.c.l.b16 %v576
        %v4053 = vunpack.c.l.b16 %v577
        %v4054 = vunpack.c.l.b16 %v578
        %v4055 = vunpack.c.l.b16 %v579
        %v4056 = vunpack.c.l.b16 %v580
        %v4057 = vunpack.c.l.b16 %v581
        %v4058 = vunpack.c.l.b16 %v582
        %v4059 = vunpack.c.l.b16 %v583
        %v4060 = vunpack.c.l.b16 %v584
        %v4061 = vunpack.c.l.b16 %v585
        %v4062 = vunpack.c.l.b16 %v586
        %v4063 = vunpack.c.l.b16 %v587
        %v4064 = vunpack.c.l.b16 %v588
        %v4065 = vunpack.c.l.b16 %v589
        %v4066 = vunpack.c.l.b16 %v590
        %v4067 = vunpack.c.l.b16 %v591
        %v4068 = vunpack.c.l.b16 %v592
        %v4069 = vunpack.c.l.b16 %v593
        %v4070 = vunpack.c.l.b16 %v594
        %v4071 = vunpack.c.l.b16 %v595
        %v4072 = vunpack.c.l.b16 %v596
        %v4073 = vunpack.c.l.b16 %v597
        %v4074 = vunpack.c.l.b16 %v598
        %v4075 = vunpack.c.l.b16 %v599
        %v4076 = vunpack.c.l.b16 %v600
        %v4077 = vunpack.c.l.b16 %v601
        %v4078 = vunpack.c.l.b16 %v602
        %v4079 = vunpack.c.l.b16 %v603
        %v4080 = vunpack.c.l.b16 %v604
        %v4081 = vunpack.c.l.b16 %v605
        %v4082 = vunpack.c.l.b16 %v606
        %v4083 = vpack.c.b16 %v4036, %v4035
        %v4084 = vpack.c.b16 %v4038, %v4037
        %v4085 = vpack.c.b16 %v4040, %v4039
        %v4086 = vpack.c.b16 %v4042, %v4041
        %v4087 = vpack.c.b16 %v4044, %v4043
        %v4088 = vpack.c.b16 %v4046, %v4045
        %v4089 = vpack.c.b16 %v4048, %v4047
        %v4090 = vpack.c.b16 %v4050, %v4049
        %v4091 = vpack.c.b16 %v4052, %v4051
        %v4092 = vpack.c.b16 %v4054, %v4053
        %v4093 = vpack.c.b16 %v4056, %v4055
        %v4094 = vpack.c.b16 %v4058, %v4057
        %v4095 = vpack.c.b16 %v4060, %v4059
        %v4096 = vpack.c.b16 %v4062, %v4061
        %v4097 = vpack.c.b16 %v4064, %v4063
        %v4098 = vpack.c.b16 %v4066, %v4065
        %v4099 = vpack.c.b16 %v4068, %v4067
        %v4100 = vpack.c.b16 %v4070, %v4069
        %v4101 = vpack.c.b16 %v4072, %v4071
        %v4102 = vpack.c.b16 %v4074, %v4073
        %v4103 = vpack.c.b16 %v4076, %v4075
        %v4104 = vpack.c.b16 %v4078, %v4077
        %v4105 = vpack.c.b16 %v4080, %v4079
        %v4106 = vpack.c.b16 %v4082, %v4081
        %4131 = vmatprep.subr.bf16.mxu0 0
        %4132 = vmatpush1.bf16.msra.mxu0 %v4090
        %4133 = vmatprep.subr.bf16.mxu0 0
        %4134 = vmatpush1.bf16.msra.mxu0 %v4089
        %4135 = vmatprep.subr.bf16.mxu0 0
        %4136 = vmatpush1.bf16.msra.mxu0 %v4088
        %4137 = vmatprep.subr.bf16.mxu0 0
        %4138 = vmatpush1.bf16.msra.mxu0 %v4087
        %4139 = vmatprep.subr.bf16.mxu0 0
        %4140 = vmatpush1.bf16.msra.mxu0 %v4086
        %4141 = vmatprep.subr.bf16.mxu0 0
        %4142 = vmatpush1.bf16.msra.mxu0 %v4085
        %4143 = vmatprep.subr.bf16.mxu0 0
        %4144 = vmatpush1.bf16.msra.mxu0 %v4084
        %4145 = vmatprep.subr.bf16.mxu0 0
        %4146 = vmatpush1.bf16.msra.mxu0 %v4083
        %4147 = vmatprep.subr.bf16.mxu0 0
        %4148 = vmatpush2.bf16.msra.mxu0 %v4098
        %4149 = vmatprep.subr.bf16.mxu0 0
        %4150 = vmatpush2.bf16.msra.mxu0 %v4097
        %4151 = vmatprep.subr.bf16.mxu0 0
        %4152 = vmatpush2.bf16.msra.mxu0 %v4096
        %4153 = vmatprep.subr.bf16.mxu0 0
        %4154 = vmatpush2.bf16.msra.mxu0 %v4095
        %4155 = vmatprep.subr.bf16.mxu0 0
        %4156 = vmatpush2.bf16.msra.mxu0 %v4094
        %4157 = vmatprep.subr.bf16.mxu0 0
        %4158 = vmatpush2.bf16.msra.mxu0 %v4093
        %4159 = vmatprep.subr.bf16.mxu0 0
        %4160 = vmatpush2.bf16.msra.mxu0 %v4092
        %4161 = vmatprep.subr.bf16.mxu0 0
        %4162 = vmatpush2.bf16.msra.mxu0 %v4091
        %4163 = vmatprep.mubr.bf16.mxu0 %v3964
        %4164 = vmatmul.mubr.bf16.gmra.mxu0 %v3963
        %v4165 = vpop.f32.mrf.mxu0
        %v4166 = vadd.f32 0.0, %v4165
        %v4167 = vpop.f32.mrf.mxu0
        %v4168 = vpop.f32.mrf.mxu0
        %v4169 = vadd.f32 0.0, %v4168
        %v4170 = vpop.f32.mrf.mxu0
        %4171 = vmatprep.mubr.bf16.mxu0 %v3967
        %4172 = vmatmul.mubr.bf16.gmra.mxu0 %v3966
        %v4173 = vpop.f32.mrf.mxu0
        %v4174 = vadd.f32 0.0, %v4173
        %v4175 = vpop.f32.mrf.mxu0
        %v4176 = vpop.f32.mrf.mxu0
        %v4177 = vadd.f32 0.0, %v4176
        %v4178 = vpop.f32.mrf.mxu0
        %4179 = vmatprep.mubr.bf16.mxu0 %v3970
        %4180 = vmatmul.mubr.bf16.gmra.mxu0 %v3969
        %v4181 = vpop.f32.mrf.mxu0
        %v4182 = vadd.f32 0.0, %v4181
        %v4183 = vpop.f32.mrf.mxu0
        %v4184 = vpop.f32.mrf.mxu0
        %v4185 = vadd.f32 0.0, %v4184
        %v4186 = vpop.f32.mrf.mxu0
        %4187 = vmatprep.mubr.bf16.mxu0 %v3973
        %4188 = vmatmul.mubr.bf16.gmra.mxu0 %v3972
        %v4189 = vpop.f32.mrf.mxu0
        %v4190 = vadd.f32 0.0, %v4189
        %v4191 = vpop.f32.mrf.mxu0
        %v4192 = vpop.f32.mrf.mxu0
        %v4193 = vadd.f32 0.0, %v4192
        %v4194 = vpop.f32.mrf.mxu0
        %4195 = vmatprep.mubr.bf16.mxu0 %v3976
        %4196 = vmatmul.mubr.bf16.gmra.mxu0 %v3975
        %v4197 = vpop.f32.mrf.mxu0
        %v4198 = vadd.f32 0.0, %v4197
        %v4199 = vpop.f32.mrf.mxu0
        %v4200 = vpop.f32.mrf.mxu0
        %v4201 = vadd.f32 0.0, %v4200
        %v4202 = vpop.f32.mrf.mxu0
        %4203 = vmatprep.mubr.bf16.mxu0 %v3979
        %4204 = vmatmul.mubr.bf16.gmra.mxu0 %v3978
        %v4205 = vpop.f32.mrf.mxu0
        %v4206 = vadd.f32 0.0, %v4205
        %v4207 = vpop.f32.mrf.mxu0
        %v4208 = vpop.f32.mrf.mxu0
        %v4209 = vadd.f32 0.0, %v4208
        %v4210 = vpop.f32.mrf.mxu0
        %4211 = vmatprep.mubr.bf16.mxu0 %v3982
        %4212 = vmatmul.mubr.bf16.gmra.mxu0 %v3981
        %v4213 = vpop.f32.mrf.mxu0
        %v4214 = vadd.f32 0.0, %v4213
        %v4215 = vpop.f32.mrf.mxu0
        %v4216 = vpop.f32.mrf.mxu0
        %v4217 = vadd.f32 0.0, %v4216
        %v4218 = vpop.f32.mrf.mxu0
        %4219 = vmatprep.mubr.bf16.mxu0 %v3985
        %4220 = vmatmul.mubr.bf16.gmra.mxu0 %v3984
        %v4221 = vpop.f32.mrf.mxu0
        %v4222 = vadd.f32 0.0, %v4221
        %v4223 = vpop.f32.mrf.mxu0
        %v4224 = vpop.f32.mrf.mxu0
        %v4225 = vadd.f32 0.0, %v4224
        %v4226 = vpop.f32.mrf.mxu0
        %4227 = vdwg.mxu0
        %4228 = vmatprep.subr.bf16.mxu0 0
        %4229 = vmatpush1.bf16.msra.mxu0 %v4106
        %4230 = vmatprep.subr.bf16.mxu0 0
        %4231 = vmatpush1.bf16.msra.mxu0 %v4105
        %4232 = vmatprep.subr.bf16.mxu0 0
        %4233 = vmatpush1.bf16.msra.mxu0 %v4104
        %4234 = vmatprep.subr.bf16.mxu0 0
        %4235 = vmatpush1.bf16.msra.mxu0 %v4103
        %4236 = vmatprep.subr.bf16.mxu0 0
        %4237 = vmatpush1.bf16.msra.mxu0 %v4102
        %4238 = vmatprep.subr.bf16.mxu0 0
        %4239 = vmatpush1.bf16.msra.mxu0 %v4101
        %4240 = vmatprep.subr.bf16.mxu0 0
        %4241 = vmatpush1.bf16.msra.mxu0 %v4100
        %4242 = vmatprep.subr.bf16.mxu0 0
        %4243 = vmatpush1.bf16.msra.mxu0 %v4099
        %4244 = vmatprep.subr.bf16.mxu0 0
        %4245 = vmatpush2.bf16.msra.mxu0 0
        %4246 = vmatprep.subr.bf16.mxu0 0
        %4247 = vmatpush2.bf16.msra.mxu0 0
        %4248 = vmatprep.subr.bf16.mxu0 0
        %4249 = vmatpush2.bf16.msra.mxu0 0
        %4250 = vmatprep.subr.bf16.mxu0 0
        %4251 = vmatpush2.bf16.msra.mxu0 0
        %4252 = vmatprep.subr.bf16.mxu0 0
        %4253 = vmatpush2.bf16.msra.mxu0 0
        %4254 = vmatprep.subr.bf16.mxu0 0
        %4255 = vmatpush2.bf16.msra.mxu0 0
        %4256 = vmatprep.subr.bf16.mxu0 0
        %4257 = vmatpush2.bf16.msra.mxu0 0
        %4258 = vmatprep.subr.bf16.mxu0 0
        %4259 = vmatpush2.bf16.msra.mxu0 0
        %4260 = vmatprep.mubr.bf16.mxu0 0
        %4261 = vmatmul.mubr.bf16.gmra.mxu0 %v3965
        %v4262 = vpop.f32.mrf.mxu0
        %v4263 = vadd.f32 %v4166, %v4262
        %v4264 = vpop.f32.mrf.mxu0
        %v4265 = vpop.f32.mrf.mxu0
        %v4266 = vadd.f32 %v4169, %v4265
        %v4267 = vpop.f32.mrf.mxu0
        %4268 = vmatprep.mubr.bf16.mxu0 0
        %4269 = vmatmul.mubr.bf16.gmra.mxu0 %v3968
        %v4270 = vpop.f32.mrf.mxu0
        %v4271 = vadd.f32 %v4174, %v4270
        %v4272 = vpop.f32.mrf.mxu0
        %v4273 = vpop.f32.mrf.mxu0
        %v4274 = vadd.f32 %v4177, %v4273
        %v4275 = vpop.f32.mrf.mxu0
        %4276 = vmatprep.mubr.bf16.mxu0 0
        %4277 = vmatmul.mubr.bf16.gmra.mxu0 %v3971
        %v4278 = vpop.f32.mrf.mxu0
        %v4279 = vadd.f32 %v4182, %v4278
        %v4280 = vpop.f32.mrf.mxu0
        %v4281 = vpop.f32.mrf.mxu0
        %v4282 = vadd.f32 %v4185, %v4281
        %v4283 = vpop.f32.mrf.mxu0
        %4284 = vmatprep.mubr.bf16.mxu0 0
        %4285 = vmatmul.mubr.bf16.gmra.mxu0 %v3974
        %v4286 = vpop.f32.mrf.mxu0
        %v4287 = vadd.f32 %v4190, %v4286
        %v4288 = vpop.f32.mrf.mxu0
        %v4289 = vpop.f32.mrf.mxu0
        %v4290 = vadd.f32 %v4193, %v4289
        %v4291 = vpop.f32.mrf.mxu0
        %4292 = vmatprep.mubr.bf16.mxu0 0
        %4293 = vmatmul.mubr.bf16.gmra.mxu0 %v3977
        %v4294 = vpop.f32.mrf.mxu0
        %v4295 = vadd.f32 %v4198, %v4294
        %v4296 = vpop.f32.mrf.mxu0
        %v4297 = vpop.f32.mrf.mxu0
        %v4298 = vadd.f32 %v4201, %v4297
        %v4299 = vpop.f32.mrf.mxu0
        %4300 = vmatprep.mubr.bf16.mxu0 0
        %4301 = vmatmul.mubr.bf16.gmra.mxu0 %v3980
        %v4302 = vpop.f32.mrf.mxu0
        %v4303 = vadd.f32 %v4206, %v4302
        %v4304 = vpop.f32.mrf.mxu0
        %v4305 = vpop.f32.mrf.mxu0
        %v4306 = vadd.f32 %v4209, %v4305
        %v4307 = vpop.f32.mrf.mxu0
        %4308 = vmatprep.mubr.bf16.mxu0 0
        %4309 = vmatmul.mubr.bf16.gmra.mxu0 %v3983
        %v4310 = vpop.f32.mrf.mxu0
        %v4311 = vadd.f32 %v4214, %v4310
        %v4312 = vpop.f32.mrf.mxu0
        %v4313 = vpop.f32.mrf.mxu0
        %v4314 = vadd.f32 %v4217, %v4313
        %v4315 = vpop.f32.mrf.mxu0
        %4316 = vmatprep.mubr.bf16.mxu0 0
        %4317 = vmatmul.mubr.bf16.gmra.mxu0 %v3986
        %v4318 = vpop.f32.mrf.mxu0
        %v4319 = vadd.f32 %v4222, %v4318
        %v4320 = vpop.f32.mrf.mxu0
        %v4321 = vpop.f32.mrf.mxu0
        %v4322 = vadd.f32 %v4225, %v4321
        %v4323 = vpop.f32.mrf.mxu0
        %4324 = vdwg.mxu0
        %v4325 = vmul.f32 %v779, %v4263
        %v4326 = vmul.f32 %v784, %v4266
        %v4327 = vmul.f32 %v789, %v4271
        %v4328 = vmul.f32 %v794, %v4274
        %v4329 = vmul.f32 %v799, %v4279
        %v4330 = vmul.f32 %v804, %v4282
        %v4331 = vmul.f32 %v809, %v4287
        %v4332 = vmul.f32 %v814, %v4290
        %v4333 = vmul.f32 %v819, %v4295
        %v4334 = vmul.f32 %v824, %v4298
        %v4335 = vmul.f32 %v829, %v4303
        %v4336 = vmul.f32 %v834, %v4306
        %v4337 = vmul.f32 %v839, %v4311
        %v4338 = vmul.f32 %v844, %v4314
        %v4339 = vmul.f32 %v849, %v4319
        %v4340 = vmul.f32 %v854, %v4322
        %v4341 = vmul.f32 %v874, %v4263
        %v4342 = vmul.f32 %v878, %v4266
        %v4343 = vmul.f32 %v882, %v4271
        %v4344 = vmul.f32 %v886, %v4274
        %v4345 = vmul.f32 %v890, %v4279
        %v4346 = vmul.f32 %v894, %v4282
        %v4347 = vmul.f32 %v898, %v4287
        %v4348 = vmul.f32 %v902, %v4290
        %v4349 = vmul.f32 %v906, %v4295
        %v4350 = vmul.f32 %v910, %v4298
        %v4351 = vmul.f32 %v914, %v4303
        %v4352 = vmul.f32 %v918, %v4306
        %v4353 = vmul.f32 %v922, %v4311
        %v4354 = vmul.f32 %v926, %v4314
        %v4355 = vmul.f32 %v930, %v4319
        %v4356 = vmul.f32 %v934, %v4322
        %4373 = vrot.lane.b32.xlu0 %v4341, 120
        %v4374 = vpop.permute.xlu0 %4373
        %4375 = vrot.lane.b32.xlu0 %v4342, 120
        %v4376 = vpop.permute.xlu0 %4375
        %4377 = vrot.lane.b32.xlu0 %v4343, 120
        %v4378 = vpop.permute.xlu0 %4377
        %4379 = vrot.lane.b32.xlu0 %v4344, 120
        %v4380 = vpop.permute.xlu0 %4379
        %4381 = vrot.lane.b32.xlu0 %v4345, 120
        %v4382 = vpop.permute.xlu0 %4381
        %4383 = vrot.lane.b32.xlu0 %v4346, 120
        %v4384 = vpop.permute.xlu0 %4383
        %4385 = vrot.lane.b32.xlu0 %v4347, 120
        %v4386 = vpop.permute.xlu0 %4385
        %4387 = vrot.lane.b32.xlu0 %v4348, 120
        %v4388 = vpop.permute.xlu0 %4387
        %4389 = vrot.lane.b32.xlu0 %v4349, 120
        %v4390 = vpop.permute.xlu0 %4389
        %4391 = vrot.lane.b32.xlu0 %v4350, 120
        %v4392 = vpop.permute.xlu0 %4391
        %4393 = vrot.lane.b32.xlu0 %v4351, 120
        %v4394 = vpop.permute.xlu0 %4393
        %4395 = vrot.lane.b32.xlu0 %v4352, 120
        %v4396 = vpop.permute.xlu0 %4395
        %4397 = vrot.lane.b32.xlu0 %v4353, 120
        %v4398 = vpop.permute.xlu0 %4397
        %4399 = vrot.lane.b32.xlu0 %v4354, 120
        %v4400 = vpop.permute.xlu0 %4399
        %4401 = vrot.lane.b32.xlu0 %v4355, 120
        %v4402 = vpop.permute.xlu0 %4401
        %4403 = vrot.lane.b32.xlu0 %v4356, 120
        %v4404 = vpop.permute.xlu0 %4403
        %v4421 = vadd.f32 %v4325, %v4374
        %v4422 = vadd.f32 %v4326, %v4376
        %v4423 = vadd.f32 %v4327, %v4378
        %v4424 = vadd.f32 %v4328, %v4380
        %v4425 = vadd.f32 %v4329, %v4382
        %v4426 = vadd.f32 %v4330, %v4384
        %v4427 = vadd.f32 %v4331, %v4386
        %v4428 = vadd.f32 %v4332, %v4388
        %v4429 = vadd.f32 %v4333, %v4390
        %v4430 = vadd.f32 %v4334, %v4392
        %v4431 = vadd.f32 %v4335, %v4394
        %v4432 = vadd.f32 %v4336, %v4396
        %v4433 = vadd.f32 %v4337, %v4398
        %v4434 = vadd.f32 %v4338, %v4400
        %v4435 = vadd.f32 %v4339, %v4402
        %v4436 = vadd.f32 %v4340, %v4404
        %v4437 = vmul.f32 %v954, %v4263
        %v4438 = vmul.f32 %v958, %v4266
        %v4439 = vmul.f32 %v962, %v4271
        %v4440 = vmul.f32 %v966, %v4274
        %v4441 = vmul.f32 %v970, %v4279
        %v4442 = vmul.f32 %v974, %v4282
        %v4443 = vmul.f32 %v978, %v4287
        %v4444 = vmul.f32 %v982, %v4290
        %v4445 = vmul.f32 %v986, %v4295
        %v4446 = vmul.f32 %v990, %v4298
        %v4447 = vmul.f32 %v994, %v4303
        %v4448 = vmul.f32 %v998, %v4306
        %v4449 = vmul.f32 %v1002, %v4311
        %v4450 = vmul.f32 %v1006, %v4314
        %v4451 = vmul.f32 %v1010, %v4319
        %v4452 = vmul.f32 %v1014, %v4322
        %4469 = vrot.lane.b32.xlu0 %v4437, 112
        %v4470 = vpop.permute.xlu0 %4469
        %4471 = vrot.lane.b32.xlu0 %v4438, 112
        %v4472 = vpop.permute.xlu0 %4471
        %4473 = vrot.lane.b32.xlu0 %v4439, 112
        %v4474 = vpop.permute.xlu0 %4473
        %4475 = vrot.lane.b32.xlu0 %v4440, 112
        %v4476 = vpop.permute.xlu0 %4475
        %4477 = vrot.lane.b32.xlu0 %v4441, 112
        %v4478 = vpop.permute.xlu0 %4477
        %4479 = vrot.lane.b32.xlu0 %v4442, 112
        %v4480 = vpop.permute.xlu0 %4479
        %4481 = vrot.lane.b32.xlu0 %v4443, 112
        %v4482 = vpop.permute.xlu0 %4481
        %4483 = vrot.lane.b32.xlu0 %v4444, 112
        %v4484 = vpop.permute.xlu0 %4483
        %4485 = vrot.lane.b32.xlu0 %v4445, 112
        %v4486 = vpop.permute.xlu0 %4485
        %4487 = vrot.lane.b32.xlu0 %v4446, 112
        %v4488 = vpop.permute.xlu0 %4487
        %4489 = vrot.lane.b32.xlu0 %v4447, 112
        %v4490 = vpop.permute.xlu0 %4489
        %4491 = vrot.lane.b32.xlu0 %v4448, 112
        %v4492 = vpop.permute.xlu0 %4491
        %4493 = vrot.lane.b32.xlu0 %v4449, 112
        %v4494 = vpop.permute.xlu0 %4493
        %4495 = vrot.lane.b32.xlu0 %v4450, 112
        %v4496 = vpop.permute.xlu0 %4495
        %4497 = vrot.lane.b32.xlu0 %v4451, 112
        %v4498 = vpop.permute.xlu0 %4497
        %4499 = vrot.lane.b32.xlu0 %v4452, 112
        %v4500 = vpop.permute.xlu0 %4499
        %v4517 = vadd.f32 %v4421, %v4470
        %v4518 = vadd.f32 %v4422, %v4472
        %v4519 = vadd.f32 %v4423, %v4474
        %v4520 = vadd.f32 %v4424, %v4476
        %v4521 = vadd.f32 %v4425, %v4478
        %v4522 = vadd.f32 %v4426, %v4480
        %v4523 = vadd.f32 %v4427, %v4482
        %v4524 = vadd.f32 %v4428, %v4484
        %v4525 = vadd.f32 %v4429, %v4486
        %v4526 = vadd.f32 %v4430, %v4488
        %v4527 = vadd.f32 %v4431, %v4490
        %v4528 = vadd.f32 %v4432, %v4492
        %v4529 = vadd.f32 %v4433, %v4494
        %v4530 = vadd.f32 %v4434, %v4496
        %v4531 = vadd.f32 %v4435, %v4498
        %v4532 = vadd.f32 %v4436, %v4500
        %v4533 = vmul.f32 %v1034, %v4263
        %v4534 = vmul.f32 %v1038, %v4266
        %v4535 = vmul.f32 %v1042, %v4271
        %v4536 = vmul.f32 %v1046, %v4274
        %v4537 = vmul.f32 %v1050, %v4279
        %v4538 = vmul.f32 %v1054, %v4282
        %v4539 = vmul.f32 %v1058, %v4287
        %v4540 = vmul.f32 %v1062, %v4290
        %v4541 = vmul.f32 %v1066, %v4295
        %v4542 = vmul.f32 %v1070, %v4298
        %v4543 = vmul.f32 %v1074, %v4303
        %v4544 = vmul.f32 %v1078, %v4306
        %v4545 = vmul.f32 %v1082, %v4311
        %v4546 = vmul.f32 %v1086, %v4314
        %v4547 = vmul.f32 %v1090, %v4319
        %v4548 = vmul.f32 %v1094, %v4322
        %4565 = vrot.lane.b32.xlu0 %v4533, 104
        %v4566 = vpop.permute.xlu0 %4565
        %4567 = vrot.lane.b32.xlu0 %v4534, 104
        %v4568 = vpop.permute.xlu0 %4567
        %4569 = vrot.lane.b32.xlu0 %v4535, 104
        %v4570 = vpop.permute.xlu0 %4569
        %4571 = vrot.lane.b32.xlu0 %v4536, 104
        %v4572 = vpop.permute.xlu0 %4571
        %4573 = vrot.lane.b32.xlu0 %v4537, 104
        %v4574 = vpop.permute.xlu0 %4573
        %4575 = vrot.lane.b32.xlu0 %v4538, 104
        %v4576 = vpop.permute.xlu0 %4575
        %4577 = vrot.lane.b32.xlu0 %v4539, 104
        %v4578 = vpop.permute.xlu0 %4577
        %4579 = vrot.lane.b32.xlu0 %v4540, 104
        %v4580 = vpop.permute.xlu0 %4579
        %4581 = vrot.lane.b32.xlu0 %v4541, 104
        %v4582 = vpop.permute.xlu0 %4581
        %4583 = vrot.lane.b32.xlu0 %v4542, 104
        %v4584 = vpop.permute.xlu0 %4583
        %4585 = vrot.lane.b32.xlu0 %v4543, 104
        %v4586 = vpop.permute.xlu0 %4585
        %4587 = vrot.lane.b32.xlu0 %v4544, 104
        %v4588 = vpop.permute.xlu0 %4587
        %4589 = vrot.lane.b32.xlu0 %v4545, 104
        %v4590 = vpop.permute.xlu0 %4589
        %4591 = vrot.lane.b32.xlu0 %v4546, 104
        %v4592 = vpop.permute.xlu0 %4591
        %4593 = vrot.lane.b32.xlu0 %v4547, 104
        %v4594 = vpop.permute.xlu0 %4593
        %4595 = vrot.lane.b32.xlu0 %v4548, 104
        %v4596 = vpop.permute.xlu0 %4595
        %v4613 = vadd.f32 %v4517, %v4566
        %v4614 = vadd.f32 %v4518, %v4568
        %v4615 = vadd.f32 %v4519, %v4570
        %v4616 = vadd.f32 %v4520, %v4572
        %v4617 = vadd.f32 %v4521, %v4574
        %v4618 = vadd.f32 %v4522, %v4576
        %v4619 = vadd.f32 %v4523, %v4578
        %v4620 = vadd.f32 %v4524, %v4580
        %v4621 = vadd.f32 %v4525, %v4582
        %v4622 = vadd.f32 %v4526, %v4584
        %v4623 = vadd.f32 %v4527, %v4586
        %v4624 = vadd.f32 %v4528, %v4588
        %v4625 = vadd.f32 %v4529, %v4590
        %v4626 = vadd.f32 %v4530, %v4592
        %v4627 = vadd.f32 %v4531, %v4594
        %v4628 = vadd.f32 %v4532, %v4596
        %v4629 = vmul.f32 %v1114, %v4263
        %v4630 = vmul.f32 %v1118, %v4266
        %v4631 = vmul.f32 %v1122, %v4271
        %v4632 = vmul.f32 %v1126, %v4274
        %v4633 = vmul.f32 %v1130, %v4279
        %v4634 = vmul.f32 %v1134, %v4282
        %v4635 = vmul.f32 %v1138, %v4287
        %v4636 = vmul.f32 %v1142, %v4290
        %v4637 = vmul.f32 %v1146, %v4295
        %v4638 = vmul.f32 %v1150, %v4298
        %v4639 = vmul.f32 %v1154, %v4303
        %v4640 = vmul.f32 %v1158, %v4306
        %v4641 = vmul.f32 %v1162, %v4311
        %v4642 = vmul.f32 %v1166, %v4314
        %v4643 = vmul.f32 %v1170, %v4319
        %v4644 = vmul.f32 %v1174, %v4322
        %4661 = vrot.lane.b32.xlu0 %v4629, 96
        %v4662 = vpop.permute.xlu0 %4661
        %4663 = vrot.lane.b32.xlu0 %v4630, 96
        %v4664 = vpop.permute.xlu0 %4663
        %4665 = vrot.lane.b32.xlu0 %v4631, 96
        %v4666 = vpop.permute.xlu0 %4665
        %4667 = vrot.lane.b32.xlu0 %v4632, 96
        %v4668 = vpop.permute.xlu0 %4667
        %4669 = vrot.lane.b32.xlu0 %v4633, 96
        %v4670 = vpop.permute.xlu0 %4669
        %4671 = vrot.lane.b32.xlu0 %v4634, 96
        %v4672 = vpop.permute.xlu0 %4671
        %4673 = vrot.lane.b32.xlu0 %v4635, 96
        %v4674 = vpop.permute.xlu0 %4673
        %4675 = vrot.lane.b32.xlu0 %v4636, 96
        %v4676 = vpop.permute.xlu0 %4675
        %4677 = vrot.lane.b32.xlu0 %v4637, 96
        %v4678 = vpop.permute.xlu0 %4677
        %4679 = vrot.lane.b32.xlu0 %v4638, 96
        %v4680 = vpop.permute.xlu0 %4679
        %4681 = vrot.lane.b32.xlu0 %v4639, 96
        %v4682 = vpop.permute.xlu0 %4681
        %4683 = vrot.lane.b32.xlu0 %v4640, 96
        %v4684 = vpop.permute.xlu0 %4683
        %4685 = vrot.lane.b32.xlu0 %v4641, 96
        %v4686 = vpop.permute.xlu0 %4685
        %4687 = vrot.lane.b32.xlu0 %v4642, 96
        %v4688 = vpop.permute.xlu0 %4687
        %4689 = vrot.lane.b32.xlu0 %v4643, 96
        %v4690 = vpop.permute.xlu0 %4689
        %4691 = vrot.lane.b32.xlu0 %v4644, 96
        %v4692 = vpop.permute.xlu0 %4691
        %v4709 = vadd.f32 %v4613, %v4662
        %v4710 = vadd.f32 %v4614, %v4664
        %v4711 = vadd.f32 %v4615, %v4666
        %v4712 = vadd.f32 %v4616, %v4668
        %v4713 = vadd.f32 %v4617, %v4670
        %v4714 = vadd.f32 %v4618, %v4672
        %v4715 = vadd.f32 %v4619, %v4674
        %v4716 = vadd.f32 %v4620, %v4676
        %v4717 = vadd.f32 %v4621, %v4678
        %v4718 = vadd.f32 %v4622, %v4680
        %v4719 = vadd.f32 %v4623, %v4682
        %v4720 = vadd.f32 %v4624, %v4684
        %v4721 = vadd.f32 %v4625, %v4686
        %v4722 = vadd.f32 %v4626, %v4688
        %v4723 = vadd.f32 %v4627, %v4690
        %v4724 = vadd.f32 %v4628, %v4692
        %v4725 = vmul.f32 %v1194, %v4263
        %v4726 = vmul.f32 %v1198, %v4266
        %v4727 = vmul.f32 %v1202, %v4271
        %v4728 = vmul.f32 %v1206, %v4274
        %v4729 = vmul.f32 %v1210, %v4279
        %v4730 = vmul.f32 %v1214, %v4282
        %v4731 = vmul.f32 %v1218, %v4287
        %v4732 = vmul.f32 %v1222, %v4290
        %v4733 = vmul.f32 %v1226, %v4295
        %v4734 = vmul.f32 %v1230, %v4298
        %v4735 = vmul.f32 %v1234, %v4303
        %v4736 = vmul.f32 %v1238, %v4306
        %v4737 = vmul.f32 %v1242, %v4311
        %v4738 = vmul.f32 %v1246, %v4314
        %v4739 = vmul.f32 %v1250, %v4319
        %v4740 = vmul.f32 %v1254, %v4322
        %4757 = vrot.lane.b32.xlu0 %v4725, 88
        %v4758 = vpop.permute.xlu0 %4757
        %4759 = vrot.lane.b32.xlu0 %v4726, 88
        %v4760 = vpop.permute.xlu0 %4759
        %4761 = vrot.lane.b32.xlu0 %v4727, 88
        %v4762 = vpop.permute.xlu0 %4761
        %4763 = vrot.lane.b32.xlu0 %v4728, 88
        %v4764 = vpop.permute.xlu0 %4763
        %4765 = vrot.lane.b32.xlu0 %v4729, 88
        %v4766 = vpop.permute.xlu0 %4765
        %4767 = vrot.lane.b32.xlu0 %v4730, 88
        %v4768 = vpop.permute.xlu0 %4767
        %4769 = vrot.lane.b32.xlu0 %v4731, 88
        %v4770 = vpop.permute.xlu0 %4769
        %4771 = vrot.lane.b32.xlu0 %v4732, 88
        %v4772 = vpop.permute.xlu0 %4771
        %4773 = vrot.lane.b32.xlu0 %v4733, 88
        %v4774 = vpop.permute.xlu0 %4773
        %4775 = vrot.lane.b32.xlu0 %v4734, 88
        %v4776 = vpop.permute.xlu0 %4775
        %4777 = vrot.lane.b32.xlu0 %v4735, 88
        %v4778 = vpop.permute.xlu0 %4777
        %4779 = vrot.lane.b32.xlu0 %v4736, 88
        %v4780 = vpop.permute.xlu0 %4779
        %4781 = vrot.lane.b32.xlu0 %v4737, 88
        %v4782 = vpop.permute.xlu0 %4781
        %4783 = vrot.lane.b32.xlu0 %v4738, 88
        %v4784 = vpop.permute.xlu0 %4783
        %4785 = vrot.lane.b32.xlu0 %v4739, 88
        %v4786 = vpop.permute.xlu0 %4785
        %4787 = vrot.lane.b32.xlu0 %v4740, 88
        %v4788 = vpop.permute.xlu0 %4787
        %v4805 = vadd.f32 %v4709, %v4758
        %v4806 = vadd.f32 %v4710, %v4760
        %v4807 = vadd.f32 %v4711, %v4762
        %v4808 = vadd.f32 %v4712, %v4764
        %v4809 = vadd.f32 %v4713, %v4766
        %v4810 = vadd.f32 %v4714, %v4768
        %v4811 = vadd.f32 %v4715, %v4770
        %v4812 = vadd.f32 %v4716, %v4772
        %v4813 = vadd.f32 %v4717, %v4774
        %v4814 = vadd.f32 %v4718, %v4776
        %v4815 = vadd.f32 %v4719, %v4778
        %v4816 = vadd.f32 %v4720, %v4780
        %v4817 = vadd.f32 %v4721, %v4782
        %v4818 = vadd.f32 %v4722, %v4784
        %v4819 = vadd.f32 %v4723, %v4786
        %v4820 = vadd.f32 %v4724, %v4788
        %v4821 = vmul.f32 %v1274, %v4263
        %v4822 = vmul.f32 %v1278, %v4266
        %v4823 = vmul.f32 %v1282, %v4271
        %v4824 = vmul.f32 %v1286, %v4274
        %v4825 = vmul.f32 %v1290, %v4279
        %v4826 = vmul.f32 %v1294, %v4282
        %v4827 = vmul.f32 %v1298, %v4287
        %v4828 = vmul.f32 %v1302, %v4290
        %v4829 = vmul.f32 %v1306, %v4295
        %v4830 = vmul.f32 %v1310, %v4298
        %v4831 = vmul.f32 %v1314, %v4303
        %v4832 = vmul.f32 %v1318, %v4306
        %v4833 = vmul.f32 %v1322, %v4311
        %v4834 = vmul.f32 %v1326, %v4314
        %v4835 = vmul.f32 %v1330, %v4319
        %v4836 = vmul.f32 %v1334, %v4322
        %4853 = vrot.lane.b32.xlu0 %v4821, 80
        %v4854 = vpop.permute.xlu0 %4853
        %4855 = vrot.lane.b32.xlu0 %v4822, 80
        %v4856 = vpop.permute.xlu0 %4855
        %4857 = vrot.lane.b32.xlu0 %v4823, 80
        %v4858 = vpop.permute.xlu0 %4857
        %4859 = vrot.lane.b32.xlu0 %v4824, 80
        %v4860 = vpop.permute.xlu0 %4859
        %4861 = vrot.lane.b32.xlu0 %v4825, 80
        %v4862 = vpop.permute.xlu0 %4861
        %4863 = vrot.lane.b32.xlu0 %v4826, 80
        %v4864 = vpop.permute.xlu0 %4863
        %4865 = vrot.lane.b32.xlu0 %v4827, 80
        %v4866 = vpop.permute.xlu0 %4865
        %4867 = vrot.lane.b32.xlu0 %v4828, 80
        %v4868 = vpop.permute.xlu0 %4867
        %4869 = vrot.lane.b32.xlu0 %v4829, 80
        %v4870 = vpop.permute.xlu0 %4869
        %4871 = vrot.lane.b32.xlu0 %v4830, 80
        %v4872 = vpop.permute.xlu0 %4871
        %4873 = vrot.lane.b32.xlu0 %v4831, 80
        %v4874 = vpop.permute.xlu0 %4873
        %4875 = vrot.lane.b32.xlu0 %v4832, 80
        %v4876 = vpop.permute.xlu0 %4875
        %4877 = vrot.lane.b32.xlu0 %v4833, 80
        %v4878 = vpop.permute.xlu0 %4877
        %4879 = vrot.lane.b32.xlu0 %v4834, 80
        %v4880 = vpop.permute.xlu0 %4879
        %4881 = vrot.lane.b32.xlu0 %v4835, 80
        %v4882 = vpop.permute.xlu0 %4881
        %4883 = vrot.lane.b32.xlu0 %v4836, 80
        %v4884 = vpop.permute.xlu0 %4883
        %v4901 = vadd.f32 %v4805, %v4854
        %v4902 = vadd.f32 %v4806, %v4856
        %v4903 = vadd.f32 %v4807, %v4858
        %v4904 = vadd.f32 %v4808, %v4860
        %v4905 = vadd.f32 %v4809, %v4862
        %v4906 = vadd.f32 %v4810, %v4864
        %v4907 = vadd.f32 %v4811, %v4866
        %v4908 = vadd.f32 %v4812, %v4868
        %v4909 = vadd.f32 %v4813, %v4870
        %v4910 = vadd.f32 %v4814, %v4872
        %v4911 = vadd.f32 %v4815, %v4874
        %v4912 = vadd.f32 %v4816, %v4876
        %v4913 = vadd.f32 %v4817, %v4878
        %v4914 = vadd.f32 %v4818, %v4880
        %v4915 = vadd.f32 %v4819, %v4882
        %v4916 = vadd.f32 %v4820, %v4884
        %v4917 = vmul.f32 %v1354, %v4263
        %v4918 = vmul.f32 %v1358, %v4266
        %v4919 = vmul.f32 %v1362, %v4271
        %v4920 = vmul.f32 %v1366, %v4274
        %v4921 = vmul.f32 %v1370, %v4279
        %v4922 = vmul.f32 %v1374, %v4282
        %v4923 = vmul.f32 %v1378, %v4287
        %v4924 = vmul.f32 %v1382, %v4290
        %v4925 = vmul.f32 %v1386, %v4295
        %v4926 = vmul.f32 %v1390, %v4298
        %v4927 = vmul.f32 %v1394, %v4303
        %v4928 = vmul.f32 %v1398, %v4306
        %v4929 = vmul.f32 %v1402, %v4311
        %v4930 = vmul.f32 %v1406, %v4314
        %v4931 = vmul.f32 %v1410, %v4319
        %v4932 = vmul.f32 %v1414, %v4322
        %4949 = vrot.lane.b32.xlu0 %v4917, 72
        %v4950 = vpop.permute.xlu0 %4949
        %4951 = vrot.lane.b32.xlu0 %v4918, 72
        %v4952 = vpop.permute.xlu0 %4951
        %4953 = vrot.lane.b32.xlu0 %v4919, 72
        %v4954 = vpop.permute.xlu0 %4953
        %4955 = vrot.lane.b32.xlu0 %v4920, 72
        %v4956 = vpop.permute.xlu0 %4955
        %4957 = vrot.lane.b32.xlu0 %v4921, 72
        %v4958 = vpop.permute.xlu0 %4957
        %4959 = vrot.lane.b32.xlu0 %v4922, 72
        %v4960 = vpop.permute.xlu0 %4959
        %4961 = vrot.lane.b32.xlu0 %v4923, 72
        %v4962 = vpop.permute.xlu0 %4961
        %4963 = vrot.lane.b32.xlu0 %v4924, 72
        %v4964 = vpop.permute.xlu0 %4963
        %4965 = vrot.lane.b32.xlu0 %v4925, 72
        %v4966 = vpop.permute.xlu0 %4965
        %4967 = vrot.lane.b32.xlu0 %v4926, 72
        %v4968 = vpop.permute.xlu0 %4967
        %4969 = vrot.lane.b32.xlu0 %v4927, 72
        %v4970 = vpop.permute.xlu0 %4969
        %4971 = vrot.lane.b32.xlu0 %v4928, 72
        %v4972 = vpop.permute.xlu0 %4971
        %4973 = vrot.lane.b32.xlu0 %v4929, 72
        %v4974 = vpop.permute.xlu0 %4973
        %4975 = vrot.lane.b32.xlu0 %v4930, 72
        %v4976 = vpop.permute.xlu0 %4975
        %4977 = vrot.lane.b32.xlu0 %v4931, 72
        %v4978 = vpop.permute.xlu0 %4977
        %4979 = vrot.lane.b32.xlu0 %v4932, 72
        %v4980 = vpop.permute.xlu0 %4979
        %v4997 = vadd.f32 %v4901, %v4950
        %v4998 = vadd.f32 %v4902, %v4952
        %v4999 = vadd.f32 %v4903, %v4954
        %v5000 = vadd.f32 %v4904, %v4956
        %v5001 = vadd.f32 %v4905, %v4958
        %v5002 = vadd.f32 %v4906, %v4960
        %v5003 = vadd.f32 %v4907, %v4962
        %v5004 = vadd.f32 %v4908, %v4964
        %v5005 = vadd.f32 %v4909, %v4966
        %v5006 = vadd.f32 %v4910, %v4968
        %v5007 = vadd.f32 %v4911, %v4970
        %v5008 = vadd.f32 %v4912, %v4972
        %v5009 = vadd.f32 %v4913, %v4974
        %v5010 = vadd.f32 %v4914, %v4976
        %v5011 = vadd.f32 %v4915, %v4978
        %v5012 = vadd.f32 %v4916, %v4980
        %v5013 = vmul.f32 %v1434, %v4263
        %v5014 = vmul.f32 %v1438, %v4266
        %v5015 = vmul.f32 %v1442, %v4271
        %v5016 = vmul.f32 %v1446, %v4274
        %v5017 = vmul.f32 %v1450, %v4279
        %v5018 = vmul.f32 %v1454, %v4282
        %v5019 = vmul.f32 %v1458, %v4287
        %v5020 = vmul.f32 %v1462, %v4290
        %v5021 = vmul.f32 %v1466, %v4295
        %v5022 = vmul.f32 %v1470, %v4298
        %v5023 = vmul.f32 %v1474, %v4303
        %v5024 = vmul.f32 %v1478, %v4306
        %v5025 = vmul.f32 %v1482, %v4311
        %v5026 = vmul.f32 %v1486, %v4314
        %v5027 = vmul.f32 %v1490, %v4319
        %v5028 = vmul.f32 %v1494, %v4322
        %5045 = vrot.lane.b32.xlu0 %v5013, 64
        %v5046 = vpop.permute.xlu0 %5045
        %5047 = vrot.lane.b32.xlu0 %v5014, 64
        %v5048 = vpop.permute.xlu0 %5047
        %5049 = vrot.lane.b32.xlu0 %v5015, 64
        %v5050 = vpop.permute.xlu0 %5049
        %5051 = vrot.lane.b32.xlu0 %v5016, 64
        %v5052 = vpop.permute.xlu0 %5051
        %5053 = vrot.lane.b32.xlu0 %v5017, 64
        %v5054 = vpop.permute.xlu0 %5053
        %5055 = vrot.lane.b32.xlu0 %v5018, 64
        %v5056 = vpop.permute.xlu0 %5055
        %5057 = vrot.lane.b32.xlu0 %v5019, 64
        %v5058 = vpop.permute.xlu0 %5057
        %5059 = vrot.lane.b32.xlu0 %v5020, 64
        %v5060 = vpop.permute.xlu0 %5059
        %5061 = vrot.lane.b32.xlu0 %v5021, 64
        %v5062 = vpop.permute.xlu0 %5061
        %5063 = vrot.lane.b32.xlu0 %v5022, 64
        %v5064 = vpop.permute.xlu0 %5063
        %5065 = vrot.lane.b32.xlu0 %v5023, 64
        %v5066 = vpop.permute.xlu0 %5065
        %5067 = vrot.lane.b32.xlu0 %v5024, 64
        %v5068 = vpop.permute.xlu0 %5067
        %5069 = vrot.lane.b32.xlu0 %v5025, 64
        %v5070 = vpop.permute.xlu0 %5069
        %5071 = vrot.lane.b32.xlu0 %v5026, 64
        %v5072 = vpop.permute.xlu0 %5071
        %5073 = vrot.lane.b32.xlu0 %v5027, 64
        %v5074 = vpop.permute.xlu0 %5073
        %5075 = vrot.lane.b32.xlu0 %v5028, 64
        %v5076 = vpop.permute.xlu0 %5075
        %v5093 = vadd.f32 %v4997, %v5046
        %v5094 = vadd.f32 %v4998, %v5048
        %v5095 = vadd.f32 %v4999, %v5050
        %v5096 = vadd.f32 %v5000, %v5052
        %v5097 = vadd.f32 %v5001, %v5054
        %v5098 = vadd.f32 %v5002, %v5056
        %v5099 = vadd.f32 %v5003, %v5058
        %v5100 = vadd.f32 %v5004, %v5060
        %v5101 = vadd.f32 %v5005, %v5062
        %v5102 = vadd.f32 %v5006, %v5064
        %v5103 = vadd.f32 %v5007, %v5066
        %v5104 = vadd.f32 %v5008, %v5068
        %v5105 = vadd.f32 %v5009, %v5070
        %v5106 = vadd.f32 %v5010, %v5072
        %v5107 = vadd.f32 %v5011, %v5074
        %v5108 = vadd.f32 %v5012, %v5076
        %v5109 = vmul.f32 %v1514, %v4263
        %v5110 = vmul.f32 %v1518, %v4266
        %v5111 = vmul.f32 %v1522, %v4271
        %v5112 = vmul.f32 %v1526, %v4274
        %v5113 = vmul.f32 %v1530, %v4279
        %v5114 = vmul.f32 %v1534, %v4282
        %v5115 = vmul.f32 %v1538, %v4287
        %v5116 = vmul.f32 %v1542, %v4290
        %v5117 = vmul.f32 %v1546, %v4295
        %v5118 = vmul.f32 %v1550, %v4298
        %v5119 = vmul.f32 %v1554, %v4303
        %v5120 = vmul.f32 %v1558, %v4306
        %v5121 = vmul.f32 %v1562, %v4311
        %v5122 = vmul.f32 %v1566, %v4314
        %v5123 = vmul.f32 %v1570, %v4319
        %v5124 = vmul.f32 %v1574, %v4322
        %5141 = vrot.lane.b32.xlu0 %v5109, 56
        %v5142 = vpop.permute.xlu0 %5141
        %5143 = vrot.lane.b32.xlu0 %v5110, 56
        %v5144 = vpop.permute.xlu0 %5143
        %5145 = vrot.lane.b32.xlu0 %v5111, 56
        %v5146 = vpop.permute.xlu0 %5145
        %5147 = vrot.lane.b32.xlu0 %v5112, 56
        %v5148 = vpop.permute.xlu0 %5147
        %5149 = vrot.lane.b32.xlu0 %v5113, 56
        %v5150 = vpop.permute.xlu0 %5149
        %5151 = vrot.lane.b32.xlu0 %v5114, 56
        %v5152 = vpop.permute.xlu0 %5151
        %5153 = vrot.lane.b32.xlu0 %v5115, 56
        %v5154 = vpop.permute.xlu0 %5153
        %5155 = vrot.lane.b32.xlu0 %v5116, 56
        %v5156 = vpop.permute.xlu0 %5155
        %5157 = vrot.lane.b32.xlu0 %v5117, 56
        %v5158 = vpop.permute.xlu0 %5157
        %5159 = vrot.lane.b32.xlu0 %v5118, 56
        %v5160 = vpop.permute.xlu0 %5159
        %5161 = vrot.lane.b32.xlu0 %v5119, 56
        %v5162 = vpop.permute.xlu0 %5161
        %5163 = vrot.lane.b32.xlu0 %v5120, 56
        %v5164 = vpop.permute.xlu0 %5163
        %5165 = vrot.lane.b32.xlu0 %v5121, 56
        %v5166 = vpop.permute.xlu0 %5165
        %5167 = vrot.lane.b32.xlu0 %v5122, 56
        %v5168 = vpop.permute.xlu0 %5167
        %5169 = vrot.lane.b32.xlu0 %v5123, 56
        %v5170 = vpop.permute.xlu0 %5169
        %5171 = vrot.lane.b32.xlu0 %v5124, 56
        %v5172 = vpop.permute.xlu0 %5171
        %v5189 = vadd.f32 %v5093, %v5142
        %v5190 = vadd.f32 %v5094, %v5144
        %v5191 = vadd.f32 %v5095, %v5146
        %v5192 = vadd.f32 %v5096, %v5148
        %v5193 = vadd.f32 %v5097, %v5150
        %v5194 = vadd.f32 %v5098, %v5152
        %v5195 = vadd.f32 %v5099, %v5154
        %v5196 = vadd.f32 %v5100, %v5156
        %v5197 = vadd.f32 %v5101, %v5158
        %v5198 = vadd.f32 %v5102, %v5160
        %v5199 = vadd.f32 %v5103, %v5162
        %v5200 = vadd.f32 %v5104, %v5164
        %v5201 = vadd.f32 %v5105, %v5166
        %v5202 = vadd.f32 %v5106, %v5168
        %v5203 = vadd.f32 %v5107, %v5170
        %v5204 = vadd.f32 %v5108, %v5172
        %v5205 = vmul.f32 %v1594, %v4263
        %v5206 = vmul.f32 %v1598, %v4266
        %v5207 = vmul.f32 %v1602, %v4271
        %v5208 = vmul.f32 %v1606, %v4274
        %v5209 = vmul.f32 %v1610, %v4279
        %v5210 = vmul.f32 %v1614, %v4282
        %v5211 = vmul.f32 %v1618, %v4287
        %v5212 = vmul.f32 %v1622, %v4290
        %v5213 = vmul.f32 %v1626, %v4295
        %v5214 = vmul.f32 %v1630, %v4298
        %v5215 = vmul.f32 %v1634, %v4303
        %v5216 = vmul.f32 %v1638, %v4306
        %v5217 = vmul.f32 %v1642, %v4311
        %v5218 = vmul.f32 %v1646, %v4314
        %v5219 = vmul.f32 %v1650, %v4319
        %v5220 = vmul.f32 %v1654, %v4322
        %5237 = vrot.lane.b32.xlu0 %v5205, 48
        %v5238 = vpop.permute.xlu0 %5237
        %5239 = vrot.lane.b32.xlu0 %v5206, 48
        %v5240 = vpop.permute.xlu0 %5239
        %5241 = vrot.lane.b32.xlu0 %v5207, 48
        %v5242 = vpop.permute.xlu0 %5241
        %5243 = vrot.lane.b32.xlu0 %v5208, 48
        %v5244 = vpop.permute.xlu0 %5243
        %5245 = vrot.lane.b32.xlu0 %v5209, 48
        %v5246 = vpop.permute.xlu0 %5245
        %5247 = vrot.lane.b32.xlu0 %v5210, 48
        %v5248 = vpop.permute.xlu0 %5247
        %5249 = vrot.lane.b32.xlu0 %v5211, 48
        %v5250 = vpop.permute.xlu0 %5249
        %5251 = vrot.lane.b32.xlu0 %v5212, 48
        %v5252 = vpop.permute.xlu0 %5251
        %5253 = vrot.lane.b32.xlu0 %v5213, 48
        %v5254 = vpop.permute.xlu0 %5253
        %5255 = vrot.lane.b32.xlu0 %v5214, 48
        %v5256 = vpop.permute.xlu0 %5255
        %5257 = vrot.lane.b32.xlu0 %v5215, 48
        %v5258 = vpop.permute.xlu0 %5257
        %5259 = vrot.lane.b32.xlu0 %v5216, 48
        %v5260 = vpop.permute.xlu0 %5259
        %5261 = vrot.lane.b32.xlu0 %v5217, 48
        %v5262 = vpop.permute.xlu0 %5261
        %5263 = vrot.lane.b32.xlu0 %v5218, 48
        %v5264 = vpop.permute.xlu0 %5263
        %5265 = vrot.lane.b32.xlu0 %v5219, 48
        %v5266 = vpop.permute.xlu0 %5265
        %5267 = vrot.lane.b32.xlu0 %v5220, 48
        %v5268 = vpop.permute.xlu0 %5267
        %v5285 = vadd.f32 %v5189, %v5238
        %v5286 = vadd.f32 %v5190, %v5240
        %v5287 = vadd.f32 %v5191, %v5242
        %v5288 = vadd.f32 %v5192, %v5244
        %v5289 = vadd.f32 %v5193, %v5246
        %v5290 = vadd.f32 %v5194, %v5248
        %v5291 = vadd.f32 %v5195, %v5250
        %v5292 = vadd.f32 %v5196, %v5252
        %v5293 = vadd.f32 %v5197, %v5254
        %v5294 = vadd.f32 %v5198, %v5256
        %v5295 = vadd.f32 %v5199, %v5258
        %v5296 = vadd.f32 %v5200, %v5260
        %v5297 = vadd.f32 %v5201, %v5262
        %v5298 = vadd.f32 %v5202, %v5264
        %v5299 = vadd.f32 %v5203, %v5266
        %v5300 = vadd.f32 %v5204, %v5268
        %v5301 = vmul.f32 %v1674, %v4263
        %v5302 = vmul.f32 %v1678, %v4266
        %v5303 = vmul.f32 %v1682, %v4271
        %v5304 = vmul.f32 %v1686, %v4274
        %v5305 = vmul.f32 %v1690, %v4279
        %v5306 = vmul.f32 %v1694, %v4282
        %v5307 = vmul.f32 %v1698, %v4287
        %v5308 = vmul.f32 %v1702, %v4290
        %v5309 = vmul.f32 %v1706, %v4295
        %v5310 = vmul.f32 %v1710, %v4298
        %v5311 = vmul.f32 %v1714, %v4303
        %v5312 = vmul.f32 %v1718, %v4306
        %v5313 = vmul.f32 %v1722, %v4311
        %v5314 = vmul.f32 %v1726, %v4314
        %v5315 = vmul.f32 %v1730, %v4319
        %v5316 = vmul.f32 %v1734, %v4322
        %5333 = vrot.lane.b32.xlu0 %v5301, 40
        %v5334 = vpop.permute.xlu0 %5333
        %5335 = vrot.lane.b32.xlu0 %v5302, 40
        %v5336 = vpop.permute.xlu0 %5335
        %5337 = vrot.lane.b32.xlu0 %v5303, 40
        %v5338 = vpop.permute.xlu0 %5337
        %5339 = vrot.lane.b32.xlu0 %v5304, 40
        %v5340 = vpop.permute.xlu0 %5339
        %5341 = vrot.lane.b32.xlu0 %v5305, 40
        %v5342 = vpop.permute.xlu0 %5341
        %5343 = vrot.lane.b32.xlu0 %v5306, 40
        %v5344 = vpop.permute.xlu0 %5343
        %5345 = vrot.lane.b32.xlu0 %v5307, 40
        %v5346 = vpop.permute.xlu0 %5345
        %5347 = vrot.lane.b32.xlu0 %v5308, 40
        %v5348 = vpop.permute.xlu0 %5347
        %5349 = vrot.lane.b32.xlu0 %v5309, 40
        %v5350 = vpop.permute.xlu0 %5349
        %5351 = vrot.lane.b32.xlu0 %v5310, 40
        %v5352 = vpop.permute.xlu0 %5351
        %5353 = vrot.lane.b32.xlu0 %v5311, 40
        %v5354 = vpop.permute.xlu0 %5353
        %5355 = vrot.lane.b32.xlu0 %v5312, 40
        %v5356 = vpop.permute.xlu0 %5355
        %5357 = vrot.lane.b32.xlu0 %v5313, 40
        %v5358 = vpop.permute.xlu0 %5357
        %5359 = vrot.lane.b32.xlu0 %v5314, 40
        %v5360 = vpop.permute.xlu0 %5359
        %5361 = vrot.lane.b32.xlu0 %v5315, 40
        %v5362 = vpop.permute.xlu0 %5361
        %5363 = vrot.lane.b32.xlu0 %v5316, 40
        %v5364 = vpop.permute.xlu0 %5363
        %v5381 = vadd.f32 %v5285, %v5334
        %v5382 = vadd.f32 %v5286, %v5336
        %v5383 = vadd.f32 %v5287, %v5338
        %v5384 = vadd.f32 %v5288, %v5340
        %v5385 = vadd.f32 %v5289, %v5342
        %v5386 = vadd.f32 %v5290, %v5344
        %v5387 = vadd.f32 %v5291, %v5346
        %v5388 = vadd.f32 %v5292, %v5348
        %v5389 = vadd.f32 %v5293, %v5350
        %v5390 = vadd.f32 %v5294, %v5352
        %v5391 = vadd.f32 %v5295, %v5354
        %v5392 = vadd.f32 %v5296, %v5356
        %v5393 = vadd.f32 %v5297, %v5358
        %v5394 = vadd.f32 %v5298, %v5360
        %v5395 = vadd.f32 %v5299, %v5362
        %v5396 = vadd.f32 %v5300, %v5364
        %v5397 = vmul.f32 %v1754, %v4263
        %v5398 = vmul.f32 %v1758, %v4266
        %v5399 = vmul.f32 %v1762, %v4271
        %v5400 = vmul.f32 %v1766, %v4274
        %v5401 = vmul.f32 %v1770, %v4279
        %v5402 = vmul.f32 %v1774, %v4282
        %v5403 = vmul.f32 %v1778, %v4287
        %v5404 = vmul.f32 %v1782, %v4290
        %v5405 = vmul.f32 %v1786, %v4295
        %v5406 = vmul.f32 %v1790, %v4298
        %v5407 = vmul.f32 %v1794, %v4303
        %v5408 = vmul.f32 %v1798, %v4306
        %v5409 = vmul.f32 %v1802, %v4311
        %v5410 = vmul.f32 %v1806, %v4314
        %v5411 = vmul.f32 %v1810, %v4319
        %v5412 = vmul.f32 %v1814, %v4322
        %5429 = vrot.lane.b32.xlu0 %v5397, 32
        %v5430 = vpop.permute.xlu0 %5429
        %5431 = vrot.lane.b32.xlu0 %v5398, 32
        %v5432 = vpop.permute.xlu0 %5431
        %5433 = vrot.lane.b32.xlu0 %v5399, 32
        %v5434 = vpop.permute.xlu0 %5433
        %5435 = vrot.lane.b32.xlu0 %v5400, 32
        %v5436 = vpop.permute.xlu0 %5435
        %5437 = vrot.lane.b32.xlu0 %v5401, 32
        %v5438 = vpop.permute.xlu0 %5437
        %5439 = vrot.lane.b32.xlu0 %v5402, 32
        %v5440 = vpop.permute.xlu0 %5439
        %5441 = vrot.lane.b32.xlu0 %v5403, 32
        %v5442 = vpop.permute.xlu0 %5441
        %5443 = vrot.lane.b32.xlu0 %v5404, 32
        %v5444 = vpop.permute.xlu0 %5443
        %5445 = vrot.lane.b32.xlu0 %v5405, 32
        %v5446 = vpop.permute.xlu0 %5445
        %5447 = vrot.lane.b32.xlu0 %v5406, 32
        %v5448 = vpop.permute.xlu0 %5447
        %5449 = vrot.lane.b32.xlu0 %v5407, 32
        %v5450 = vpop.permute.xlu0 %5449
        %5451 = vrot.lane.b32.xlu0 %v5408, 32
        %v5452 = vpop.permute.xlu0 %5451
        %5453 = vrot.lane.b32.xlu0 %v5409, 32
        %v5454 = vpop.permute.xlu0 %5453
        %5455 = vrot.lane.b32.xlu0 %v5410, 32
        %v5456 = vpop.permute.xlu0 %5455
        %5457 = vrot.lane.b32.xlu0 %v5411, 32
        %v5458 = vpop.permute.xlu0 %5457
        %5459 = vrot.lane.b32.xlu0 %v5412, 32
        %v5460 = vpop.permute.xlu0 %5459
        %v5477 = vadd.f32 %v5381, %v5430
        %v5478 = vadd.f32 %v5382, %v5432
        %v5479 = vadd.f32 %v5383, %v5434
        %v5480 = vadd.f32 %v5384, %v5436
        %v5481 = vadd.f32 %v5385, %v5438
        %v5482 = vadd.f32 %v5386, %v5440
        %v5483 = vadd.f32 %v5387, %v5442
        %v5484 = vadd.f32 %v5388, %v5444
        %v5485 = vadd.f32 %v5389, %v5446
        %v5486 = vadd.f32 %v5390, %v5448
        %v5487 = vadd.f32 %v5391, %v5450
        %v5488 = vadd.f32 %v5392, %v5452
        %v5489 = vadd.f32 %v5393, %v5454
        %v5490 = vadd.f32 %v5394, %v5456
        %v5491 = vadd.f32 %v5395, %v5458
        %v5492 = vadd.f32 %v5396, %v5460
        %v5493 = vmul.f32 %v1834, %v4263
        %v5494 = vmul.f32 %v1838, %v4266
        %v5495 = vmul.f32 %v1842, %v4271
        %v5496 = vmul.f32 %v1846, %v4274
        %v5497 = vmul.f32 %v1850, %v4279
        %v5498 = vmul.f32 %v1854, %v4282
        %v5499 = vmul.f32 %v1858, %v4287
        %v5500 = vmul.f32 %v1862, %v4290
        %v5501 = vmul.f32 %v1866, %v4295
        %v5502 = vmul.f32 %v1870, %v4298
        %v5503 = vmul.f32 %v1874, %v4303
        %v5504 = vmul.f32 %v1878, %v4306
        %v5505 = vmul.f32 %v1882, %v4311
        %v5506 = vmul.f32 %v1886, %v4314
        %v5507 = vmul.f32 %v1890, %v4319
        %v5508 = vmul.f32 %v1894, %v4322
        %5525 = vrot.lane.b32.xlu0 %v5493, 24
        %v5526 = vpop.permute.xlu0 %5525
        %5527 = vrot.lane.b32.xlu0 %v5494, 24
        %v5528 = vpop.permute.xlu0 %5527
        %5529 = vrot.lane.b32.xlu0 %v5495, 24
        %v5530 = vpop.permute.xlu0 %5529
        %5531 = vrot.lane.b32.xlu0 %v5496, 24
        %v5532 = vpop.permute.xlu0 %5531
        %5533 = vrot.lane.b32.xlu0 %v5497, 24
        %v5534 = vpop.permute.xlu0 %5533
        %5535 = vrot.lane.b32.xlu0 %v5498, 24
        %v5536 = vpop.permute.xlu0 %5535
        %5537 = vrot.lane.b32.xlu0 %v5499, 24
        %v5538 = vpop.permute.xlu0 %5537
        %5539 = vrot.lane.b32.xlu0 %v5500, 24
        %v5540 = vpop.permute.xlu0 %5539
        %5541 = vrot.lane.b32.xlu0 %v5501, 24
        %v5542 = vpop.permute.xlu0 %5541
        %5543 = vrot.lane.b32.xlu0 %v5502, 24
        %v5544 = vpop.permute.xlu0 %5543
        %5545 = vrot.lane.b32.xlu0 %v5503, 24
        %v5546 = vpop.permute.xlu0 %5545
        %5547 = vrot.lane.b32.xlu0 %v5504, 24
        %v5548 = vpop.permute.xlu0 %5547
        %5549 = vrot.lane.b32.xlu0 %v5505, 24
        %v5550 = vpop.permute.xlu0 %5549
        %5551 = vrot.lane.b32.xlu0 %v5506, 24
        %v5552 = vpop.permute.xlu0 %5551
        %5553 = vrot.lane.b32.xlu0 %v5507, 24
        %v5554 = vpop.permute.xlu0 %5553
        %5555 = vrot.lane.b32.xlu0 %v5508, 24
        %v5556 = vpop.permute.xlu0 %5555
        %v5573 = vadd.f32 %v5477, %v5526
        %v5574 = vadd.f32 %v5478, %v5528
        %v5575 = vadd.f32 %v5479, %v5530
        %v5576 = vadd.f32 %v5480, %v5532
        %v5577 = vadd.f32 %v5481, %v5534
        %v5578 = vadd.f32 %v5482, %v5536
        %v5579 = vadd.f32 %v5483, %v5538
        %v5580 = vadd.f32 %v5484, %v5540
        %v5581 = vadd.f32 %v5485, %v5542
        %v5582 = vadd.f32 %v5486, %v5544
        %v5583 = vadd.f32 %v5487, %v5546
        %v5584 = vadd.f32 %v5488, %v5548
        %v5585 = vadd.f32 %v5489, %v5550
        %v5586 = vadd.f32 %v5490, %v5552
        %v5587 = vadd.f32 %v5491, %v5554
        %v5588 = vadd.f32 %v5492, %v5556
        %v5589 = vmul.f32 %v1914, %v4263
        %v5590 = vmul.f32 %v1918, %v4266
        %v5591 = vmul.f32 %v1922, %v4271
        %v5592 = vmul.f32 %v1926, %v4274
        %v5593 = vmul.f32 %v1930, %v4279
        %v5594 = vmul.f32 %v1934, %v4282
        %v5595 = vmul.f32 %v1938, %v4287
        %v5596 = vmul.f32 %v1942, %v4290
        %v5597 = vmul.f32 %v1946, %v4295
        %v5598 = vmul.f32 %v1950, %v4298
        %v5599 = vmul.f32 %v1954, %v4303
        %v5600 = vmul.f32 %v1958, %v4306
        %v5601 = vmul.f32 %v1962, %v4311
        %v5602 = vmul.f32 %v1966, %v4314
        %v5603 = vmul.f32 %v1970, %v4319
        %v5604 = vmul.f32 %v1974, %v4322
        %5621 = vrot.lane.b32.xlu0 %v5589, 16
        %v5622 = vpop.permute.xlu0 %5621
        %5623 = vrot.lane.b32.xlu0 %v5590, 16
        %v5624 = vpop.permute.xlu0 %5623
        %5625 = vrot.lane.b32.xlu0 %v5591, 16
        %v5626 = vpop.permute.xlu0 %5625
        %5627 = vrot.lane.b32.xlu0 %v5592, 16
        %v5628 = vpop.permute.xlu0 %5627
        %5629 = vrot.lane.b32.xlu0 %v5593, 16
        %v5630 = vpop.permute.xlu0 %5629
        %5631 = vrot.lane.b32.xlu0 %v5594, 16
        %v5632 = vpop.permute.xlu0 %5631
        %5633 = vrot.lane.b32.xlu0 %v5595, 16
        %v5634 = vpop.permute.xlu0 %5633
        %5635 = vrot.lane.b32.xlu0 %v5596, 16
        %v5636 = vpop.permute.xlu0 %5635
        %5637 = vrot.lane.b32.xlu0 %v5597, 16
        %v5638 = vpop.permute.xlu0 %5637
        %5639 = vrot.lane.b32.xlu0 %v5598, 16
        %v5640 = vpop.permute.xlu0 %5639
        %5641 = vrot.lane.b32.xlu0 %v5599, 16
        %v5642 = vpop.permute.xlu0 %5641
        %5643 = vrot.lane.b32.xlu0 %v5600, 16
        %v5644 = vpop.permute.xlu0 %5643
        %5645 = vrot.lane.b32.xlu0 %v5601, 16
        %v5646 = vpop.permute.xlu0 %5645
        %5647 = vrot.lane.b32.xlu0 %v5602, 16
        %v5648 = vpop.permute.xlu0 %5647
        %5649 = vrot.lane.b32.xlu0 %v5603, 16
        %v5650 = vpop.permute.xlu0 %5649
        %5651 = vrot.lane.b32.xlu0 %v5604, 16
        %v5652 = vpop.permute.xlu0 %5651
        %v5669 = vadd.f32 %v5573, %v5622
        %v5670 = vadd.f32 %v5574, %v5624
        %v5671 = vadd.f32 %v5575, %v5626
        %v5672 = vadd.f32 %v5576, %v5628
        %v5673 = vadd.f32 %v5577, %v5630
        %v5674 = vadd.f32 %v5578, %v5632
        %v5675 = vadd.f32 %v5579, %v5634
        %v5676 = vadd.f32 %v5580, %v5636
        %v5677 = vadd.f32 %v5581, %v5638
        %v5678 = vadd.f32 %v5582, %v5640
        %v5679 = vadd.f32 %v5583, %v5642
        %v5680 = vadd.f32 %v5584, %v5644
        %v5681 = vadd.f32 %v5585, %v5646
        %v5682 = vadd.f32 %v5586, %v5648
        %v5683 = vadd.f32 %v5587, %v5650
        %v5684 = vadd.f32 %v5588, %v5652
        %v5685 = vmul.f32 %v1994, %v4263
        %v5686 = vmul.f32 %v1998, %v4266
        %v5687 = vmul.f32 %v2002, %v4271
        %v5688 = vmul.f32 %v2006, %v4274
        %v5689 = vmul.f32 %v2010, %v4279
        %v5690 = vmul.f32 %v2014, %v4282
        %v5691 = vmul.f32 %v2018, %v4287
        %v5692 = vmul.f32 %v2022, %v4290
        %v5693 = vmul.f32 %v2026, %v4295
        %v5694 = vmul.f32 %v2030, %v4298
        %v5695 = vmul.f32 %v2034, %v4303
        %v5696 = vmul.f32 %v2038, %v4306
        %v5697 = vmul.f32 %v2042, %v4311
        %v5698 = vmul.f32 %v2046, %v4314
        %v5699 = vmul.f32 %v2050, %v4319
        %v5700 = vmul.f32 %v2054, %v4322
        %5717 = vrot.lane.b32.xlu0 %v5685, 8
        %v5718 = vpop.permute.xlu0 %5717
        %5719 = vrot.lane.b32.xlu0 %v5686, 8
        %v5720 = vpop.permute.xlu0 %5719
        %5721 = vrot.lane.b32.xlu0 %v5687, 8
        %v5722 = vpop.permute.xlu0 %5721
        %5723 = vrot.lane.b32.xlu0 %v5688, 8
        %v5724 = vpop.permute.xlu0 %5723
        %5725 = vrot.lane.b32.xlu0 %v5689, 8
        %v5726 = vpop.permute.xlu0 %5725
        %5727 = vrot.lane.b32.xlu0 %v5690, 8
        %v5728 = vpop.permute.xlu0 %5727
        %5729 = vrot.lane.b32.xlu0 %v5691, 8
        %v5730 = vpop.permute.xlu0 %5729
        %5731 = vrot.lane.b32.xlu0 %v5692, 8
        %v5732 = vpop.permute.xlu0 %5731
        %5733 = vrot.lane.b32.xlu0 %v5693, 8
        %v5734 = vpop.permute.xlu0 %5733
        %5735 = vrot.lane.b32.xlu0 %v5694, 8
        %v5736 = vpop.permute.xlu0 %5735
        %5737 = vrot.lane.b32.xlu0 %v5695, 8
        %v5738 = vpop.permute.xlu0 %5737
        %5739 = vrot.lane.b32.xlu0 %v5696, 8
        %v5740 = vpop.permute.xlu0 %5739
        %5741 = vrot.lane.b32.xlu0 %v5697, 8
        %v5742 = vpop.permute.xlu0 %5741
        %5743 = vrot.lane.b32.xlu0 %v5698, 8
        %v5744 = vpop.permute.xlu0 %5743
        %5745 = vrot.lane.b32.xlu0 %v5699, 8
        %v5746 = vpop.permute.xlu0 %5745
        %5747 = vrot.lane.b32.xlu0 %v5700, 8
        %v5748 = vpop.permute.xlu0 %5747
        %v5765 = vadd.f32 %v5669, %v5718
        %v5766 = vadd.f32 %v5670, %v5720
        %v5767 = vadd.f32 %v5671, %v5722
        %v5768 = vadd.f32 %v5672, %v5724
        %v5769 = vadd.f32 %v5673, %v5726
        %v5770 = vadd.f32 %v5674, %v5728
        %v5771 = vadd.f32 %v5675, %v5730
        %v5772 = vadd.f32 %v5676, %v5732
        %v5773 = vadd.f32 %v5677, %v5734
        %v5774 = vadd.f32 %v5678, %v5736
        %v5775 = vadd.f32 %v5679, %v5738
        %v5776 = vadd.f32 %v5680, %v5740
        %v5777 = vadd.f32 %v5681, %v5742
        %v5778 = vadd.f32 %v5682, %v5744
        %v5779 = vadd.f32 %v5683, %v5746
        %v5780 = vadd.f32 %v5684, %v5748
        %v5781 = vpack.c.bf16 %v5766, %v5765
        %v5782 = vpack.c.bf16 %v5768, %v5767
        %v5783 = vpack.c.bf16 %v5770, %v5769
        %v5784 = vpack.c.bf16 %v5772, %v5771
        %v5785 = vpack.c.bf16 %v5774, %v5773
        %v5786 = vpack.c.bf16 %v5776, %v5775
        %v5787 = vpack.c.bf16 %v5778, %v5777
        %v5788 = vpack.c.bf16 %v5780, %v5779
        %v5791 = vunpack.c.l.b16 %v493
        %v5792 = vunpack.c.l.b16 %v494
        %v5793 = vpack.c.b16 %v5792, %v5791
        %5795 = vmatprep.subr.bf16.mxu0 0
        %5796 = vmatpush1.bf16.msra.mxu0 %v5788
        %5797 = vmatprep.subr.bf16.mxu0 0
        %5798 = vmatpush1.bf16.msra.mxu0 %v5787
        %5799 = vmatprep.subr.bf16.mxu0 0
        %5800 = vmatpush1.bf16.msra.mxu0 %v5786
        %5801 = vmatprep.subr.bf16.mxu0 0
        %5802 = vmatpush1.bf16.msra.mxu0 %v5785
        %5803 = vmatprep.subr.bf16.mxu0 0
        %5804 = vmatpush1.bf16.msra.mxu0 %v5784
        %5805 = vmatprep.subr.bf16.mxu0 0
        %5806 = vmatpush1.bf16.msra.mxu0 %v5783
        %5807 = vmatprep.subr.bf16.mxu0 0
        %5808 = vmatpush1.bf16.msra.mxu0 %v5782
        %5809 = vmatprep.subr.bf16.mxu0 0
        %5810 = vmatpush1.bf16.msra.mxu0 %v5781
        %5811 = vmatprep.subr.bf16.mxu0 0
        %5812 = vmatpush2.bf16.msra.mxu0 0
        %5813 = vmatprep.subr.bf16.mxu0 0
        %5814 = vmatpush2.bf16.msra.mxu0 0
        %5815 = vmatprep.subr.bf16.mxu0 0
        %5816 = vmatpush2.bf16.msra.mxu0 0
        %5817 = vmatprep.subr.bf16.mxu0 0
        %5818 = vmatpush2.bf16.msra.mxu0 0
        %5819 = vmatprep.subr.bf16.mxu0 0
        %5820 = vmatpush2.bf16.msra.mxu0 0
        %5821 = vmatprep.subr.bf16.mxu0 0
        %5822 = vmatpush2.bf16.msra.mxu0 0
        %5823 = vmatprep.subr.bf16.mxu0 0
        %5824 = vmatpush2.bf16.msra.mxu0 0
        %5825 = vmatprep.subr.bf16.mxu0 0
        %5826 = vmatpush2.bf16.msra.mxu0 0
        %5827 = vmatprep.mubr.bf16.mxu0 0
        %5828 = vmatmul.mubr.bf16.gmra.mxu0 %v5793
        %v5829 = vpop.f32.mrf.mxu0
        %v5830 = vadd.f32 0.0, %v5829
        %v5831 = vpop.f32.mrf.mxu0
        %v5832 = vpop.f32.mrf.mxu0
        %v5833 = vadd.f32 0.0, %v5832
        %v5834 = vpop.f32.mrf.mxu0
        %5835 = vdwg.mxu0
        %v5836 = vmul.f32 %v5830, 0.35355338
        %v5837 = vmul.f32 %v5833, 0.35355338
        %vm5838 = vcmask 64512
        %5839 = vst.msk [vmem:[%s458] sm:$0xff] %vm5838, %v5836
        %5840 = vst.msk [vmem:[%s458 + $0x8] sm:$0xff] %vm5838, %v5837
        %s5841 = smul.u32 2, %s18
        %p5842 = scmp.lt.s32.totalorder %s5841, 3
        %s5843 = scalar_select %p5842, %s5841, 3
        %s5844 = smul.addr %s5843, 8
        %s5845 = scalar_lea.vmem %s5, %s5844
        // Predicated region
        $region131: #{tpu_custom_call.1} parent=113 // pred_check
          %p5846 = pneg %p160
        $region132: #{tpu_custom_call.1} parent=113 // pred_check_branch
          %5848 = sbr.rel (%p5846) target = $region134
        $region133: #{tpu_custom_call.1} parent=113 // pred_region
          %s5849 = smul.u32 2, %s18
        $region134: #{tpu_custom_call.1} parent=113 // pred_fallthru
          _
      $region114: #{tpu_custom_call.1} parent=5 // pred_fallthru
        _
      %p5850 = scmp.le.s32.totalorder 2, %s13
      // Predicated region
      $region135: #{tpu_custom_call.1} parent=5 // pred_check
        %p5851 = pneg %p5850
      $region136: #{tpu_custom_call.1} parent=5 // pred_check_branch
        %5853 = sbr.rel (%p5851) target = $region138
      $region137: #{tpu_custom_call.1} parent=5 // pred_region
        %s5854 = ssub.s32 %s13, 2
        // Predicated region
        $region139: #{tpu_custom_call.1} parent=137 // pred_check
          %p5855 = pneg %p166
        $region140: #{tpu_custom_call.1} parent=137 // pred_check_branch
          %5857 = sbr.rel (%p5855) target = $region142
        $region141: #{tpu_custom_call.1} parent=137 // pred_region
          %s5858 = smul.u32 2, %s19
          %p5859 = scmp.lt.s32.totalorder %s5858, 3
          %s5860 = scalar_select %p5859, %s5858, 3
          %s5861 = smul.addr %s5860, 8
          %s5862 = scalar_lea.vmem %s5, %s5861
        $region142: #{tpu_custom_call.1} parent=137 // pred_fallthru
          _
      $region138: #{tpu_custom_call.1} parent=5 // pred_fallthru
        _
    $region6: #{tpu_custom_call.1} parent=1 // loop_footer
      %s17 = sadd.s32 1, %s13
    $region7: #{tpu_custom_call.1} parent=1 // loop_footer_branch
      %12 = sbr.rel target = $region3
    $region8: #{tpu_custom_call.1} parent=1 // loop_exit
      _
    %5863 = vsyncpa [#allocation5], 1
    %s5864 = scalar_lea.sflag [#allocation5], 1
    %5865 = vsyncpa %s5864, 1
    %5866 = vsyncpa [#allocation7], 1

</llo_original>
